<compile_context>
chip_gen: v6e
topology: v6e:2x2x1
jax: 0.10.0
libtpu: 0.0.40
codegen_flags: <defaults>
</compile_context>

<pallas_src>
import jax
import jax.numpy as jnp
from jax.experimental import pallas as pl
from jax.experimental.pallas import tpu as pltpu

# Layer dims of the MLP: 4 -> 16 -> 128 -> 1024 -> 1024 -> 512 -> 200
DIMS = [4, 16, 128, 1024, 1024, 512, 200]
OUT_PAD = 256  # pad final 200 -> 256 so the epilogue matmul/store is lane-dense


def _mlp_kernel(x_ref,
                w1, b1, w2, b2, w3, b3, w4, b4, w5, b5, w6, b6,
                o_ref):
    """Fused 6-layer MLP. Weights are bf16 (MXU bf16 path, f32 accumulate);
    biases and activations live in f32."""
    h = x_ref[...]

    def dense(h, w_ref, b_ref):
        # bf16 x bf16 MXU matmul with f32 accumulation; bias added in f32 on VPU.
        y = jnp.dot(h.astype(jnp.bfloat16), w_ref[...],
                    preferred_element_type=jnp.float32)
        return y + b_ref[...]

    # TODO(synk): nn.Dropout is identity at inference; training-mode random
    # masking is not implemented here.
    h = jnp.maximum(dense(h, w1, b1), 0.0)   # 4    -> 16
    h = jnp.maximum(dense(h, w2, b2), 0.0)   # 16   -> 128
    h = jnp.maximum(dense(h, w3, b3), 0.0)   # 128  -> 1024
    h = jnp.maximum(dense(h, w4, b4), 0.0)   # 1024 -> 1024
    h = jnp.maximum(dense(h, w5, b5), 0.0)   # 1024 -> 512
    o_ref[...] = jax.nn.sigmoid(dense(h, w6, b6))  # 512 -> 256 (200 + pad)


def init_params(key):
    """f32 params mimicking PyTorch nn.Linear default init
    (U[-1/sqrt(fan_in), +1/sqrt(fan_in)]); W stored as (in, out)."""
    params = []
    for i in range(len(DIMS) - 1):
        fan_in, fan_out = DIMS[i], DIMS[i + 1]
        key, kw, kb = jax.random.split(key, 3)
        bound = 1.0 / jnp.sqrt(jnp.float32(fan_in))
        w = jax.random.uniform(kw, (fan_in, fan_out), jnp.float32, -bound, bound)
        b = jax.random.uniform(kb, (1, fan_out), jnp.float32, -bound, bound)
        params.append((w, b))
    return params


def pack_params(params):
    """Cast weights to bf16 (halves HBM weight bytes) and zero-pad the final
    layer from 200 to OUT_PAD outputs. Biases stay f32."""
    packed = []
    n = len(params)
    for i, (w, b) in enumerate(params):
        if i == n - 1:
            pad = OUT_PAD - w.shape[1]
            w = jnp.pad(w, ((0, 0), (0, pad)))
            b = jnp.pad(b, ((0, 0), (0, pad)))
        packed.append((w.astype(jnp.bfloat16), b.astype(jnp.float32)))
    return packed


def nn_network_forward(x, packed_params):
    """x: (B, 4) f32. packed_params: list of (W bf16 (in,out), b f32 (1,out))
    with the final layer padded to OUT_PAD outputs."""
    B = x.shape[0]

    # Batch tile: multiple of 8 sublanes, up to 128 rows per grid step.
    if B <= 128:
        tile_b = max(8, ((B + 7) // 8) * 8)
    else:
        tile_b = 128
    b_pad = pl.cdiv(B, tile_b) * tile_b
    if b_pad != B:
        x = jnp.pad(x, ((0, b_pad - B), (0, 0)))

    flat = []
    in_specs = [pl.BlockSpec((tile_b, DIMS[0]), lambda i: (i, 0))]
    for w, b in packed_params:
        flat.extend([w, b])
        # Weights/biases: full-array blocks, constant block index -> resident
        # across the (parallel) batch grid, fetched once.
        in_specs.append(pl.BlockSpec(w.shape, lambda i: (0, 0)))
        in_specs.append(pl.BlockSpec(b.shape, lambda i: (0, 0)))

    out = pl.pallas_call(
        _mlp_kernel,
        out_shape=jax.ShapeDtypeStruct((b_pad, OUT_PAD), jnp.float32),
        grid=(b_pad // tile_b,),
        in_specs=in_specs,
        out_specs=pl.BlockSpec((tile_b, OUT_PAD), lambda i: (i, 0)),
        compiler_params=pltpu.CompilerParams(
            dimension_semantics=("parallel",)),
    )(x, *flat)

    return out[:B, :DIMS[-1]]


def reference_forward_mixed(x, packed_params):
    """Pure-JAX reference matching the kernel's bf16-weight / f32-accumulate math."""
    h = x
    n = len(packed_params)
    for i, (w, b) in enumerate(packed_params):
        y = jnp.dot(h.astype(jnp.bfloat16), w,
                    preferred_element_type=jnp.float32) + b
        h = jax.nn.sigmoid(y) if i == n - 1 else jnp.maximum(y, 0.0)
    return h[:, :DIMS[-1]]


def reference_forward_f32(x, params):
    """Full-f32 reference of the original module (eval mode)."""
    h = x
    n = len(params)
    for i, (w, b) in enumerate(params):
        y = h @ w + b
        h = jax.nn.sigmoid(y) if i == n - 1 else jnp.maximum(y, 0.0)
    return h


if __name__ == "__main__":
    key = jax.random.PRNGKey(0)
    key, kx = jax.random.split(key)

    B = 8  # small batch
    x = jax.random.normal(kx, (B, DIMS[0]), jnp.float32)

    params = init_params(key)
    packed = pack_params(params)

    out = nn_network_forward(x, packed)
    out = jax.block_until_ready(out)
    assert out.shape == (B, DIMS[-1]), out.shape

    # Tight check vs. a reference using the same bf16 weights / mixed precision.
    ref_mixed = reference_forward_mixed(x, packed)
    err_mixed = float(jnp.max(jnp.abs(out - ref_mixed)))
    assert jnp.allclose(out, ref_mixed, atol=1e-4, rtol=1e-4), err_mixed

    # Loose sanity check vs. the full-f32 PyTorch-equivalent forward.
    ref_f32 = reference_forward_f32(x, params)
    err_f32 = float(jnp.max(jnp.abs(out - ref_f32)))
    assert jnp.allclose(out, ref_f32, atol=3e-2, rtol=3e-2), err_f32

    print("KERNEL_OK")
</pallas_src>

<mosaic_0001>
module attributes {stable_mosaic.version = 11 : i64} {
  func.func @_mlp_kernel(%arg0: i32, %arg1: memref<8x4xf32, #tpu.memory_space<vmem>>, %arg2: memref<4x16xbf16, #tpu.memory_space<vmem>>, %arg3: memref<1x16xf32, #tpu.memory_space<vmem>>, %arg4: memref<16x128xbf16, #tpu.memory_space<vmem>>, %arg5: memref<1x128xf32, #tpu.memory_space<vmem>>, %arg6: memref<128x1024xbf16, #tpu.memory_space<vmem>>, %arg7: memref<1x1024xf32, #tpu.memory_space<vmem>>, %arg8: memref<1024x1024xbf16, #tpu.memory_space<vmem>>, %arg9: memref<1x1024xf32, #tpu.memory_space<vmem>>, %arg10: memref<1024x512xbf16, #tpu.memory_space<vmem>>, %arg11: memref<1x512xf32, #tpu.memory_space<vmem>>, %arg12: memref<512x256xbf16, #tpu.memory_space<vmem>>, %arg13: memref<1x256xf32, #tpu.memory_space<vmem>>, %arg14: memref<8x256xf32, #tpu.memory_space<vmem>>) attributes {dimension_semantics = [#tpu.dimension_semantics<parallel>], iteration_bounds = array<i64: 1>, scalar_prefetch = 0 : i64, scratch_operands = 0 : i64, tpu.core_type = #tpu.core_type<tc>, window_params = [{transform_indices = @transform_0, window_bounds = array<i64: 8, 4>}, {pipeline_mode = #tpu.pipeline_mode<synchronous>, transform_indices = @transform_1, window_bounds = array<i64: 4, 16>}, {pipeline_mode = #tpu.pipeline_mode<synchronous>, transform_indices = @transform_2, window_bounds = array<i64: 1, 16>}, {pipeline_mode = #tpu.pipeline_mode<synchronous>, transform_indices = @transform_3, window_bounds = array<i64: 16, 128>}, {pipeline_mode = #tpu.pipeline_mode<synchronous>, transform_indices = @transform_4, window_bounds = array<i64: 1, 128>}, {pipeline_mode = #tpu.pipeline_mode<synchronous>, transform_indices = @transform_5, window_bounds = array<i64: 128, 1024>}, {pipeline_mode = #tpu.pipeline_mode<synchronous>, transform_indices = @transform_6, window_bounds = array<i64: 1, 1024>}, {pipeline_mode = #tpu.pipeline_mode<synchronous>, transform_indices = @transform_7, window_bounds = array<i64: 1024, 1024>}, {pipeline_mode = #tpu.pipeline_mode<synchronous>, transform_indices = @transform_8, window_bounds = array<i64: 1, 1024>}, {pipeline_mode = #tpu.pipeline_mode<synchronous>, transform_indices = @transform_9, window_bounds = array<i64: 1024, 512>}, {pipeline_mode = #tpu.pipeline_mode<synchronous>, transform_indices = @transform_10, window_bounds = array<i64: 1, 512>}, {pipeline_mode = #tpu.pipeline_mode<synchronous>, transform_indices = @transform_11, window_bounds = array<i64: 512, 256>}, {pipeline_mode = #tpu.pipeline_mode<synchronous>, transform_indices = @transform_12, window_bounds = array<i64: 1, 256>}, {transform_indices = @transform_13, window_bounds = array<i64: 8, 256>}]} {
    %c0 = arith.constant 0 : index
    %c0_0 = arith.constant 0 : index
    %0 = vector.load %arg1[%c0, %c0_0] : memref<8x4xf32, #tpu.memory_space<vmem>>, vector<8x4xf32>
    %1 = arith.truncf %0 : vector<8x4xf32> to vector<8x4xbf16>
    %c0_1 = arith.constant 0 : index
    %c0_2 = arith.constant 0 : index
    %2 = vector.load %arg2[%c0_1, %c0_2] : memref<4x16xbf16, #tpu.memory_space<vmem>>, vector<4x16xbf16>
    %cst = arith.constant dense<0.000000e+00> : vector<8x16xf32>
    %3 = tpu.matmul %1, %2, %cst {dimension_numbers = #tpu.dot_dimension_numbers<[1], [0], [0], [1], [0, 0, 1, 1], [], []>} : vector<8x4xbf16>, vector<4x16xbf16>, vector<8x16xf32> -> vector<8x16xf32>
    %c0_3 = arith.constant 0 : index
    %c0_4 = arith.constant 0 : index
    %4 = vector.load %arg3[%c0_3, %c0_4] : memref<1x16xf32, #tpu.memory_space<vmem>>, vector<1x16xf32>
    %5 = vector.broadcast %4 : vector<1x16xf32> to vector<8x16xf32>
    %6 = arith.addf %3, %5 : vector<8x16xf32>
    %cst_5 = arith.constant 0.000000e+00 : f32
    %7 = vector.broadcast %cst_5 : f32 to vector<8x16xf32>
    %8 = arith.maximumf %6, %7 : vector<8x16xf32>
    %9 = arith.truncf %8 : vector<8x16xf32> to vector<8x16xbf16>
    %c0_6 = arith.constant 0 : index
    %c0_7 = arith.constant 0 : index
    %10 = vector.load %arg4[%c0_6, %c0_7] : memref<16x128xbf16, #tpu.memory_space<vmem>>, vector<16x128xbf16>
    %cst_8 = arith.constant dense<0.000000e+00> : vector<8x128xf32>
    %11 = tpu.matmul %9, %10, %cst_8 {dimension_numbers = #tpu.dot_dimension_numbers<[1], [0], [0], [1], [0, 0, 1, 1], [], []>} : vector<8x16xbf16>, vector<16x128xbf16>, vector<8x128xf32> -> vector<8x128xf32>
    %c0_9 = arith.constant 0 : index
    %c0_10 = arith.constant 0 : index
    %12 = vector.load %arg5[%c0_9, %c0_10] : memref<1x128xf32, #tpu.memory_space<vmem>>, vector<1x128xf32>
    %13 = vector.broadcast %12 : vector<1x128xf32> to vector<8x128xf32>
    %14 = arith.addf %11, %13 : vector<8x128xf32>
    %cst_11 = arith.constant 0.000000e+00 : f32
    %15 = vector.broadcast %cst_11 : f32 to vector<8x128xf32>
    %16 = arith.maximumf %14, %15 : vector<8x128xf32>
    %17 = arith.truncf %16 : vector<8x128xf32> to vector<8x128xbf16>
    %c0_12 = arith.constant 0 : index
    %c0_13 = arith.constant 0 : index
    %18 = vector.load %arg6[%c0_12, %c0_13] : memref<128x1024xbf16, #tpu.memory_space<vmem>>, vector<128x1024xbf16>
    %cst_14 = arith.constant dense<0.000000e+00> : vector<8x1024xf32>
    %19 = tpu.matmul %17, %18, %cst_14 {dimension_numbers = #tpu.dot_dimension_numbers<[1], [0], [0], [1], [0, 0, 1, 1], [], []>} : vector<8x128xbf16>, vector<128x1024xbf16>, vector<8x1024xf32> -> vector<8x1024xf32>
    %c0_15 = arith.constant 0 : index
    %c0_16 = arith.constant 0 : index
    %20 = vector.load %arg7[%c0_15, %c0_16] : memref<1x1024xf32, #tpu.memory_space<vmem>>, vector<1x1024xf32>
    %21 = vector.broadcast %20 : vector<1x1024xf32> to vector<8x1024xf32>
    %22 = arith.addf %19, %21 : vector<8x1024xf32>
    %cst_17 = arith.constant 0.000000e+00 : f32
    %23 = vector.broadcast %cst_17 : f32 to vector<8x1024xf32>
    %24 = arith.maximumf %22, %23 : vector<8x1024xf32>
    %25 = arith.truncf %24 : vector<8x1024xf32> to vector<8x1024xbf16>
    %c0_18 = arith.constant 0 : index
    %c0_19 = arith.constant 0 : index
    %26 = vector.load %arg8[%c0_18, %c0_19] : memref<1024x1024xbf16, #tpu.memory_space<vmem>>, vector<1024x1024xbf16>
    %cst_20 = arith.constant dense<0.000000e+00> : vector<8x1024xf32>
    %27 = tpu.matmul %25, %26, %cst_20 {dimension_numbers = #tpu.dot_dimension_numbers<[1], [0], [0], [1], [0, 0, 1, 1], [], []>} : vector<8x1024xbf16>, vector<1024x1024xbf16>, vector<8x1024xf32> -> vector<8x1024xf32>
    %c0_21 = arith.constant 0 : index
    %c0_22 = arith.constant 0 : index
    %28 = vector.load %arg9[%c0_21, %c0_22] : memref<1x1024xf32, #tpu.memory_space<vmem>>, vector<1x1024xf32>
    %29 = vector.broadcast %28 : vector<1x1024xf32> to vector<8x1024xf32>
    %30 = arith.addf %27, %29 : vector<8x1024xf32>
    %cst_23 = arith.constant 0.000000e+00 : f32
    %31 = vector.broadcast %cst_23 : f32 to vector<8x1024xf32>
    %32 = arith.maximumf %30, %31 : vector<8x1024xf32>
    %33 = arith.truncf %32 : vector<8x1024xf32> to vector<8x1024xbf16>
    %c0_24 = arith.constant 0 : index
    %c0_25 = arith.constant 0 : index
    %34 = vector.load %arg10[%c0_24, %c0_25] : memref<1024x512xbf16, #tpu.memory_space<vmem>>, vector<1024x512xbf16>
    %cst_26 = arith.constant dense<0.000000e+00> : vector<8x512xf32>
    %35 = tpu.matmul %33, %34, %cst_26 {dimension_numbers = #tpu.dot_dimension_numbers<[1], [0], [0], [1], [0, 0, 1, 1], [], []>} : vector<8x1024xbf16>, vector<1024x512xbf16>, vector<8x512xf32> -> vector<8x512xf32>
    %c0_27 = arith.constant 0 : index
    %c0_28 = arith.constant 0 : index
    %36 = vector.load %arg11[%c0_27, %c0_28] : memref<1x512xf32, #tpu.memory_space<vmem>>, vector<1x512xf32>
    %37 = vector.broadcast %36 : vector<1x512xf32> to vector<8x512xf32>
    %38 = arith.addf %35, %37 : vector<8x512xf32>
    %cst_29 = arith.constant 0.000000e+00 : f32
    %39 = vector.broadcast %cst_29 : f32 to vector<8x512xf32>
    %40 = arith.maximumf %38, %39 : vector<8x512xf32>
    %41 = arith.truncf %40 : vector<8x512xf32> to vector<8x512xbf16>
    %c0_30 = arith.constant 0 : index
    %c0_31 = arith.constant 0 : index
    %42 = vector.load %arg12[%c0_30, %c0_31] : memref<512x256xbf16, #tpu.memory_space<vmem>>, vector<512x256xbf16>
    %cst_32 = arith.constant dense<0.000000e+00> : vector<8x256xf32>
    %43 = tpu.matmul %41, %42, %cst_32 {dimension_numbers = #tpu.dot_dimension_numbers<[1], [0], [0], [1], [0, 0, 1, 1], [], []>} : vector<8x512xbf16>, vector<512x256xbf16>, vector<8x256xf32> -> vector<8x256xf32>
    %c0_33 = arith.constant 0 : index
    %c0_34 = arith.constant 0 : index
    %44 = vector.load %arg13[%c0_33, %c0_34] : memref<1x256xf32, #tpu.memory_space<vmem>>, vector<1x256xf32>
    %45 = vector.broadcast %44 : vector<1x256xf32> to vector<8x256xf32>
    %46 = arith.addf %43, %45 : vector<8x256xf32>
    %47 = arith.negf %46 : vector<8x256xf32>
    %48 = math.exp %47 : vector<8x256xf32>
    %cst_35 = arith.constant 1.000000e+00 : f32
    %49 = vector.broadcast %cst_35 : f32 to vector<8x256xf32>
    %50 = arith.addf %49, %48 : vector<8x256xf32>
    %51 = arith.divf %49, %50 : vector<8x256xf32>
    %c0_36 = arith.constant 0 : index
    %c0_37 = arith.constant 0 : index
    %52 = vector.load %arg14[%c0_36, %c0_37] : memref<8x256xf32, #tpu.memory_space<vmem>>, vector<8x256xf32>
    tpu.vector_store %arg14[%c0_36, %c0_37], %51 {strides = array<i32>} : memref<8x256xf32, #tpu.memory_space<vmem>>, vector<8x256xf32>,
    return
  }
  func.func @transform_0(%arg0: i32) -> (i32, i32) {
    %c0_i32 = arith.constant 0 : i32
    %c0_i32_0 = arith.constant 0 : i32
    return %arg0, %c0_i32 : i32, i32
  }
  func.func @transform_1(%arg0: i32) -> (i32, i32) {
    %c0_i32 = arith.constant 0 : i32
    %c0_i32_0 = arith.constant 0 : i32
    %c0_i32_1 = arith.constant 0 : i32
    return %c0_i32, %c0_i32_0 : i32, i32
  }
  func.func @transform_2(%arg0: i32) -> (i32, i32) {
    %c0_i32 = arith.constant 0 : i32
    %c0_i32_0 = arith.constant 0 : i32
    %c0_i32_1 = arith.constant 0 : i32
    return %c0_i32, %c0_i32_0 : i32, i32
  }
  func.func @transform_3(%arg0: i32) -> (i32, i32) {
    %c0_i32 = arith.constant 0 : i32
    %c0_i32_0 = arith.constant 0 : i32
    %c0_i32_1 = arith.constant 0 : i32
    return %c0_i32, %c0_i32_0 : i32, i32
  }
  func.func @transform_4(%arg0: i32) -> (i32, i32) {
    %c0_i32 = arith.constant 0 : i32
    %c0_i32_0 = arith.constant 0 : i32
    %c0_i32_1 = arith.constant 0 : i32
    return %c0_i32, %c0_i32_0 : i32, i32
  }
  func.func @transform_5(%arg0: i32) -> (i32, i32) {
    %c0_i32 = arith.constant 0 : i32
    %c0_i32_0 = arith.constant 0 : i32
    %c0_i32_1 = arith.constant 0 : i32
    return %c0_i32, %c0_i32_0 : i32, i32
  }
  func.func @transform_6(%arg0: i32) -> (i32, i32) {
    %c0_i32 = arith.constant 0 : i32
    %c0_i32_0 = arith.constant 0 : i32
    %c0_i32_1 = arith.constant 0 : i32
    return %c0_i32, %c0_i32_0 : i32, i32
  }
  func.func @transform_7(%arg0: i32) -> (i32, i32) {
    %c0_i32 = arith.constant 0 : i32
    %c0_i32_0 = arith.constant 0 : i32
    %c0_i32_1 = arith.constant 0 : i32
    return %c0_i32, %c0_i32_0 : i32, i32
  }
  func.func @transform_8(%arg0: i32) -> (i32, i32) {
    %c0_i32 = arith.constant 0 : i32
    %c0_i32_0 = arith.constant 0 : i32
    %c0_i32_1 = arith.constant 0 : i32
    return %c0_i32, %c0_i32_0 : i32, i32
  }
  func.func @transform_9(%arg0: i32) -> (i32, i32) {
    %c0_i32 = arith.constant 0 : i32
    %c0_i32_0 = arith.constant 0 : i32
    %c0_i32_1 = arith.constant 0 : i32
    return %c0_i32, %c0_i32_0 : i32, i32
  }
  func.func @transform_10(%arg0: i32) -> (i32, i32) {
    %c0_i32 = arith.constant 0 : i32
    %c0_i32_0 = arith.constant 0 : i32
    %c0_i32_1 = arith.constant 0 : i32
    return %c0_i32, %c0_i32_0 : i32, i32
  }
  func.func @transform_11(%arg0: i32) -> (i32, i32) {
    %c0_i32 = arith.constant 0 : i32
    %c0_i32_0 = arith.constant 0 : i32
    %c0_i32_1 = arith.constant 0 : i32
    return %c0_i32, %c0_i32_0 : i32, i32
  }
  func.func @transform_12(%arg0: i32) -> (i32, i32) {
    %c0_i32 = arith.constant 0 : i32
    %c0_i32_0 = arith.constant 0 : i32
    %c0_i32_1 = arith.constant 0 : i32
    return %c0_i32, %c0_i32_0 : i32, i32
  }
  func.func @transform_13(%arg0: i32) -> (i32, i32) {
    %c0_i32 = arith.constant 0 : i32
    %c0_i32_0 = arith.constant 0 : i32
    return %arg0, %c0_i32 : i32, i32
  }
}

</mosaic_0001>

<llo_original>
// kernel: tpu_custom_call.1
$region0: #{tpu_custom_call.1}
  #allocation0 [shape = 'u32[]', space=smem, size = 0x4, offset = 0x4, fixed_abs, tag = 'smem constant byte address 0x4 - core index']
  #allocation1 [shape = 'u32[144,128]{1,0:T(1,128)}', space=vmem, size = 0x12000, scoped, tag = 'internal scratch']
  %s0 = inlined_call_operand.vmem [shape: f32[8,4], index: 0, kind: input, shape index: {}]
  %s1 = inlined_call_operand.hbm [shape: bf16[4,16], index: 1, kind: input, shape index: {}]
  %s2 = inlined_call_operand.hbm [shape: f32[1,16], index: 2, kind: input, shape index: {}]
  %s3 = inlined_call_operand.hbm [shape: bf16[16,128], index: 3, kind: input, shape index: {}]
  %s4 = inlined_call_operand.hbm [shape: f32[1,128], index: 4, kind: input, shape index: {}]
  %s5 = inlined_call_operand.hbm [shape: bf16[128,1024], index: 5, kind: input, shape index: {}]
  %s6 = inlined_call_operand.hbm [shape: f32[1,1024], index: 6, kind: input, shape index: {}]
  %s7 = inlined_call_operand.hbm [shape: bf16[1024,1024], index: 7, kind: input, shape index: {}]
  %s8 = inlined_call_operand.hbm [shape: f32[1,1024], index: 8, kind: input, shape index: {}]
  %s9 = inlined_call_operand.hbm [shape: bf16[1024,512], index: 9, kind: input, shape index: {}]
  %s10 = inlined_call_operand.hbm [shape: f32[1,512], index: 10, kind: input, shape index: {}]
  %s11 = inlined_call_operand.hbm [shape: bf16[512,256], index: 11, kind: input, shape index: {}]
  %s12 = inlined_call_operand.hbm [shape: f32[1,256], index: 12, kind: input, shape index: {}]
  %s13 = inlined_call_operand.hbm [shape: f32[8,256], index: 13, kind: output, shape index: {}]
  %s14 = sld [smem:[#allocation0]]
  $region110: #{tpu_custom_call.1} parent=0
    _
  %s16 = ssub.s32 1, %s14
  %s17 = scalar_select 0, %s16, %s14
  $region1: #{tpu_custom_call.1} parent=0
    #allocation2 [shape = 'u8[1024]{0}', space=vmem, size = 0x400, scoped, tag = 'input window, operand 1, single buffered']
    #allocation3 [shape = 's32[1]{0}', space=sflag, size = 0x4, scoped, tag = 'scoped memory for tpu_custom_call.1']
    #allocation4 [shape = 's32[1]{0}', space=sflag, size = 0x4, scoped, tag = 'scoped memory for tpu_custom_call.1']
    #allocation5 [shape = 'u8[512]{0}', space=vmem, size = 0x400, scoped, tag = 'input window, operand 2, single buffered']
    #allocation6 [shape = 's32[1]{0}', space=sflag, size = 0x4, scoped, tag = 'scoped memory for tpu_custom_call.1']
    #allocation7 [shape = 'u8[4096]{0}', space=vmem, size = 0x1000, scoped, tag = 'input window, operand 3, single buffered']
    #allocation8 [shape = 'u8[512]{0}', space=vmem, size = 0x400, scoped, tag = 'input window, operand 4, single buffered']
    #allocation9 [shape = 's32[1]{0}', space=sflag, size = 0x4, scoped, tag = 'scoped memory for tpu_custom_call.1']
    #allocation10 [shape = 'u8[262144]{0}', space=vmem, size = 0x40000, scoped, tag = 'input window, operand 5, single buffered']
    #allocation11 [shape = 'u8[4096]{0}', space=vmem, size = 0x1000, scoped, tag = 'input window, operand 6, single buffered']
    #allocation12 [shape = 's32[1]{0}', space=sflag, size = 0x4, scoped, tag = 'scoped memory for tpu_custom_call.1']
    #allocation13 [shape = 'u8[2097152]{0}', space=vmem, size = 0x200000, scoped, tag = 'input window, operand 7, single buffered']
    #allocation14 [shape = 'u8[4096]{0}', space=vmem, size = 0x1000, scoped, tag = 'input window, operand 8, single buffered']
    #allocation15 [shape = 's32[1]{0}', space=sflag, size = 0x4, scoped, tag = 'scoped memory for tpu_custom_call.1']
    #allocation16 [shape = 'u8[1048576]{0}', space=vmem, size = 0x100000, scoped, tag = 'input window, operand 9, single buffered']
    #allocation17 [shape = 'u8[2048]{0}', space=vmem, size = 0x800, scoped, tag = 'input window, operand 10, single buffered']
    #allocation18 [shape = 's32[1]{0}', space=sflag, size = 0x4, scoped, tag = 'scoped memory for tpu_custom_call.1']
    #allocation19 [shape = 'u8[262144]{0}', space=vmem, size = 0x40000, scoped, tag = 'input window, operand 11, single buffered']
    #allocation20 [shape = 'u8[1024]{0}', space=vmem, size = 0x400, scoped, tag = 'input window, operand 12, single buffered']
    #allocation21 [shape = 's32[1]{0}', space=sflag, size = 0x4, scoped, tag = 'scoped memory for tpu_custom_call.1']
    #allocation22 [shape = 'u8[8192]{0}', space=vmem, size = 0x2000, scoped, tag = 'output window, operand 0, single buffered']
    %18 = vsyncpa [#allocation3], 0
    %19 = vsyncpa [#allocation6], 0
    %20 = vsyncpa [#allocation9], 0
    %21 = vsyncpa [#allocation12], 0
    %22 = vsyncpa [#allocation15], 0
    %23 = vsyncpa [#allocation18], 0
    %24 = vsyncpa [#allocation21], 0
    %25 = vsyncpa [#allocation4], 0
    // Predicated region
    $region2: #{tpu_custom_call.1} parent=1 // pred_check
      _
    $region3: #{tpu_custom_call.1} parent=1 // pred_check_branch
      %27 = sbr.rel (0) target = $region5
    $region4: #{tpu_custom_call.1} parent=1 // pred_region
      _
    $region5: #{tpu_custom_call.1} parent=1 // pred_fallthru
      _
    // Predicated region
    $region6: #{tpu_custom_call.1} parent=1 // pred_check
      _
    $region7: #{tpu_custom_call.1} parent=1 // pred_check_branch
      %29 = sbr.rel (0) target = $region9
    $region8: #{tpu_custom_call.1} parent=1 // pred_region
      %s31 = ssub.s32 32, 32
      %32 = vsyncadd [#allocation3], %s31
      %s34 = sshll.u32 [#allocation2], 4
      %s35 = int_to_ptr.vmem [resolvable:$true] %s34
      %37 = dma.hbm_to_vmem [thread:$0]  %s1, 32, %s35, [#allocation3]
    $region9: #{tpu_custom_call.1} parent=1 // pred_fallthru
      _
    // Predicated region
    $region10: #{tpu_custom_call.1} parent=1 // pred_check
      _
    $region11: #{tpu_custom_call.1} parent=1 // pred_check_branch
      %39 = sbr.rel (0) target = $region13
    $region12: #{tpu_custom_call.1} parent=1 // pred_region
      %s41 = ssub.s32 16, 16
      %42 = vsyncadd [#allocation6], %s41
      %s44 = sshll.u32 [#allocation5], 4
      %s45 = int_to_ptr.vmem [resolvable:$true] %s44
      %47 = dma.hbm_to_vmem [thread:$0]  %s2, 16, %s45, [#allocation6]
    $region13: #{tpu_custom_call.1} parent=1 // pred_fallthru
      _
    // Predicated region
    $region14: #{tpu_custom_call.1} parent=1 // pred_check
      _
    $region15: #{tpu_custom_call.1} parent=1 // pred_check_branch
      %49 = sbr.rel (0) target = $region17
    $region16: #{tpu_custom_call.1} parent=1 // pred_region
      %s51 = ssub.s32 128, 128
      %52 = vsyncadd [#allocation6], %s51
      %s53 = sshll.u32 [#allocation7], 4
      %s54 = int_to_ptr.vmem [resolvable:$true] %s53
      %59 = dma.hbm_to_vmem [thread:$0]  %s3, 128, %s54, [#allocation6], 64, 64, 4
    $region17: #{tpu_custom_call.1} parent=1 // pred_fallthru
      _
    // Predicated region
    $region18: #{tpu_custom_call.1} parent=1 // pred_check
      _
    $region19: #{tpu_custom_call.1} parent=1 // pred_check_branch
      %61 = sbr.rel (0) target = $region21
    $region20: #{tpu_custom_call.1} parent=1 // pred_region
      %s63 = ssub.s32 16, 16
      %64 = vsyncadd [#allocation9], %s63
      %s66 = sshll.u32 [#allocation8], 4
      %s67 = int_to_ptr.vmem [resolvable:$true] %s66
      %69 = dma.hbm_to_vmem [thread:$0]  %s4, 16, %s67, [#allocation9]
    $region21: #{tpu_custom_call.1} parent=1 // pred_fallthru
      _
    // Predicated region
    $region22: #{tpu_custom_call.1} parent=1 // pred_check
      _
    $region23: #{tpu_custom_call.1} parent=1 // pred_check_branch
      %71 = sbr.rel (0) target = $region25
    $region24: #{tpu_custom_call.1} parent=1 // pred_region
      %s73 = ssub.s32 8192, 8192
      %74 = vsyncadd [#allocation9], %s73
      %s75 = sshll.u32 [#allocation10], 4
      %s76 = int_to_ptr.vmem [resolvable:$true] %s75
      %81 = dma.hbm_to_vmem [thread:$0]  %s5, 8192, %s76, [#allocation9], 512, 512, 32
    $region25: #{tpu_custom_call.1} parent=1 // pred_fallthru
      _
    // Predicated region
    $region26: #{tpu_custom_call.1} parent=1 // pred_check
      _
    $region27: #{tpu_custom_call.1} parent=1 // pred_check_branch
      %83 = sbr.rel (0) target = $region29
    $region28: #{tpu_custom_call.1} parent=1 // pred_region
      %s85 = ssub.s32 128, 128
      %86 = vsyncadd [#allocation12], %s85
      %s88 = sshll.u32 [#allocation11], 4
      %s89 = int_to_ptr.vmem [resolvable:$true] %s88
      %91 = dma.hbm_to_vmem [thread:$0]  %s6, 128, %s89, [#allocation12]
    $region29: #{tpu_custom_call.1} parent=1 // pred_fallthru
      _
    // Predicated region
    $region30: #{tpu_custom_call.1} parent=1 // pred_check
      _
    $region31: #{tpu_custom_call.1} parent=1 // pred_check_branch
      %93 = sbr.rel (0) target = $region33
    $region32: #{tpu_custom_call.1} parent=1 // pred_region
      %s95 = ssub.s32 65536, 65536
      %96 = vsyncadd [#allocation12], %s95
      %s97 = sshll.u32 [#allocation13], 4
      %s98 = int_to_ptr.vmem [resolvable:$true] %s97
      %103 = dma.hbm_to_vmem [thread:$0]  %s7, 65536, %s98, [#allocation12], 512, 512, 32
    $region33: #{tpu_custom_call.1} parent=1 // pred_fallthru
      _
    // Predicated region
    $region34: #{tpu_custom_call.1} parent=1 // pred_check
      _
    $region35: #{tpu_custom_call.1} parent=1 // pred_check_branch
      %105 = sbr.rel (0) target = $region37
    $region36: #{tpu_custom_call.1} parent=1 // pred_region
      %s107 = ssub.s32 128, 128
      %108 = vsyncadd [#allocation15], %s107
      %s110 = sshll.u32 [#allocation14], 4
      %s111 = int_to_ptr.vmem [resolvable:$true] %s110
      %113 = dma.hbm_to_vmem [thread:$0]  %s8, 128, %s111, [#allocation15]
    $region37: #{tpu_custom_call.1} parent=1 // pred_fallthru
      _
    // Predicated region
    $region38: #{tpu_custom_call.1} parent=1 // pred_check
      _
    $region39: #{tpu_custom_call.1} parent=1 // pred_check_branch
      %115 = sbr.rel (0) target = $region41
    $region40: #{tpu_custom_call.1} parent=1 // pred_region
      %s117 = ssub.s32 32768, 32768
      %118 = vsyncadd [#allocation15], %s117
      %s119 = sshll.u32 [#allocation16], 4
      %s120 = int_to_ptr.vmem [resolvable:$true] %s119
      %125 = dma.hbm_to_vmem [thread:$0]  %s9, 32768, %s120, [#allocation15], 256, 256, 16
    $region41: #{tpu_custom_call.1} parent=1 // pred_fallthru
      _
    // Predicated region
    $region42: #{tpu_custom_call.1} parent=1 // pred_check
      _
    $region43: #{tpu_custom_call.1} parent=1 // pred_check_branch
      %127 = sbr.rel (0) target = $region45
    $region44: #{tpu_custom_call.1} parent=1 // pred_region
      %s129 = ssub.s32 64, 64
      %130 = vsyncadd [#allocation18], %s129
      %s132 = sshll.u32 [#allocation17], 4
      %s133 = int_to_ptr.vmem [resolvable:$true] %s132
      %135 = dma.hbm_to_vmem [thread:$0]  %s10, 64, %s133, [#allocation18]
    $region45: #{tpu_custom_call.1} parent=1 // pred_fallthru
      _
    // Predicated region
    $region46: #{tpu_custom_call.1} parent=1 // pred_check
      _
    $region47: #{tpu_custom_call.1} parent=1 // pred_check_branch
      %137 = sbr.rel (0) target = $region49
    $region48: #{tpu_custom_call.1} parent=1 // pred_region
      %s139 = ssub.s32 8192, 8192
      %140 = vsyncadd [#allocation18], %s139
      %s141 = sshll.u32 [#allocation19], 4
      %s142 = int_to_ptr.vmem [resolvable:$true] %s141
      %147 = dma.hbm_to_vmem [thread:$0]  %s11, 8192, %s142, [#allocation18], 128, 128, 8
    $region49: #{tpu_custom_call.1} parent=1 // pred_fallthru
      _
    // Predicated region
    $region50: #{tpu_custom_call.1} parent=1 // pred_check
      _
    $region51: #{tpu_custom_call.1} parent=1 // pred_check_branch
      %149 = sbr.rel (0) target = $region53
    $region52: #{tpu_custom_call.1} parent=1 // pred_region
      %s151 = ssub.s32 32, 32
      %152 = vsyncadd [#allocation21], %s151
      %s154 = sshll.u32 [#allocation20], 4
      %s155 = int_to_ptr.vmem [resolvable:$true] %s154
      %157 = dma.hbm_to_vmem [thread:$0]  %s12, 32, %s155, [#allocation21]
    $region53: #{tpu_custom_call.1} parent=1 // pred_fallthru
      _
    // Predicated region
    $region54: #{tpu_custom_call.1} parent=1 // pred_check
      _
    $region55: #{tpu_custom_call.1} parent=1 // pred_check_branch
      %159 = sbr.rel (0) target = $region57
    $region56: #{tpu_custom_call.1} parent=1 // pred_region
      %160 = dma.done [#allocation3], 32
    $region57: #{tpu_custom_call.1} parent=1 // pred_fallthru
      _
    // Predicated region
    $region58: #{tpu_custom_call.1} parent=1 // pred_check
      _
    $region59: #{tpu_custom_call.1} parent=1 // pred_check_branch
      %162 = sbr.rel (0) target = $region61
    $region60: #{tpu_custom_call.1} parent=1 // pred_region
      %163 = dma.done [#allocation6], 16
    $region61: #{tpu_custom_call.1} parent=1 // pred_fallthru
      _
    // Predicated region
    $region62: #{tpu_custom_call.1} parent=1 // pred_check
      _
    $region63: #{tpu_custom_call.1} parent=1 // pred_check_branch
      %165 = sbr.rel (0) target = $region65
    $region64: #{tpu_custom_call.1} parent=1 // pred_region
      %166 = dma.done [#allocation6], 128
    $region65: #{tpu_custom_call.1} parent=1 // pred_fallthru
      _
    // Predicated region
    $region66: #{tpu_custom_call.1} parent=1 // pred_check
      _
    $region67: #{tpu_custom_call.1} parent=1 // pred_check_branch
      %168 = sbr.rel (0) target = $region69
    $region68: #{tpu_custom_call.1} parent=1 // pred_region
      %169 = dma.done [#allocation9], 16
    $region69: #{tpu_custom_call.1} parent=1 // pred_fallthru
      _
    // Predicated region
    $region70: #{tpu_custom_call.1} parent=1 // pred_check
      _
    $region71: #{tpu_custom_call.1} parent=1 // pred_check_branch
      %171 = sbr.rel (0) target = $region73
    $region72: #{tpu_custom_call.1} parent=1 // pred_region
      %172 = dma.done [#allocation9], 8192
    $region73: #{tpu_custom_call.1} parent=1 // pred_fallthru
      _
    // Predicated region
    $region74: #{tpu_custom_call.1} parent=1 // pred_check
      _
    $region75: #{tpu_custom_call.1} parent=1 // pred_check_branch
      %174 = sbr.rel (0) target = $region77
    $region76: #{tpu_custom_call.1} parent=1 // pred_region
      %175 = dma.done [#allocation12], 128
    $region77: #{tpu_custom_call.1} parent=1 // pred_fallthru
      _
    // Predicated region
    $region78: #{tpu_custom_call.1} parent=1 // pred_check
      _
    $region79: #{tpu_custom_call.1} parent=1 // pred_check_branch
      %177 = sbr.rel (0) target = $region81
    $region80: #{tpu_custom_call.1} parent=1 // pred_region
      %178 = dma.done [#allocation12], 65536
    $region81: #{tpu_custom_call.1} parent=1 // pred_fallthru
      _
    // Predicated region
    $region82: #{tpu_custom_call.1} parent=1 // pred_check
      _
    $region83: #{tpu_custom_call.1} parent=1 // pred_check_branch
      %180 = sbr.rel (0) target = $region85
    $region84: #{tpu_custom_call.1} parent=1 // pred_region
      %181 = dma.done [#allocation15], 128
    $region85: #{tpu_custom_call.1} parent=1 // pred_fallthru
      _
    // Predicated region
    $region86: #{tpu_custom_call.1} parent=1 // pred_check
      _
    $region87: #{tpu_custom_call.1} parent=1 // pred_check_branch
      %183 = sbr.rel (0) target = $region89
    $region88: #{tpu_custom_call.1} parent=1 // pred_region
      %184 = dma.done [#allocation15], 32768
    $region89: #{tpu_custom_call.1} parent=1 // pred_fallthru
      _
    // Predicated region
    $region90: #{tpu_custom_call.1} parent=1 // pred_check
      _
    $region91: #{tpu_custom_call.1} parent=1 // pred_check_branch
      %186 = sbr.rel (0) target = $region93
    $region92: #{tpu_custom_call.1} parent=1 // pred_region
      %187 = dma.done [#allocation18], 64
    $region93: #{tpu_custom_call.1} parent=1 // pred_fallthru
      _
    // Predicated region
    $region94: #{tpu_custom_call.1} parent=1 // pred_check
      _
    $region95: #{tpu_custom_call.1} parent=1 // pred_check_branch
      %189 = sbr.rel (0) target = $region97
    $region96: #{tpu_custom_call.1} parent=1 // pred_region
      %190 = dma.done [#allocation18], 8192
    $region97: #{tpu_custom_call.1} parent=1 // pred_fallthru
      _
    // Predicated region
    $region98: #{tpu_custom_call.1} parent=1 // pred_check
      _
    $region99: #{tpu_custom_call.1} parent=1 // pred_check_branch
      %192 = sbr.rel (0) target = $region101
    $region100: #{tpu_custom_call.1} parent=1 // pred_region
      %193 = dma.done [#allocation21], 32
    $region101: #{tpu_custom_call.1} parent=1 // pred_fallthru
      _
    %v195 = vld [vmem:[%s0] sm:$0xff]
    %v196 = vpack.c.bf16 %v195, %v195
    %v197 = vld [vmem:[#allocation2] sm:$0x3]
    %v198 = vld [vmem:[#allocation5] sm:$0x1]
    %v200 = vlaneseq
    %v201 = vshrl.u32 %v200, 7
    %v202 = vsub.s32 0, %v201
    %v203 = vrot.slane %v198, %v202
    %vm205 = vcmask 31744
    %v207 = vsel %vm205, %v196, 0
    %vm209 = vcmask 1041408
    %v211 = vsel %vm209, %v197, 0
    %213 = vmatprep.subr.bf16.mxu0 0
    %214 = vmatpush1.bf16.msra.mxu0 0
    %215 = vmatprep.subr.bf16.mxu0 0
    %216 = vmatpush1.bf16.msra.mxu0 0
    %217 = vmatprep.subr.bf16.mxu0 0
    %218 = vmatpush1.bf16.msra.mxu0 0
    %219 = vmatprep.subr.bf16.mxu0 0
    %220 = vmatpush1.bf16.msra.mxu0 0
    %221 = vmatprep.subr.bf16.mxu0 0
    %222 = vmatpush1.bf16.msra.mxu0 0
    %223 = vmatprep.subr.bf16.mxu0 0
    %224 = vmatpush1.bf16.msra.mxu0 0
    %225 = vmatprep.subr.bf16.mxu0 0
    %226 = vmatpush1.bf16.msra.mxu0 0
    %227 = vmatprep.subr.bf16.mxu0 0
    %228 = vmatpush1.bf16.msra.mxu0 %v211
    %229 = vmatprep.subr.bf16.mxu0 0
    %230 = vmatpush2.bf16.msra.mxu0 0
    %231 = vmatprep.subr.bf16.mxu0 0
    %232 = vmatpush2.bf16.msra.mxu0 0
    %233 = vmatprep.subr.bf16.mxu0 0
    %234 = vmatpush2.bf16.msra.mxu0 0
    %235 = vmatprep.subr.bf16.mxu0 0
    %236 = vmatpush2.bf16.msra.mxu0 0
    %237 = vmatprep.subr.bf16.mxu0 0
    %238 = vmatpush2.bf16.msra.mxu0 0
    %239 = vmatprep.subr.bf16.mxu0 0
    %240 = vmatpush2.bf16.msra.mxu0 0
    %241 = vmatprep.subr.bf16.mxu0 0
    %242 = vmatpush2.bf16.msra.mxu0 0
    %243 = vmatprep.subr.bf16.mxu0 0
    %244 = vmatpush2.bf16.msra.mxu0 0
    %245 = vmatprep.mubr.bf16.mxu0 0
    %246 = vmatmul.mubr.bf16.gmra.mxu0 %v207
    %v247 = vpop.f32.mrf.mxu0
    %v248 = vadd.f32 %v203, %v247
    %v249 = vpop.f32.mrf.mxu0
    %v250 = vpop.f32.mrf.mxu0
    %v251 = vpop.f32.mrf.mxu0
    %252 = vdwg.mxu0
    %v253 = vmax.f32 %v248, 0.0
    %v254 = vpack.c.bf16 %v253, %v253
    %v255 = vld [vmem:[#allocation7] sm:$0xf]
    %v256 = vld [vmem:[#allocation7 + $0x4] sm:$0xf]
    %v257 = vld [vmem:[#allocation8] sm:$0x1]
    %v259 = vlaneseq
    %v260 = vshrl.u32 %v259, 7
    %v261 = vsub.s32 0, %v260
    %v262 = vrot.slane %v257, %v261
    %v266 = vunpack.c.l.b16 %v255
    %v267 = vunpack.c.l.b16 %v256
    %v268 = vpack.c.b16 %v267, %v266
    %vm270 = vcmask 130048
    %v272 = vsel %vm270, %v254, 0
    %274 = vmatprep.subr.bf16.mxu0 0
    %275 = vmatpush1.bf16.msra.mxu0 0
    %276 = vmatprep.subr.bf16.mxu0 0
    %277 = vmatpush1.bf16.msra.mxu0 0
    %278 = vmatprep.subr.bf16.mxu0 0
    %279 = vmatpush1.bf16.msra.mxu0 0
    %280 = vmatprep.subr.bf16.mxu0 0
    %281 = vmatpush1.bf16.msra.mxu0 0
    %282 = vmatprep.subr.bf16.mxu0 0
    %283 = vmatpush1.bf16.msra.mxu0 0
    %284 = vmatprep.subr.bf16.mxu0 0
    %285 = vmatpush1.bf16.msra.mxu0 0
    %286 = vmatprep.subr.bf16.mxu0 0
    %287 = vmatpush1.bf16.msra.mxu0 0
    %288 = vmatprep.subr.bf16.mxu0 0
    %289 = vmatpush1.bf16.msra.mxu0 %v268
    %290 = vmatprep.subr.bf16.mxu0 0
    %291 = vmatpush2.bf16.msra.mxu0 0
    %292 = vmatprep.subr.bf16.mxu0 0
    %293 = vmatpush2.bf16.msra.mxu0 0
    %294 = vmatprep.subr.bf16.mxu0 0
    %295 = vmatpush2.bf16.msra.mxu0 0
    %296 = vmatprep.subr.bf16.mxu0 0
    %297 = vmatpush2.bf16.msra.mxu0 0
    %298 = vmatprep.subr.bf16.mxu0 0
    %299 = vmatpush2.bf16.msra.mxu0 0
    %300 = vmatprep.subr.bf16.mxu0 0
    %301 = vmatpush2.bf16.msra.mxu0 0
    %302 = vmatprep.subr.bf16.mxu0 0
    %303 = vmatpush2.bf16.msra.mxu0 0
    %304 = vmatprep.subr.bf16.mxu0 0
    %305 = vmatpush2.bf16.msra.mxu0 0
    %306 = vmatprep.mubr.bf16.mxu0 0
    %307 = vmatmul.mubr.bf16.gmra.mxu0 %v272
    %v308 = vpop.f32.mrf.mxu0
    %v309 = vadd.f32 %v262, %v308
    %v310 = vpop.f32.mrf.mxu0
    %v311 = vpop.f32.mrf.mxu0
    %v312 = vpop.f32.mrf.mxu0
    %313 = vdwg.mxu0
    %v314 = vmax.f32 %v309, 0.0
    %v315 = vpack.c.bf16 %v314, %v314
    %v316 = vld [vmem:[#allocation10] sm:$0xff]
    %v317 = vld [vmem:[#allocation10 + $0x8] sm:$0xff]
    %v318 = vld [vmem:[#allocation10 + $0x10] sm:$0xff]
    %v319 = vld [vmem:[#allocation10 + $0x18] sm:$0xff]
    %v320 = vld [vmem:[#allocation10 + $0x20] sm:$0xff]
    %v321 = vld [vmem:[#allocation10 + $0x28] sm:$0xff]
    %v322 = vld [vmem:[#allocation10 + $0x30] sm:$0xff]
    %v323 = vld [vmem:[#allocation10 + $0x38] sm:$0xff]
    %v324 = vld [vmem:[#allocation10 + $0x40] sm:$0xff]
    %v325 = vld [vmem:[#allocation10 + $0x48] sm:$0xff]
    %v326 = vld [vmem:[#allocation10 + $0x50] sm:$0xff]
    %v327 = vld [vmem:[#allocation10 + $0x58] sm:$0xff]
    %v328 = vld [vmem:[#allocation10 + $0x60] sm:$0xff]
    %v329 = vld [vmem:[#allocation10 + $0x68] sm:$0xff]
    %v330 = vld [vmem:[#allocation10 + $0x70] sm:$0xff]
    %v331 = vld [vmem:[#allocation10 + $0x78] sm:$0xff]
    %v332 = vld [vmem:[#allocation10 + $0x80] sm:$0xff]
    %v333 = vld [vmem:[#allocation10 + $0x88] sm:$0xff]
    %v334 = vld [vmem:[#allocation10 + $0x90] sm:$0xff]
    %v335 = vld [vmem:[#allocation10 + $0x98] sm:$0xff]
    %v336 = vld [vmem:[#allocation10 + $0xa0] sm:$0xff]
    %v337 = vld [vmem:[#allocation10 + $0xa8] sm:$0xff]
    %v338 = vld [vmem:[#allocation10 + $0xb0] sm:$0xff]
    %v339 = vld [vmem:[#allocation10 + $0xb8] sm:$0xff]
    %v340 = vld [vmem:[#allocation10 + $0xc0] sm:$0xff]
    %v341 = vld [vmem:[#allocation10 + $0xc8] sm:$0xff]
    %v342 = vld [vmem:[#allocation10 + $0xd0] sm:$0xff]
    %v343 = vld [vmem:[#allocation10 + $0xd8] sm:$0xff]
    %v344 = vld [vmem:[#allocation10 + $0xe0] sm:$0xff]
    %v345 = vld [vmem:[#allocation10 + $0xe8] sm:$0xff]
    %v346 = vld [vmem:[#allocation10 + $0xf0] sm:$0xff]
    %v347 = vld [vmem:[#allocation10 + $0xf8] sm:$0xff]
    %v348 = vld [vmem:[#allocation10 + $0x100] sm:$0xff]
    %v349 = vld [vmem:[#allocation10 + $0x108] sm:$0xff]
    %v350 = vld [vmem:[#allocation10 + $0x110] sm:$0xff]
    %v351 = vld [vmem:[#allocation10 + $0x118] sm:$0xff]
    %v352 = vld [vmem:[#allocation10 + $0x120] sm:$0xff]
    %v353 = vld [vmem:[#allocation10 + $0x128] sm:$0xff]
    %v354 = vld [vmem:[#allocation10 + $0x130] sm:$0xff]
    %v355 = vld [vmem:[#allocation10 + $0x138] sm:$0xff]
    %v356 = vld [vmem:[#allocation10 + $0x140] sm:$0xff]
    %v357 = vld [vmem:[#allocation10 + $0x148] sm:$0xff]
    %v358 = vld [vmem:[#allocation10 + $0x150] sm:$0xff]
    %v359 = vld [vmem:[#allocation10 + $0x158] sm:$0xff]
    %v360 = vld [vmem:[#allocation10 + $0x160] sm:$0xff]
    %v361 = vld [vmem:[#allocation10 + $0x168] sm:$0xff]
    %v362 = vld [vmem:[#allocation10 + $0x170] sm:$0xff]
    %v363 = vld [vmem:[#allocation10 + $0x178] sm:$0xff]
    %v364 = vld [vmem:[#allocation10 + $0x180] sm:$0xff]
    %v365 = vld [vmem:[#allocation10 + $0x188] sm:$0xff]
    %v366 = vld [vmem:[#allocation10 + $0x190] sm:$0xff]
    %v367 = vld [vmem:[#allocation10 + $0x198] sm:$0xff]
    %v368 = vld [vmem:[#allocation10 + $0x1a0] sm:$0xff]
    %v369 = vld [vmem:[#allocation10 + $0x1a8] sm:$0xff]
    %v370 = vld [vmem:[#allocation10 + $0x1b0] sm:$0xff]
    %v371 = vld [vmem:[#allocation10 + $0x1b8] sm:$0xff]
    %v372 = vld [vmem:[#allocation10 + $0x1c0] sm:$0xff]
    %v373 = vld [vmem:[#allocation10 + $0x1c8] sm:$0xff]
    %v374 = vld [vmem:[#allocation10 + $0x1d0] sm:$0xff]
    %v375 = vld [vmem:[#allocation10 + $0x1d8] sm:$0xff]
    %v376 = vld [vmem:[#allocation10 + $0x1e0] sm:$0xff]
    %v377 = vld [vmem:[#allocation10 + $0x1e8] sm:$0xff]
    %v378 = vld [vmem:[#allocation10 + $0x1f0] sm:$0xff]
    %v379 = vld [vmem:[#allocation10 + $0x1f8] sm:$0xff]
    %v380 = vld [vmem:[#allocation11] sm:$0xff]
    %v382 = vlaneseq
    %v383 = vshrl.u32 %v382, 7
    %v384 = vsub.s32 0, %v383
    %v385 = vrot.slane %v380, %v384
    %v386 = vlaneseq
    %v387 = vshrl.u32 %v386, 7
    %v388 = vsub.s32 1, %v387
    %v389 = vrot.slane %v380, %v388
    %v390 = vlaneseq
    %v391 = vshrl.u32 %v390, 7
    %v392 = vsub.s32 2, %v391
    %v393 = vrot.slane %v380, %v392
    %v394 = vlaneseq
    %v395 = vshrl.u32 %v394, 7
    %v396 = vsub.s32 3, %v395
    %v397 = vrot.slane %v380, %v396
    %v398 = vlaneseq
    %v399 = vshrl.u32 %v398, 7
    %v400 = vsub.s32 4, %v399
    %v401 = vrot.slane %v380, %v400
    %v402 = vlaneseq
    %v403 = vshrl.u32 %v402, 7
    %v404 = vsub.s32 5, %v403
    %v405 = vrot.slane %v380, %v404
    %v406 = vlaneseq
    %v407 = vshrl.u32 %v406, 7
    %v408 = vsub.s32 6, %v407
    %v409 = vrot.slane %v380, %v408
    %v410 = vlaneseq
    %v411 = vshrl.u32 %v410, 7
    %v412 = vsub.s32 7, %v411
    %v413 = vrot.slane %v380, %v412
    %v486 = vunpack.c.l.b16 %v316
    %v487 = vunpack.c.h.b16 %v316
    %v488 = vunpack.c.l.b16 %v317
    %v489 = vunpack.c.h.b16 %v317
    %v490 = vunpack.c.l.b16 %v318
    %v491 = vunpack.c.h.b16 %v318
    %v492 = vunpack.c.l.b16 %v319
    %v493 = vunpack.c.h.b16 %v319
    %v494 = vunpack.c.l.b16 %v320
    %v495 = vunpack.c.h.b16 %v320
    %v496 = vunpack.c.l.b16 %v321
    %v497 = vunpack.c.h.b16 %v321
    %v498 = vunpack.c.l.b16 %v322
    %v499 = vunpack.c.h.b16 %v322
    %v500 = vunpack.c.l.b16 %v323
    %v501 = vunpack.c.h.b16 %v323
    %v502 = vunpack.c.l.b16 %v324
    %v503 = vunpack.c.h.b16 %v324
    %v504 = vunpack.c.l.b16 %v325
    %v505 = vunpack.c.h.b16 %v325
    %v506 = vunpack.c.l.b16 %v326
    %v507 = vunpack.c.h.b16 %v326
    %v508 = vunpack.c.l.b16 %v327
    %v509 = vunpack.c.h.b16 %v327
    %v510 = vunpack.c.l.b16 %v328
    %v511 = vunpack.c.h.b16 %v328
    %v512 = vunpack.c.l.b16 %v329
    %v513 = vunpack.c.h.b16 %v329
    %v514 = vunpack.c.l.b16 %v330
    %v515 = vunpack.c.h.b16 %v330
    %v516 = vunpack.c.l.b16 %v331
    %v517 = vunpack.c.h.b16 %v331
    %v518 = vunpack.c.l.b16 %v332
    %v519 = vunpack.c.h.b16 %v332
    %v520 = vunpack.c.l.b16 %v333
    %v521 = vunpack.c.h.b16 %v333
    %v522 = vunpack.c.l.b16 %v334
    %v523 = vunpack.c.h.b16 %v334
    %v524 = vunpack.c.l.b16 %v335
    %v525 = vunpack.c.h.b16 %v335
    %v526 = vunpack.c.l.b16 %v336
    %v527 = vunpack.c.h.b16 %v336
    %v528 = vunpack.c.l.b16 %v337
    %v529 = vunpack.c.h.b16 %v337
    %v530 = vunpack.c.l.b16 %v338
    %v531 = vunpack.c.h.b16 %v338
    %v532 = vunpack.c.l.b16 %v339
    %v533 = vunpack.c.h.b16 %v339
    %v534 = vunpack.c.l.b16 %v340
    %v535 = vunpack.c.h.b16 %v340
    %v536 = vunpack.c.l.b16 %v341
    %v537 = vunpack.c.h.b16 %v341
    %v538 = vunpack.c.l.b16 %v342
    %v539 = vunpack.c.h.b16 %v342
    %v540 = vunpack.c.l.b16 %v343
    %v541 = vunpack.c.h.b16 %v343
    %v542 = vunpack.c.l.b16 %v344
    %v543 = vunpack.c.h.b16 %v344
    %v544 = vunpack.c.l.b16 %v345
    %v545 = vunpack.c.h.b16 %v345
    %v546 = vunpack.c.l.b16 %v346
    %v547 = vunpack.c.h.b16 %v346
    %v548 = vunpack.c.l.b16 %v347
    %v549 = vunpack.c.h.b16 %v347
    %v550 = vunpack.c.l.b16 %v348
    %v551 = vunpack.c.h.b16 %v348
    %v552 = vunpack.c.l.b16 %v349
    %v553 = vunpack.c.h.b16 %v349
    %v554 = vunpack.c.l.b16 %v350
    %v555 = vunpack.c.h.b16 %v350
    %v556 = vunpack.c.l.b16 %v351
    %v557 = vunpack.c.h.b16 %v351
    %v558 = vunpack.c.l.b16 %v352
    %v559 = vunpack.c.h.b16 %v352
    %v560 = vunpack.c.l.b16 %v353
    %v561 = vunpack.c.h.b16 %v353
    %v562 = vunpack.c.l.b16 %v354
    %v563 = vunpack.c.h.b16 %v354
    %v564 = vunpack.c.l.b16 %v355
    %v565 = vunpack.c.h.b16 %v355
    %v566 = vunpack.c.l.b16 %v356
    %v567 = vunpack.c.h.b16 %v356
    %v568 = vunpack.c.l.b16 %v357
    %v569 = vunpack.c.h.b16 %v357
    %v570 = vunpack.c.l.b16 %v358
    %v571 = vunpack.c.h.b16 %v358
    %v572 = vunpack.c.l.b16 %v359
    %v573 = vunpack.c.h.b16 %v359
    %v574 = vunpack.c.l.b16 %v360
    %v575 = vunpack.c.h.b16 %v360
    %v576 = vunpack.c.l.b16 %v361
    %v577 = vunpack.c.h.b16 %v361
    %v578 = vunpack.c.l.b16 %v362
    %v579 = vunpack.c.h.b16 %v362
    %v580 = vunpack.c.l.b16 %v363
    %v581 = vunpack.c.h.b16 %v363
    %v582 = vunpack.c.l.b16 %v364
    %v583 = vunpack.c.h.b16 %v364
    %v584 = vunpack.c.l.b16 %v365
    %v585 = vunpack.c.h.b16 %v365
    %v586 = vunpack.c.l.b16 %v366
    %v587 = vunpack.c.h.b16 %v366
    %v588 = vunpack.c.l.b16 %v367
    %v589 = vunpack.c.h.b16 %v367
    %v590 = vunpack.c.l.b16 %v368
    %v591 = vunpack.c.h.b16 %v368
    %v592 = vunpack.c.l.b16 %v369
    %v593 = vunpack.c.h.b16 %v369
    %v594 = vunpack.c.l.b16 %v370
    %v595 = vunpack.c.h.b16 %v370
    %v596 = vunpack.c.l.b16 %v371
    %v597 = vunpack.c.h.b16 %v371
    %v598 = vunpack.c.l.b16 %v372
    %v599 = vunpack.c.h.b16 %v372
    %v600 = vunpack.c.l.b16 %v373
    %v601 = vunpack.c.h.b16 %v373
    %v602 = vunpack.c.l.b16 %v374
    %v603 = vunpack.c.h.b16 %v374
    %v604 = vunpack.c.l.b16 %v375
    %v605 = vunpack.c.h.b16 %v375
    %v606 = vunpack.c.l.b16 %v376
    %v607 = vunpack.c.h.b16 %v376
    %v608 = vunpack.c.l.b16 %v377
    %v609 = vunpack.c.h.b16 %v377
    %v610 = vunpack.c.l.b16 %v378
    %v611 = vunpack.c.h.b16 %v378
    %v612 = vunpack.c.l.b16 %v379
    %v613 = vunpack.c.h.b16 %v379
    %v614 = vpack.c.b16 %v494, %v486
    %v615 = vpack.c.b16 %v495, %v487
    %v616 = vpack.c.b16 %v496, %v488
    %v617 = vpack.c.b16 %v497, %v489
    %v618 = vpack.c.b16 %v498, %v490
    %v619 = vpack.c.b16 %v499, %v491
    %v620 = vpack.c.b16 %v500, %v492
    %v621 = vpack.c.b16 %v501, %v493
    %v622 = vpack.c.b16 %v510, %v502
    %v623 = vpack.c.b16 %v511, %v503
    %v624 = vpack.c.b16 %v512, %v504
    %v625 = vpack.c.b16 %v513, %v505
    %v626 = vpack.c.b16 %v514, %v506
    %v627 = vpack.c.b16 %v515, %v507
    %v628 = vpack.c.b16 %v516, %v508
    %v629 = vpack.c.b16 %v517, %v509
    %v630 = vpack.c.b16 %v526, %v518
    %v631 = vpack.c.b16 %v527, %v519
    %v632 = vpack.c.b16 %v528, %v520
    %v633 = vpack.c.b16 %v529, %v521
    %v634 = vpack.c.b16 %v530, %v522
    %v635 = vpack.c.b16 %v531, %v523
    %v636 = vpack.c.b16 %v532, %v524
    %v637 = vpack.c.b16 %v533, %v525
    %v638 = vpack.c.b16 %v542, %v534
    %v639 = vpack.c.b16 %v543, %v535
    %v640 = vpack.c.b16 %v544, %v536
    %v641 = vpack.c.b16 %v545, %v537
    %v642 = vpack.c.b16 %v546, %v538
    %v643 = vpack.c.b16 %v547, %v539
    %v644 = vpack.c.b16 %v548, %v540
    %v645 = vpack.c.b16 %v549, %v541
    %v646 = vpack.c.b16 %v558, %v550
    %v647 = vpack.c.b16 %v559, %v551
    %v648 = vpack.c.b16 %v560, %v552
    %v649 = vpack.c.b16 %v561, %v553
    %v650 = vpack.c.b16 %v562, %v554
    %v651 = vpack.c.b16 %v563, %v555
    %v652 = vpack.c.b16 %v564, %v556
    %v653 = vpack.c.b16 %v565, %v557
    %v654 = vpack.c.b16 %v574, %v566
    %v655 = vpack.c.b16 %v575, %v567
    %v656 = vpack.c.b16 %v576, %v568
    %v657 = vpack.c.b16 %v577, %v569
    %v658 = vpack.c.b16 %v578, %v570
    %v659 = vpack.c.b16 %v579, %v571
    %v660 = vpack.c.b16 %v580, %v572
    %v661 = vpack.c.b16 %v581, %v573
    %v662 = vpack.c.b16 %v590, %v582
    %v663 = vpack.c.b16 %v591, %v583
    %v664 = vpack.c.b16 %v592, %v584
    %v665 = vpack.c.b16 %v593, %v585
    %v666 = vpack.c.b16 %v594, %v586
    %v667 = vpack.c.b16 %v595, %v587
    %v668 = vpack.c.b16 %v596, %v588
    %v669 = vpack.c.b16 %v597, %v589
    %v670 = vpack.c.b16 %v606, %v598
    %v671 = vpack.c.b16 %v607, %v599
    %v672 = vpack.c.b16 %v608, %v600
    %v673 = vpack.c.b16 %v609, %v601
    %v674 = vpack.c.b16 %v610, %v602
    %v675 = vpack.c.b16 %v611, %v603
    %v676 = vpack.c.b16 %v612, %v604
    %v677 = vpack.c.b16 %v613, %v605
    %742 = vmatprep.subr.bf16.mxu0 %v671
    %743 = vmatpush1.bf16.msra.mxu0 %v670
    %744 = vmatprep.subr.bf16.mxu0 %v663
    %745 = vmatpush1.bf16.msra.mxu0 %v662
    %746 = vmatprep.subr.bf16.mxu0 %v655
    %747 = vmatpush1.bf16.msra.mxu0 %v654
    %748 = vmatprep.subr.bf16.mxu0 %v647
    %749 = vmatpush1.bf16.msra.mxu0 %v646
    %750 = vmatprep.subr.bf16.mxu0 %v639
    %751 = vmatpush1.bf16.msra.mxu0 %v638
    %752 = vmatprep.subr.bf16.mxu0 %v631
    %753 = vmatpush1.bf16.msra.mxu0 %v630
    %754 = vmatprep.subr.bf16.mxu0 %v623
    %755 = vmatpush1.bf16.msra.mxu0 %v622
    %756 = vmatprep.subr.bf16.mxu0 %v615
    %757 = vmatpush1.bf16.msra.mxu0 %v614
    %758 = vmatprep.subr.bf16.mxu0 0
    %759 = vmatpush2.bf16.msra.mxu0 0
    %760 = vmatprep.subr.bf16.mxu0 0
    %761 = vmatpush2.bf16.msra.mxu0 0
    %762 = vmatprep.subr.bf16.mxu0 0
    %763 = vmatpush2.bf16.msra.mxu0 0
    %764 = vmatprep.subr.bf16.mxu0 0
    %765 = vmatpush2.bf16.msra.mxu0 0
    %766 = vmatprep.subr.bf16.mxu0 0
    %767 = vmatpush2.bf16.msra.mxu0 0
    %768 = vmatprep.subr.bf16.mxu0 0
    %769 = vmatpush2.bf16.msra.mxu0 0
    %770 = vmatprep.subr.bf16.mxu0 0
    %771 = vmatpush2.bf16.msra.mxu0 0
    %772 = vmatprep.subr.bf16.mxu0 0
    %773 = vmatpush2.bf16.msra.mxu0 0
    %774 = vmatprep.mubr.bf16.mxu0 0
    %775 = vmatmul.mubr.bf16.gmra.mxu0 %v315
    %v776 = vpop.f32.mrf.mxu0
    %v777 = vadd.f32 %v385, %v776
    %v778 = vpop.f32.mrf.mxu0
    %v779 = vadd.f32 %v389, %v778
    %v780 = vpop.f32.mrf.mxu0
    %v781 = vpop.f32.mrf.mxu0
    %782 = vdwg.mxu0
    %783 = vmatprep.subr.bf16.mxu0 %v673
    %784 = vmatpush1.bf16.msra.mxu0 %v672
    %785 = vmatprep.subr.bf16.mxu0 %v665
    %786 = vmatpush1.bf16.msra.mxu0 %v664
    %787 = vmatprep.subr.bf16.mxu0 %v657
    %788 = vmatpush1.bf16.msra.mxu0 %v656
    %789 = vmatprep.subr.bf16.mxu0 %v649
    %790 = vmatpush1.bf16.msra.mxu0 %v648
    %791 = vmatprep.subr.bf16.mxu0 %v641
    %792 = vmatpush1.bf16.msra.mxu0 %v640
    %793 = vmatprep.subr.bf16.mxu0 %v633
    %794 = vmatpush1.bf16.msra.mxu0 %v632
    %795 = vmatprep.subr.bf16.mxu0 %v625
    %796 = vmatpush1.bf16.msra.mxu0 %v624
    %797 = vmatprep.subr.bf16.mxu0 %v617
    %798 = vmatpush1.bf16.msra.mxu0 %v616
    %799 = vmatprep.subr.bf16.mxu0 0
    %800 = vmatpush2.bf16.msra.mxu0 0
    %801 = vmatprep.subr.bf16.mxu0 0
    %802 = vmatpush2.bf16.msra.mxu0 0
    %803 = vmatprep.subr.bf16.mxu0 0
    %804 = vmatpush2.bf16.msra.mxu0 0
    %805 = vmatprep.subr.bf16.mxu0 0
    %806 = vmatpush2.bf16.msra.mxu0 0
    %807 = vmatprep.subr.bf16.mxu0 0
    %808 = vmatpush2.bf16.msra.mxu0 0
    %809 = vmatprep.subr.bf16.mxu0 0
    %810 = vmatpush2.bf16.msra.mxu0 0
    %811 = vmatprep.subr.bf16.mxu0 0
    %812 = vmatpush2.bf16.msra.mxu0 0
    %813 = vmatprep.subr.bf16.mxu0 0
    %814 = vmatpush2.bf16.msra.mxu0 0
    %815 = vmatprep.mubr.bf16.mxu0 0
    %816 = vmatmul.mubr.bf16.gmra.mxu0 %v315
    %v817 = vpop.f32.mrf.mxu0
    %v818 = vadd.f32 %v393, %v817
    %v819 = vpop.f32.mrf.mxu0
    %v820 = vadd.f32 %v397, %v819
    %v821 = vpop.f32.mrf.mxu0
    %v822 = vpop.f32.mrf.mxu0
    %823 = vdwg.mxu0
    %824 = vmatprep.subr.bf16.mxu0 %v675
    %825 = vmatpush1.bf16.msra.mxu0 %v674
    %826 = vmatprep.subr.bf16.mxu0 %v667
    %827 = vmatpush1.bf16.msra.mxu0 %v666
    %828 = vmatprep.subr.bf16.mxu0 %v659
    %829 = vmatpush1.bf16.msra.mxu0 %v658
    %830 = vmatprep.subr.bf16.mxu0 %v651
    %831 = vmatpush1.bf16.msra.mxu0 %v650
    %832 = vmatprep.subr.bf16.mxu0 %v643
    %833 = vmatpush1.bf16.msra.mxu0 %v642
    %834 = vmatprep.subr.bf16.mxu0 %v635
    %835 = vmatpush1.bf16.msra.mxu0 %v634
    %836 = vmatprep.subr.bf16.mxu0 %v627
    %837 = vmatpush1.bf16.msra.mxu0 %v626
    %838 = vmatprep.subr.bf16.mxu0 %v619
    %839 = vmatpush1.bf16.msra.mxu0 %v618
    %840 = vmatprep.subr.bf16.mxu0 0
    %841 = vmatpush2.bf16.msra.mxu0 0
    %842 = vmatprep.subr.bf16.mxu0 0
    %843 = vmatpush2.bf16.msra.mxu0 0
    %844 = vmatprep.subr.bf16.mxu0 0
    %845 = vmatpush2.bf16.msra.mxu0 0
    %846 = vmatprep.subr.bf16.mxu0 0
    %847 = vmatpush2.bf16.msra.mxu0 0
    %848 = vmatprep.subr.bf16.mxu0 0
    %849 = vmatpush2.bf16.msra.mxu0 0
    %850 = vmatprep.subr.bf16.mxu0 0
    %851 = vmatpush2.bf16.msra.mxu0 0
    %852 = vmatprep.subr.bf16.mxu0 0
    %853 = vmatpush2.bf16.msra.mxu0 0
    %854 = vmatprep.subr.bf16.mxu0 0
    %855 = vmatpush2.bf16.msra.mxu0 0
    %856 = vmatprep.mubr.bf16.mxu0 0
    %857 = vmatmul.mubr.bf16.gmra.mxu0 %v315
    %v858 = vpop.f32.mrf.mxu0
    %v859 = vadd.f32 %v401, %v858
    %v860 = vpop.f32.mrf.mxu0
    %v861 = vadd.f32 %v405, %v860
    %v862 = vpop.f32.mrf.mxu0
    %v863 = vpop.f32.mrf.mxu0
    %864 = vdwg.mxu0
    %865 = vmatprep.subr.bf16.mxu0 %v677
    %866 = vmatpush1.bf16.msra.mxu0 %v676
    %867 = vmatprep.subr.bf16.mxu0 %v669
    %868 = vmatpush1.bf16.msra.mxu0 %v668
    %869 = vmatprep.subr.bf16.mxu0 %v661
    %870 = vmatpush1.bf16.msra.mxu0 %v660
    %871 = vmatprep.subr.bf16.mxu0 %v653
    %872 = vmatpush1.bf16.msra.mxu0 %v652
    %873 = vmatprep.subr.bf16.mxu0 %v645
    %874 = vmatpush1.bf16.msra.mxu0 %v644
    %875 = vmatprep.subr.bf16.mxu0 %v637
    %876 = vmatpush1.bf16.msra.mxu0 %v636
    %877 = vmatprep.subr.bf16.mxu0 %v629
    %878 = vmatpush1.bf16.msra.mxu0 %v628
    %879 = vmatprep.subr.bf16.mxu0 %v621
    %880 = vmatpush1.bf16.msra.mxu0 %v620
    %881 = vmatprep.subr.bf16.mxu0 0
    %882 = vmatpush2.bf16.msra.mxu0 0
    %883 = vmatprep.subr.bf16.mxu0 0
    %884 = vmatpush2.bf16.msra.mxu0 0
    %885 = vmatprep.subr.bf16.mxu0 0
    %886 = vmatpush2.bf16.msra.mxu0 0
    %887 = vmatprep.subr.bf16.mxu0 0
    %888 = vmatpush2.bf16.msra.mxu0 0
    %889 = vmatprep.subr.bf16.mxu0 0
    %890 = vmatpush2.bf16.msra.mxu0 0
    %891 = vmatprep.subr.bf16.mxu0 0
    %892 = vmatpush2.bf16.msra.mxu0 0
    %893 = vmatprep.subr.bf16.mxu0 0
    %894 = vmatpush2.bf16.msra.mxu0 0
    %895 = vmatprep.subr.bf16.mxu0 0
    %896 = vmatpush2.bf16.msra.mxu0 0
    %897 = vmatprep.mubr.bf16.mxu0 0
    %898 = vmatmul.mubr.bf16.gmra.mxu0 %v315
    %v899 = vpop.f32.mrf.mxu0
    %v900 = vadd.f32 %v409, %v899
    %v901 = vpop.f32.mrf.mxu0
    %v902 = vadd.f32 %v413, %v901
    %v903 = vpop.f32.mrf.mxu0
    %v904 = vpop.f32.mrf.mxu0
    %905 = vdwg.mxu0
    %v906 = vmax.f32 %v777, 0.0
    %v907 = vmax.f32 %v779, 0.0
    %v908 = vmax.f32 %v818, 0.0
    %v909 = vmax.f32 %v820, 0.0
    %v910 = vmax.f32 %v859, 0.0
    %v911 = vmax.f32 %v861, 0.0
    %v912 = vmax.f32 %v900, 0.0
    %v913 = vmax.f32 %v902, 0.0
    %v914 = vpack.c.bf16 %v906, %v906
    %v915 = vpack.c.bf16 %v907, %v907
    %v916 = vpack.c.bf16 %v908, %v908
    %v917 = vpack.c.bf16 %v909, %v909
    %v918 = vpack.c.bf16 %v910, %v910
    %v919 = vpack.c.bf16 %v911, %v911
    %v920 = vpack.c.bf16 %v912, %v912
    %v921 = vpack.c.bf16 %v913, %v913
    %v922 = vld [vmem:[#allocation13] sm:$0xff]
    %v923 = vld [vmem:[#allocation13 + $0x8] sm:$0xff]
    %v924 = vld [vmem:[#allocation13 + $0x10] sm:$0xff]
    %v925 = vld [vmem:[#allocation13 + $0x18] sm:$0xff]
    %v926 = vld [vmem:[#allocation13 + $0x20] sm:$0xff]
    %v927 = vld [vmem:[#allocation13 + $0x28] sm:$0xff]
    %v928 = vld [vmem:[#allocation13 + $0x30] sm:$0xff]
    %v929 = vld [vmem:[#allocation13 + $0x38] sm:$0xff]
    %v930 = vld [vmem:[#allocation13 + $0x40] sm:$0xff]
    %v931 = vld [vmem:[#allocation13 + $0x48] sm:$0xff]
    %v932 = vld [vmem:[#allocation13 + $0x50] sm:$0xff]
    %v933 = vld [vmem:[#allocation13 + $0x58] sm:$0xff]
    %v934 = vld [vmem:[#allocation13 + $0x60] sm:$0xff]
    %v935 = vld [vmem:[#allocation13 + $0x68] sm:$0xff]
    %v936 = vld [vmem:[#allocation13 + $0x70] sm:$0xff]
    %v937 = vld [vmem:[#allocation13 + $0x78] sm:$0xff]
    %v938 = vld [vmem:[#allocation13 + $0x80] sm:$0xff]
    %v939 = vld [vmem:[#allocation13 + $0x88] sm:$0xff]
    %v940 = vld [vmem:[#allocation13 + $0x90] sm:$0xff]
    %v941 = vld [vmem:[#allocation13 + $0x98] sm:$0xff]
    %v942 = vld [vmem:[#allocation13 + $0xa0] sm:$0xff]
    %v943 = vld [vmem:[#allocation13 + $0xa8] sm:$0xff]
    %v944 = vld [vmem:[#allocation13 + $0xb0] sm:$0xff]
    %v945 = vld [vmem:[#allocation13 + $0xb8] sm:$0xff]
    %v946 = vld [vmem:[#allocation13 + $0xc0] sm:$0xff]
    %v947 = vld [vmem:[#allocation13 + $0xc8] sm:$0xff]
    %v948 = vld [vmem:[#allocation13 + $0xd0] sm:$0xff]
    %v949 = vld [vmem:[#allocation13 + $0xd8] sm:$0xff]
    %v950 = vld [vmem:[#allocation13 + $0xe0] sm:$0xff]
    %v951 = vld [vmem:[#allocation13 + $0xe8] sm:$0xff]
    %v952 = vld [vmem:[#allocation13 + $0xf0] sm:$0xff]
    %v953 = vld [vmem:[#allocation13 + $0xf8] sm:$0xff]
    %v954 = vld [vmem:[#allocation13 + $0x100] sm:$0xff]
    %v955 = vld [vmem:[#allocation13 + $0x108] sm:$0xff]
    %v956 = vld [vmem:[#allocation13 + $0x110] sm:$0xff]
    %v957 = vld [vmem:[#allocation13 + $0x118] sm:$0xff]
    %v958 = vld [vmem:[#allocation13 + $0x120] sm:$0xff]
    %v959 = vld [vmem:[#allocation13 + $0x128] sm:$0xff]
    %v960 = vld [vmem:[#allocation13 + $0x130] sm:$0xff]
    %v961 = vld [vmem:[#allocation13 + $0x138] sm:$0xff]
    %v962 = vld [vmem:[#allocation13 + $0x140] sm:$0xff]
    %v963 = vld [vmem:[#allocation13 + $0x148] sm:$0xff]
    %v964 = vld [vmem:[#allocation13 + $0x150] sm:$0xff]
    %v965 = vld [vmem:[#allocation13 + $0x158] sm:$0xff]
    %v966 = vld [vmem:[#allocation13 + $0x160] sm:$0xff]
    %v967 = vld [vmem:[#allocation13 + $0x168] sm:$0xff]
    %v968 = vld [vmem:[#allocation13 + $0x170] sm:$0xff]
    %v969 = vld [vmem:[#allocation13 + $0x178] sm:$0xff]
    %v970 = vld [vmem:[#allocation13 + $0x180] sm:$0xff]
    %v971 = vld [vmem:[#allocation13 + $0x188] sm:$0xff]
    %v972 = vld [vmem:[#allocation13 + $0x190] sm:$0xff]
    %v973 = vld [vmem:[#allocation13 + $0x198] sm:$0xff]
    %v974 = vld [vmem:[#allocation13 + $0x1a0] sm:$0xff]
    %v975 = vld [vmem:[#allocation13 + $0x1a8] sm:$0xff]
    %v976 = vld [vmem:[#allocation13 + $0x1b0] sm:$0xff]
    %v977 = vld [vmem:[#allocation13 + $0x1b8] sm:$0xff]
    %v978 = vld [vmem:[#allocation13 + $0x1c0] sm:$0xff]
    %v979 = vld [vmem:[#allocation13 + $0x1c8] sm:$0xff]
    %v980 = vld [vmem:[#allocation13 + $0x1d0] sm:$0xff]
    %v981 = vld [vmem:[#allocation13 + $0x1d8] sm:$0xff]
    %v982 = vld [vmem:[#allocation13 + $0x1e0] sm:$0xff]
    %v983 = vld [vmem:[#allocation13 + $0x1e8] sm:$0xff]
    %v984 = vld [vmem:[#allocation13 + $0x1f0] sm:$0xff]
    %v985 = vld [vmem:[#allocation13 + $0x1f8] sm:$0xff]
    %v986 = vld [vmem:[#allocation13 + $0x200] sm:$0xff]
    %v987 = vld [vmem:[#allocation13 + $0x208] sm:$0xff]
    %v988 = vld [vmem:[#allocation13 + $0x210] sm:$0xff]
    %v989 = vld [vmem:[#allocation13 + $0x218] sm:$0xff]
    %v990 = vld [vmem:[#allocation13 + $0x220] sm:$0xff]
    %v991 = vld [vmem:[#allocation13 + $0x228] sm:$0xff]
    %v992 = vld [vmem:[#allocation13 + $0x230] sm:$0xff]
    %v993 = vld [vmem:[#allocation13 + $0x238] sm:$0xff]
    %v994 = vld [vmem:[#allocation13 + $0x240] sm:$0xff]
    %v995 = vld [vmem:[#allocation13 + $0x248] sm:$0xff]
    %v996 = vld [vmem:[#allocation13 + $0x250] sm:$0xff]
    %v997 = vld [vmem:[#allocation13 + $0x258] sm:$0xff]
    %v998 = vld [vmem:[#allocation13 + $0x260] sm:$0xff]
    %v999 = vld [vmem:[#allocation13 + $0x268] sm:$0xff]
    %v1000 = vld [vmem:[#allocation13 + $0x270] sm:$0xff]
    %v1001 = vld [vmem:[#allocation13 + $0x278] sm:$0xff]
    %v1002 = vld [vmem:[#allocation13 + $0x280] sm:$0xff]
    %v1003 = vld [vmem:[#allocation13 + $0x288] sm:$0xff]
    %v1004 = vld [vmem:[#allocation13 + $0x290] sm:$0xff]
    %v1005 = vld [vmem:[#allocation13 + $0x298] sm:$0xff]
    %v1006 = vld [vmem:[#allocation13 + $0x2a0] sm:$0xff]
    %v1007 = vld [vmem:[#allocation13 + $0x2a8] sm:$0xff]
    %v1008 = vld [vmem:[#allocation13 + $0x2b0] sm:$0xff]
    %v1009 = vld [vmem:[#allocation13 + $0x2b8] sm:$0xff]
    %v1010 = vld [vmem:[#allocation13 + $0x2c0] sm:$0xff]
    %v1011 = vld [vmem:[#allocation13 + $0x2c8] sm:$0xff]
    %v1012 = vld [vmem:[#allocation13 + $0x2d0] sm:$0xff]
    %v1013 = vld [vmem:[#allocation13 + $0x2d8] sm:$0xff]
    %v1014 = vld [vmem:[#allocation13 + $0x2e0] sm:$0xff]
    %v1015 = vld [vmem:[#allocation13 + $0x2e8] sm:$0xff]
    %v1016 = vld [vmem:[#allocation13 + $0x2f0] sm:$0xff]
    %v1017 = vld [vmem:[#allocation13 + $0x2f8] sm:$0xff]
    %v1018 = vld [vmem:[#allocation13 + $0x300] sm:$0xff]
    %v1019 = vld [vmem:[#allocation13 + $0x308] sm:$0xff]
    %v1020 = vld [vmem:[#allocation13 + $0x310] sm:$0xff]
    %v1021 = vld [vmem:[#allocation13 + $0x318] sm:$0xff]
    %v1022 = vld [vmem:[#allocation13 + $0x320] sm:$0xff]
    %v1023 = vld [vmem:[#allocation13 + $0x328] sm:$0xff]
    %v1024 = vld [vmem:[#allocation13 + $0x330] sm:$0xff]
    %v1025 = vld [vmem:[#allocation13 + $0x338] sm:$0xff]
    %v1026 = vld [vmem:[#allocation13 + $0x340] sm:$0xff]
    %v1027 = vld [vmem:[#allocation13 + $0x348] sm:$0xff]
    %v1028 = vld [vmem:[#allocation13 + $0x350] sm:$0xff]
    %v1029 = vld [vmem:[#allocation13 + $0x358] sm:$0xff]
    %v1030 = vld [vmem:[#allocation13 + $0x360] sm:$0xff]
    %v1031 = vld [vmem:[#allocation13 + $0x368] sm:$0xff]
    %v1032 = vld [vmem:[#allocation13 + $0x370] sm:$0xff]
    %v1033 = vld [vmem:[#allocation13 + $0x378] sm:$0xff]
    %v1034 = vld [vmem:[#allocation13 + $0x380] sm:$0xff]
    %v1035 = vld [vmem:[#allocation13 + $0x388] sm:$0xff]
    %v1036 = vld [vmem:[#allocation13 + $0x390] sm:$0xff]
    %v1037 = vld [vmem:[#allocation13 + $0x398] sm:$0xff]
    %v1038 = vld [vmem:[#allocation13 + $0x3a0] sm:$0xff]
    %v1039 = vld [vmem:[#allocation13 + $0x3a8] sm:$0xff]
    %v1040 = vld [vmem:[#allocation13 + $0x3b0] sm:$0xff]
    %v1041 = vld [vmem:[#allocation13 + $0x3b8] sm:$0xff]
    %v1042 = vld [vmem:[#allocation13 + $0x3c0] sm:$0xff]
    %v1043 = vld [vmem:[#allocation13 + $0x3c8] sm:$0xff]
    %v1044 = vld [vmem:[#allocation13 + $0x3d0] sm:$0xff]
    %v1045 = vld [vmem:[#allocation13 + $0x3d8] sm:$0xff]
    %v1046 = vld [vmem:[#allocation13 + $0x3e0] sm:$0xff]
    %v1047 = vld [vmem:[#allocation13 + $0x3e8] sm:$0xff]
    %v1048 = vld [vmem:[#allocation13 + $0x3f0] sm:$0xff]
    %v1049 = vld [vmem:[#allocation13 + $0x3f8] sm:$0xff]
    %v1050 = vld [vmem:[#allocation13 + $0x400] sm:$0xff]
    %v1051 = vld [vmem:[#allocation13 + $0x408] sm:$0xff]
    %v1052 = vld [vmem:[#allocation13 + $0x410] sm:$0xff]
    %v1053 = vld [vmem:[#allocation13 + $0x418] sm:$0xff]
    %v1054 = vld [vmem:[#allocation13 + $0x420] sm:$0xff]
    %v1055 = vld [vmem:[#allocation13 + $0x428] sm:$0xff]
    %v1056 = vld [vmem:[#allocation13 + $0x430] sm:$0xff]
    %v1057 = vld [vmem:[#allocation13 + $0x438] sm:$0xff]
    %v1058 = vld [vmem:[#allocation13 + $0x440] sm:$0xff]
    %v1059 = vld [vmem:[#allocation13 + $0x448] sm:$0xff]
    %v1060 = vld [vmem:[#allocation13 + $0x450] sm:$0xff]
    %v1061 = vld [vmem:[#allocation13 + $0x458] sm:$0xff]
    %v1062 = vld [vmem:[#allocation13 + $0x460] sm:$0xff]
    %v1063 = vld [vmem:[#allocation13 + $0x468] sm:$0xff]
    %v1064 = vld [vmem:[#allocation13 + $0x470] sm:$0xff]
    %v1065 = vld [vmem:[#allocation13 + $0x478] sm:$0xff]
    %v1066 = vld [vmem:[#allocation13 + $0x480] sm:$0xff]
    %v1067 = vld [vmem:[#allocation13 + $0x488] sm:$0xff]
    %v1068 = vld [vmem:[#allocation13 + $0x490] sm:$0xff]
    %v1069 = vld [vmem:[#allocation13 + $0x498] sm:$0xff]
    %v1070 = vld [vmem:[#allocation13 + $0x4a0] sm:$0xff]
    %v1071 = vld [vmem:[#allocation13 + $0x4a8] sm:$0xff]
    %v1072 = vld [vmem:[#allocation13 + $0x4b0] sm:$0xff]
    %v1073 = vld [vmem:[#allocation13 + $0x4b8] sm:$0xff]
    %v1074 = vld [vmem:[#allocation13 + $0x4c0] sm:$0xff]
    %v1075 = vld [vmem:[#allocation13 + $0x4c8] sm:$0xff]
    %v1076 = vld [vmem:[#allocation13 + $0x4d0] sm:$0xff]
    %v1077 = vld [vmem:[#allocation13 + $0x4d8] sm:$0xff]
    %v1078 = vld [vmem:[#allocation13 + $0x4e0] sm:$0xff]
    %v1079 = vld [vmem:[#allocation13 + $0x4e8] sm:$0xff]
    %v1080 = vld [vmem:[#allocation13 + $0x4f0] sm:$0xff]
    %v1081 = vld [vmem:[#allocation13 + $0x4f8] sm:$0xff]
    %v1082 = vld [vmem:[#allocation13 + $0x500] sm:$0xff]
    %v1083 = vld [vmem:[#allocation13 + $0x508] sm:$0xff]
    %v1084 = vld [vmem:[#allocation13 + $0x510] sm:$0xff]
    %v1085 = vld [vmem:[#allocation13 + $0x518] sm:$0xff]
    %v1086 = vld [vmem:[#allocation13 + $0x520] sm:$0xff]
    %v1087 = vld [vmem:[#allocation13 + $0x528] sm:$0xff]
    %v1088 = vld [vmem:[#allocation13 + $0x530] sm:$0xff]
    %v1089 = vld [vmem:[#allocation13 + $0x538] sm:$0xff]
    %v1090 = vld [vmem:[#allocation13 + $0x540] sm:$0xff]
    %v1091 = vld [vmem:[#allocation13 + $0x548] sm:$0xff]
    %v1092 = vld [vmem:[#allocation13 + $0x550] sm:$0xff]
    %v1093 = vld [vmem:[#allocation13 + $0x558] sm:$0xff]
    %v1094 = vld [vmem:[#allocation13 + $0x560] sm:$0xff]
    %v1095 = vld [vmem:[#allocation13 + $0x568] sm:$0xff]
    %v1096 = vld [vmem:[#allocation13 + $0x570] sm:$0xff]
    %v1097 = vld [vmem:[#allocation13 + $0x578] sm:$0xff]
    %v1098 = vld [vmem:[#allocation13 + $0x580] sm:$0xff]
    %v1099 = vld [vmem:[#allocation13 + $0x588] sm:$0xff]
    %v1100 = vld [vmem:[#allocation13 + $0x590] sm:$0xff]
    %v1101 = vld [vmem:[#allocation13 + $0x598] sm:$0xff]
    %v1102 = vld [vmem:[#allocation13 + $0x5a0] sm:$0xff]
    %v1103 = vld [vmem:[#allocation13 + $0x5a8] sm:$0xff]
    %v1104 = vld [vmem:[#allocation13 + $0x5b0] sm:$0xff]
    %v1105 = vld [vmem:[#allocation13 + $0x5b8] sm:$0xff]
    %v1106 = vld [vmem:[#allocation13 + $0x5c0] sm:$0xff]
    %v1107 = vld [vmem:[#allocation13 + $0x5c8] sm:$0xff]
    %v1108 = vld [vmem:[#allocation13 + $0x5d0] sm:$0xff]
    %v1109 = vld [vmem:[#allocation13 + $0x5d8] sm:$0xff]
    %v1110 = vld [vmem:[#allocation13 + $0x5e0] sm:$0xff]
    %v1111 = vld [vmem:[#allocation13 + $0x5e8] sm:$0xff]
    %v1112 = vld [vmem:[#allocation13 + $0x5f0] sm:$0xff]
    %v1113 = vld [vmem:[#allocation13 + $0x5f8] sm:$0xff]
    %v1114 = vld [vmem:[#allocation13 + $0x600] sm:$0xff]
    %v1115 = vld [vmem:[#allocation13 + $0x608] sm:$0xff]
    %v1116 = vld [vmem:[#allocation13 + $0x610] sm:$0xff]
    %v1117 = vld [vmem:[#allocation13 + $0x618] sm:$0xff]
    %v1118 = vld [vmem:[#allocation13 + $0x620] sm:$0xff]
    %v1119 = vld [vmem:[#allocation13 + $0x628] sm:$0xff]
    %v1120 = vld [vmem:[#allocation13 + $0x630] sm:$0xff]
    %v1121 = vld [vmem:[#allocation13 + $0x638] sm:$0xff]
    %v1122 = vld [vmem:[#allocation13 + $0x640] sm:$0xff]
    %v1123 = vld [vmem:[#allocation13 + $0x648] sm:$0xff]
    %v1124 = vld [vmem:[#allocation13 + $0x650] sm:$0xff]
    %v1125 = vld [vmem:[#allocation13 + $0x658] sm:$0xff]
    %v1126 = vld [vmem:[#allocation13 + $0x660] sm:$0xff]
    %v1127 = vld [vmem:[#allocation13 + $0x668] sm:$0xff]
    %v1128 = vld [vmem:[#allocation13 + $0x670] sm:$0xff]
    %v1129 = vld [vmem:[#allocation13 + $0x678] sm:$0xff]
    %v1130 = vld [vmem:[#allocation13 + $0x680] sm:$0xff]
    %v1131 = vld [vmem:[#allocation13 + $0x688] sm:$0xff]
    %v1132 = vld [vmem:[#allocation13 + $0x690] sm:$0xff]
    %v1133 = vld [vmem:[#allocation13 + $0x698] sm:$0xff]
    %v1134 = vld [vmem:[#allocation13 + $0x6a0] sm:$0xff]
    %v1135 = vld [vmem:[#allocation13 + $0x6a8] sm:$0xff]
    %v1136 = vld [vmem:[#allocation13 + $0x6b0] sm:$0xff]
    %v1137 = vld [vmem:[#allocation13 + $0x6b8] sm:$0xff]
    %v1138 = vld [vmem:[#allocation13 + $0x6c0] sm:$0xff]
    %v1139 = vld [vmem:[#allocation13 + $0x6c8] sm:$0xff]
    %v1140 = vld [vmem:[#allocation13 + $0x6d0] sm:$0xff]
    %v1141 = vld [vmem:[#allocation13 + $0x6d8] sm:$0xff]
    %v1142 = vld [vmem:[#allocation13 + $0x6e0] sm:$0xff]
    %v1143 = vld [vmem:[#allocation13 + $0x6e8] sm:$0xff]
    %v1144 = vld [vmem:[#allocation13 + $0x6f0] sm:$0xff]
    %v1145 = vld [vmem:[#allocation13 + $0x6f8] sm:$0xff]
    %v1146 = vld [vmem:[#allocation13 + $0x700] sm:$0xff]
    %v1147 = vld [vmem:[#allocation13 + $0x708] sm:$0xff]
    %v1148 = vld [vmem:[#allocation13 + $0x710] sm:$0xff]
    %v1149 = vld [vmem:[#allocation13 + $0x718] sm:$0xff]
    %v1150 = vld [vmem:[#allocation13 + $0x720] sm:$0xff]
    %v1151 = vld [vmem:[#allocation13 + $0x728] sm:$0xff]
    %v1152 = vld [vmem:[#allocation13 + $0x730] sm:$0xff]
    %v1153 = vld [vmem:[#allocation13 + $0x738] sm:$0xff]
    %v1154 = vld [vmem:[#allocation13 + $0x740] sm:$0xff]
    %v1155 = vld [vmem:[#allocation13 + $0x748] sm:$0xff]
    %v1156 = vld [vmem:[#allocation13 + $0x750] sm:$0xff]
    %v1157 = vld [vmem:[#allocation13 + $0x758] sm:$0xff]
    %v1158 = vld [vmem:[#allocation13 + $0x760] sm:$0xff]
    %v1159 = vld [vmem:[#allocation13 + $0x768] sm:$0xff]
    %v1160 = vld [vmem:[#allocation13 + $0x770] sm:$0xff]
    %v1161 = vld [vmem:[#allocation13 + $0x778] sm:$0xff]
    %v1162 = vld [vmem:[#allocation13 + $0x780] sm:$0xff]
    %v1163 = vld [vmem:[#allocation13 + $0x788] sm:$0xff]
    %v1164 = vld [vmem:[#allocation13 + $0x790] sm:$0xff]
    %v1165 = vld [vmem:[#allocation13 + $0x798] sm:$0xff]
    %v1166 = vld [vmem:[#allocation13 + $0x7a0] sm:$0xff]
    %v1167 = vld [vmem:[#allocation13 + $0x7a8] sm:$0xff]
    %v1168 = vld [vmem:[#allocation13 + $0x7b0] sm:$0xff]
    %v1169 = vld [vmem:[#allocation13 + $0x7b8] sm:$0xff]
    %v1170 = vld [vmem:[#allocation13 + $0x7c0] sm:$0xff]
    %v1171 = vld [vmem:[#allocation13 + $0x7c8] sm:$0xff]
    %v1172 = vld [vmem:[#allocation13 + $0x7d0] sm:$0xff]
    %v1173 = vld [vmem:[#allocation13 + $0x7d8] sm:$0xff]
    %v1174 = vld [vmem:[#allocation13 + $0x7e0] sm:$0xff]
    %v1175 = vld [vmem:[#allocation13 + $0x7e8] sm:$0xff]
    %v1176 = vld [vmem:[#allocation13 + $0x7f0] sm:$0xff]
    %v1177 = vld [vmem:[#allocation13 + $0x7f8] sm:$0xff]
    %v1178 = vld [vmem:[#allocation13 + $0x800] sm:$0xff]
    %v1179 = vld [vmem:[#allocation13 + $0x808] sm:$0xff]
    %v1180 = vld [vmem:[#allocation13 + $0x810] sm:$0xff]
    %v1181 = vld [vmem:[#allocation13 + $0x818] sm:$0xff]
    %v1182 = vld [vmem:[#allocation13 + $0x820] sm:$0xff]
    %v1183 = vld [vmem:[#allocation13 + $0x828] sm:$0xff]
    %v1184 = vld [vmem:[#allocation13 + $0x830] sm:$0xff]
    %v1185 = vld [vmem:[#allocation13 + $0x838] sm:$0xff]
    %v1186 = vld [vmem:[#allocation13 + $0x840] sm:$0xff]
    %v1187 = vld [vmem:[#allocation13 + $0x848] sm:$0xff]
    %v1188 = vld [vmem:[#allocation13 + $0x850] sm:$0xff]
    %v1189 = vld [vmem:[#allocation13 + $0x858] sm:$0xff]
    %v1190 = vld [vmem:[#allocation13 + $0x860] sm:$0xff]
    %v1191 = vld [vmem:[#allocation13 + $0x868] sm:$0xff]
    %v1192 = vld [vmem:[#allocation13 + $0x870] sm:$0xff]
    %v1193 = vld [vmem:[#allocation13 + $0x878] sm:$0xff]
    %v1194 = vld [vmem:[#allocation13 + $0x880] sm:$0xff]
    %v1195 = vld [vmem:[#allocation13 + $0x888] sm:$0xff]
    %v1196 = vld [vmem:[#allocation13 + $0x890] sm:$0xff]
    %v1197 = vld [vmem:[#allocation13 + $0x898] sm:$0xff]
    %v1198 = vld [vmem:[#allocation13 + $0x8a0] sm:$0xff]
    %v1199 = vld [vmem:[#allocation13 + $0x8a8] sm:$0xff]
    %v1200 = vld [vmem:[#allocation13 + $0x8b0] sm:$0xff]
    %v1201 = vld [vmem:[#allocation13 + $0x8b8] sm:$0xff]
    %v1202 = vld [vmem:[#allocation13 + $0x8c0] sm:$0xff]
    %v1203 = vld [vmem:[#allocation13 + $0x8c8] sm:$0xff]
    %v1204 = vld [vmem:[#allocation13 + $0x8d0] sm:$0xff]
    %v1205 = vld [vmem:[#allocation13 + $0x8d8] sm:$0xff]
    %v1206 = vld [vmem:[#allocation13 + $0x8e0] sm:$0xff]
    %v1207 = vld [vmem:[#allocation13 + $0x8e8] sm:$0xff]
    %v1208 = vld [vmem:[#allocation13 + $0x8f0] sm:$0xff]
    %v1209 = vld [vmem:[#allocation13 + $0x8f8] sm:$0xff]
    %v1210 = vld [vmem:[#allocation13 + $0x900] sm:$0xff]
    %v1211 = vld [vmem:[#allocation13 + $0x908] sm:$0xff]
    %v1212 = vld [vmem:[#allocation13 + $0x910] sm:$0xff]
    %v1213 = vld [vmem:[#allocation13 + $0x918] sm:$0xff]
    %v1214 = vld [vmem:[#allocation13 + $0x920] sm:$0xff]
    %v1215 = vld [vmem:[#allocation13 + $0x928] sm:$0xff]
    %v1216 = vld [vmem:[#allocation13 + $0x930] sm:$0xff]
    %v1217 = vld [vmem:[#allocation13 + $0x938] sm:$0xff]
    %v1218 = vld [vmem:[#allocation13 + $0x940] sm:$0xff]
    %v1219 = vld [vmem:[#allocation13 + $0x948] sm:$0xff]
    %v1220 = vld [vmem:[#allocation13 + $0x950] sm:$0xff]
    %v1221 = vld [vmem:[#allocation13 + $0x958] sm:$0xff]
    %v1222 = vld [vmem:[#allocation13 + $0x960] sm:$0xff]
    %v1223 = vld [vmem:[#allocation13 + $0x968] sm:$0xff]
    %v1224 = vld [vmem:[#allocation13 + $0x970] sm:$0xff]
    %v1225 = vld [vmem:[#allocation13 + $0x978] sm:$0xff]
    %v1226 = vld [vmem:[#allocation13 + $0x980] sm:$0xff]
    %v1227 = vld [vmem:[#allocation13 + $0x988] sm:$0xff]
    %v1228 = vld [vmem:[#allocation13 + $0x990] sm:$0xff]
    %v1229 = vld [vmem:[#allocation13 + $0x998] sm:$0xff]
    %v1230 = vld [vmem:[#allocation13 + $0x9a0] sm:$0xff]
    %v1231 = vld [vmem:[#allocation13 + $0x9a8] sm:$0xff]
    %v1232 = vld [vmem:[#allocation13 + $0x9b0] sm:$0xff]
    %v1233 = vld [vmem:[#allocation13 + $0x9b8] sm:$0xff]
    %v1234 = vld [vmem:[#allocation13 + $0x9c0] sm:$0xff]
    %v1235 = vld [vmem:[#allocation13 + $0x9c8] sm:$0xff]
    %v1236 = vld [vmem:[#allocation13 + $0x9d0] sm:$0xff]
    %v1237 = vld [vmem:[#allocation13 + $0x9d8] sm:$0xff]
    %v1238 = vld [vmem:[#allocation13 + $0x9e0] sm:$0xff]
    %v1239 = vld [vmem:[#allocation13 + $0x9e8] sm:$0xff]
    %v1240 = vld [vmem:[#allocation13 + $0x9f0] sm:$0xff]
    %v1241 = vld [vmem:[#allocation13 + $0x9f8] sm:$0xff]
    %v1242 = vld [vmem:[#allocation13 + $0xa00] sm:$0xff]
    %v1243 = vld [vmem:[#allocation13 + $0xa08] sm:$0xff]
    %v1244 = vld [vmem:[#allocation13 + $0xa10] sm:$0xff]
    %v1245 = vld [vmem:[#allocation13 + $0xa18] sm:$0xff]
    %v1246 = vld [vmem:[#allocation13 + $0xa20] sm:$0xff]
    %v1247 = vld [vmem:[#allocation13 + $0xa28] sm:$0xff]
    %v1248 = vld [vmem:[#allocation13 + $0xa30] sm:$0xff]
    %v1249 = vld [vmem:[#allocation13 + $0xa38] sm:$0xff]
    %v1250 = vld [vmem:[#allocation13 + $0xa40] sm:$0xff]
    %v1251 = vld [vmem:[#allocation13 + $0xa48] sm:$0xff]
    %v1252 = vld [vmem:[#allocation13 + $0xa50] sm:$0xff]
    %v1253 = vld [vmem:[#allocation13 + $0xa58] sm:$0xff]
    %v1254 = vld [vmem:[#allocation13 + $0xa60] sm:$0xff]
    %v1255 = vld [vmem:[#allocation13 + $0xa68] sm:$0xff]
    %v1256 = vld [vmem:[#allocation13 + $0xa70] sm:$0xff]
    %v1257 = vld [vmem:[#allocation13 + $0xa78] sm:$0xff]
    %v1258 = vld [vmem:[#allocation13 + $0xa80] sm:$0xff]
    %v1259 = vld [vmem:[#allocation13 + $0xa88] sm:$0xff]
    %v1260 = vld [vmem:[#allocation13 + $0xa90] sm:$0xff]
    %v1261 = vld [vmem:[#allocation13 + $0xa98] sm:$0xff]
    %v1262 = vld [vmem:[#allocation13 + $0xaa0] sm:$0xff]
    %v1263 = vld [vmem:[#allocation13 + $0xaa8] sm:$0xff]
    %v1264 = vld [vmem:[#allocation13 + $0xab0] sm:$0xff]
    %v1265 = vld [vmem:[#allocation13 + $0xab8] sm:$0xff]
    %v1266 = vld [vmem:[#allocation13 + $0xac0] sm:$0xff]
    %v1267 = vld [vmem:[#allocation13 + $0xac8] sm:$0xff]
    %v1268 = vld [vmem:[#allocation13 + $0xad0] sm:$0xff]
    %v1269 = vld [vmem:[#allocation13 + $0xad8] sm:$0xff]
    %v1270 = vld [vmem:[#allocation13 + $0xae0] sm:$0xff]
    %v1271 = vld [vmem:[#allocation13 + $0xae8] sm:$0xff]
    %v1272 = vld [vmem:[#allocation13 + $0xaf0] sm:$0xff]
    %v1273 = vld [vmem:[#allocation13 + $0xaf8] sm:$0xff]
    %v1274 = vld [vmem:[#allocation13 + $0xb00] sm:$0xff]
    %v1275 = vld [vmem:[#allocation13 + $0xb08] sm:$0xff]
    %v1276 = vld [vmem:[#allocation13 + $0xb10] sm:$0xff]
    %v1277 = vld [vmem:[#allocation13 + $0xb18] sm:$0xff]
    %v1278 = vld [vmem:[#allocation13 + $0xb20] sm:$0xff]
    %v1279 = vld [vmem:[#allocation13 + $0xb28] sm:$0xff]
    %v1280 = vld [vmem:[#allocation13 + $0xb30] sm:$0xff]
    %v1281 = vld [vmem:[#allocation13 + $0xb38] sm:$0xff]
    %v1282 = vld [vmem:[#allocation13 + $0xb40] sm:$0xff]
    %v1283 = vld [vmem:[#allocation13 + $0xb48] sm:$0xff]
    %v1284 = vld [vmem:[#allocation13 + $0xb50] sm:$0xff]
    %v1285 = vld [vmem:[#allocation13 + $0xb58] sm:$0xff]
    %v1286 = vld [vmem:[#allocation13 + $0xb60] sm:$0xff]
    %v1287 = vld [vmem:[#allocation13 + $0xb68] sm:$0xff]
    %v1288 = vld [vmem:[#allocation13 + $0xb70] sm:$0xff]
    %v1289 = vld [vmem:[#allocation13 + $0xb78] sm:$0xff]
    %v1290 = vld [vmem:[#allocation13 + $0xb80] sm:$0xff]
    %v1291 = vld [vmem:[#allocation13 + $0xb88] sm:$0xff]
    %v1292 = vld [vmem:[#allocation13 + $0xb90] sm:$0xff]
    %v1293 = vld [vmem:[#allocation13 + $0xb98] sm:$0xff]
    %v1294 = vld [vmem:[#allocation13 + $0xba0] sm:$0xff]
    %v1295 = vld [vmem:[#allocation13 + $0xba8] sm:$0xff]
    %v1296 = vld [vmem:[#allocation13 + $0xbb0] sm:$0xff]
    %v1297 = vld [vmem:[#allocation13 + $0xbb8] sm:$0xff]
    %v1298 = vld [vmem:[#allocation13 + $0xbc0] sm:$0xff]
    %v1299 = vld [vmem:[#allocation13 + $0xbc8] sm:$0xff]
    %v1300 = vld [vmem:[#allocation13 + $0xbd0] sm:$0xff]
    %v1301 = vld [vmem:[#allocation13 + $0xbd8] sm:$0xff]
    %v1302 = vld [vmem:[#allocation13 + $0xbe0] sm:$0xff]
    %v1303 = vld [vmem:[#allocation13 + $0xbe8] sm:$0xff]
    %v1304 = vld [vmem:[#allocation13 + $0xbf0] sm:$0xff]
    %v1305 = vld [vmem:[#allocation13 + $0xbf8] sm:$0xff]
    %v1306 = vld [vmem:[#allocation13 + $0xc00] sm:$0xff]
    %v1307 = vld [vmem:[#allocation13 + $0xc08] sm:$0xff]
    %v1308 = vld [vmem:[#allocation13 + $0xc10] sm:$0xff]
    %v1309 = vld [vmem:[#allocation13 + $0xc18] sm:$0xff]
    %v1310 = vld [vmem:[#allocation13 + $0xc20] sm:$0xff]
    %v1311 = vld [vmem:[#allocation13 + $0xc28] sm:$0xff]
    %v1312 = vld [vmem:[#allocation13 + $0xc30] sm:$0xff]
    %v1313 = vld [vmem:[#allocation13 + $0xc38] sm:$0xff]
    %v1314 = vld [vmem:[#allocation13 + $0xc40] sm:$0xff]
    %v1315 = vld [vmem:[#allocation13 + $0xc48] sm:$0xff]
    %v1316 = vld [vmem:[#allocation13 + $0xc50] sm:$0xff]
    %v1317 = vld [vmem:[#allocation13 + $0xc58] sm:$0xff]
    %v1318 = vld [vmem:[#allocation13 + $0xc60] sm:$0xff]
    %v1319 = vld [vmem:[#allocation13 + $0xc68] sm:$0xff]
    %v1320 = vld [vmem:[#allocation13 + $0xc70] sm:$0xff]
    %v1321 = vld [vmem:[#allocation13 + $0xc78] sm:$0xff]
    %v1322 = vld [vmem:[#allocation13 + $0xc80] sm:$0xff]
    %v1323 = vld [vmem:[#allocation13 + $0xc88] sm:$0xff]
    %v1324 = vld [vmem:[#allocation13 + $0xc90] sm:$0xff]
    %v1325 = vld [vmem:[#allocation13 + $0xc98] sm:$0xff]
    %v1326 = vld [vmem:[#allocation13 + $0xca0] sm:$0xff]
    %v1327 = vld [vmem:[#allocation13 + $0xca8] sm:$0xff]
    %v1328 = vld [vmem:[#allocation13 + $0xcb0] sm:$0xff]
    %v1329 = vld [vmem:[#allocation13 + $0xcb8] sm:$0xff]
    %v1330 = vld [vmem:[#allocation13 + $0xcc0] sm:$0xff]
    %v1331 = vld [vmem:[#allocation13 + $0xcc8] sm:$0xff]
    %v1332 = vld [vmem:[#allocation13 + $0xcd0] sm:$0xff]
    %v1333 = vld [vmem:[#allocation13 + $0xcd8] sm:$0xff]
    %v1334 = vld [vmem:[#allocation13 + $0xce0] sm:$0xff]
    %v1335 = vld [vmem:[#allocation13 + $0xce8] sm:$0xff]
    %v1336 = vld [vmem:[#allocation13 + $0xcf0] sm:$0xff]
    %v1337 = vld [vmem:[#allocation13 + $0xcf8] sm:$0xff]
    %v1338 = vld [vmem:[#allocation13 + $0xd00] sm:$0xff]
    %v1339 = vld [vmem:[#allocation13 + $0xd08] sm:$0xff]
    %v1340 = vld [vmem:[#allocation13 + $0xd10] sm:$0xff]
    %v1341 = vld [vmem:[#allocation13 + $0xd18] sm:$0xff]
    %v1342 = vld [vmem:[#allocation13 + $0xd20] sm:$0xff]
    %v1343 = vld [vmem:[#allocation13 + $0xd28] sm:$0xff]
    %v1344 = vld [vmem:[#allocation13 + $0xd30] sm:$0xff]
    %v1345 = vld [vmem:[#allocation13 + $0xd38] sm:$0xff]
    %v1346 = vld [vmem:[#allocation13 + $0xd40] sm:$0xff]
    %v1347 = vld [vmem:[#allocation13 + $0xd48] sm:$0xff]
    %v1348 = vld [vmem:[#allocation13 + $0xd50] sm:$0xff]
    %v1349 = vld [vmem:[#allocation13 + $0xd58] sm:$0xff]
    %v1350 = vld [vmem:[#allocation13 + $0xd60] sm:$0xff]
    %v1351 = vld [vmem:[#allocation13 + $0xd68] sm:$0xff]
    %v1352 = vld [vmem:[#allocation13 + $0xd70] sm:$0xff]
    %v1353 = vld [vmem:[#allocation13 + $0xd78] sm:$0xff]
    %v1354 = vld [vmem:[#allocation13 + $0xd80] sm:$0xff]
    %v1355 = vld [vmem:[#allocation13 + $0xd88] sm:$0xff]
    %v1356 = vld [vmem:[#allocation13 + $0xd90] sm:$0xff]
    %v1357 = vld [vmem:[#allocation13 + $0xd98] sm:$0xff]
    %v1358 = vld [vmem:[#allocation13 + $0xda0] sm:$0xff]
    %v1359 = vld [vmem:[#allocation13 + $0xda8] sm:$0xff]
    %v1360 = vld [vmem:[#allocation13 + $0xdb0] sm:$0xff]
    %v1361 = vld [vmem:[#allocation13 + $0xdb8] sm:$0xff]
    %v1362 = vld [vmem:[#allocation13 + $0xdc0] sm:$0xff]
    %v1363 = vld [vmem:[#allocation13 + $0xdc8] sm:$0xff]
    %v1364 = vld [vmem:[#allocation13 + $0xdd0] sm:$0xff]
    %v1365 = vld [vmem:[#allocation13 + $0xdd8] sm:$0xff]
    %v1366 = vld [vmem:[#allocation13 + $0xde0] sm:$0xff]
    %v1367 = vld [vmem:[#allocation13 + $0xde8] sm:$0xff]
    %v1368 = vld [vmem:[#allocation13 + $0xdf0] sm:$0xff]
    %v1369 = vld [vmem:[#allocation13 + $0xdf8] sm:$0xff]
    %v1370 = vld [vmem:[#allocation13 + $0xe00] sm:$0xff]
    %v1371 = vld [vmem:[#allocation13 + $0xe08] sm:$0xff]
    %v1372 = vld [vmem:[#allocation13 + $0xe10] sm:$0xff]
    %v1373 = vld [vmem:[#allocation13 + $0xe18] sm:$0xff]
    %v1374 = vld [vmem:[#allocation13 + $0xe20] sm:$0xff]
    %v1375 = vld [vmem:[#allocation13 + $0xe28] sm:$0xff]
    %v1376 = vld [vmem:[#allocation13 + $0xe30] sm:$0xff]
    %v1377 = vld [vmem:[#allocation13 + $0xe38] sm:$0xff]
    %v1378 = vld [vmem:[#allocation13 + $0xe40] sm:$0xff]
    %v1379 = vld [vmem:[#allocation13 + $0xe48] sm:$0xff]
    %v1380 = vld [vmem:[#allocation13 + $0xe50] sm:$0xff]
    %v1381 = vld [vmem:[#allocation13 + $0xe58] sm:$0xff]
    %v1382 = vld [vmem:[#allocation13 + $0xe60] sm:$0xff]
    %v1383 = vld [vmem:[#allocation13 + $0xe68] sm:$0xff]
    %v1384 = vld [vmem:[#allocation13 + $0xe70] sm:$0xff]
    %v1385 = vld [vmem:[#allocation13 + $0xe78] sm:$0xff]
    %v1386 = vld [vmem:[#allocation13 + $0xe80] sm:$0xff]
    %v1387 = vld [vmem:[#allocation13 + $0xe88] sm:$0xff]
    %v1388 = vld [vmem:[#allocation13 + $0xe90] sm:$0xff]
    %v1389 = vld [vmem:[#allocation13 + $0xe98] sm:$0xff]
    %v1390 = vld [vmem:[#allocation13 + $0xea0] sm:$0xff]
    %v1391 = vld [vmem:[#allocation13 + $0xea8] sm:$0xff]
    %v1392 = vld [vmem:[#allocation13 + $0xeb0] sm:$0xff]
    %v1393 = vld [vmem:[#allocation13 + $0xeb8] sm:$0xff]
    %v1394 = vld [vmem:[#allocation13 + $0xec0] sm:$0xff]
    %v1395 = vld [vmem:[#allocation13 + $0xec8] sm:$0xff]
    %v1396 = vld [vmem:[#allocation13 + $0xed0] sm:$0xff]
    %v1397 = vld [vmem:[#allocation13 + $0xed8] sm:$0xff]
    %v1398 = vld [vmem:[#allocation13 + $0xee0] sm:$0xff]
    %v1399 = vld [vmem:[#allocation13 + $0xee8] sm:$0xff]
    %v1400 = vld [vmem:[#allocation13 + $0xef0] sm:$0xff]
    %v1401 = vld [vmem:[#allocation13 + $0xef8] sm:$0xff]
    %v1402 = vld [vmem:[#allocation13 + $0xf00] sm:$0xff]
    %v1403 = vld [vmem:[#allocation13 + $0xf08] sm:$0xff]
    %v1404 = vld [vmem:[#allocation13 + $0xf10] sm:$0xff]
    %v1405 = vld [vmem:[#allocation13 + $0xf18] sm:$0xff]
    %v1406 = vld [vmem:[#allocation13 + $0xf20] sm:$0xff]
    %v1407 = vld [vmem:[#allocation13 + $0xf28] sm:$0xff]
    %v1408 = vld [vmem:[#allocation13 + $0xf30] sm:$0xff]
    %v1409 = vld [vmem:[#allocation13 + $0xf38] sm:$0xff]
    %v1410 = vld [vmem:[#allocation13 + $0xf40] sm:$0xff]
    %v1411 = vld [vmem:[#allocation13 + $0xf48] sm:$0xff]
    %v1412 = vld [vmem:[#allocation13 + $0xf50] sm:$0xff]
    %v1413 = vld [vmem:[#allocation13 + $0xf58] sm:$0xff]
    %v1414 = vld [vmem:[#allocation13 + $0xf60] sm:$0xff]
    %v1415 = vld [vmem:[#allocation13 + $0xf68] sm:$0xff]
    %v1416 = vld [vmem:[#allocation13 + $0xf70] sm:$0xff]
    %v1417 = vld [vmem:[#allocation13 + $0xf78] sm:$0xff]
    %v1418 = vld [vmem:[#allocation13 + $0xf80] sm:$0xff]
    %v1419 = vld [vmem:[#allocation13 + $0xf88] sm:$0xff]
    %v1420 = vld [vmem:[#allocation13 + $0xf90] sm:$0xff]
    %v1421 = vld [vmem:[#allocation13 + $0xf98] sm:$0xff]
    %v1422 = vld [vmem:[#allocation13 + $0xfa0] sm:$0xff]
    %v1423 = vld [vmem:[#allocation13 + $0xfa8] sm:$0xff]
    %v1424 = vld [vmem:[#allocation13 + $0xfb0] sm:$0xff]
    %v1425 = vld [vmem:[#allocation13 + $0xfb8] sm:$0xff]
    %v1426 = vld [vmem:[#allocation13 + $0xfc0] sm:$0xff]
    %v1427 = vld [vmem:[#allocation13 + $0xfc8] sm:$0xff]
    %v1428 = vld [vmem:[#allocation13 + $0xfd0] sm:$0xff]
    %v1429 = vld [vmem:[#allocation13 + $0xfd8] sm:$0xff]
    %v1430 = vld [vmem:[#allocation13 + $0xfe0] sm:$0xff]
    %v1431 = vld [vmem:[#allocation13 + $0xfe8] sm:$0xff]
    %v1432 = vld [vmem:[#allocation13 + $0xff0] sm:$0xff]
    %v1433 = vld [vmem:[#allocation13 + $0xff8] sm:$0xff]
    %v1434 = vld [vmem:[#allocation14] sm:$0xff]
    %v1436 = vlaneseq
    %v1437 = vshrl.u32 %v1436, 7
    %v1438 = vsub.s32 0, %v1437
    %v1439 = vrot.slane %v1434, %v1438
    %v1440 = vlaneseq
    %v1441 = vshrl.u32 %v1440, 7
    %v1442 = vsub.s32 1, %v1441
    %v1443 = vrot.slane %v1434, %v1442
    %v1444 = vlaneseq
    %v1445 = vshrl.u32 %v1444, 7
    %v1446 = vsub.s32 2, %v1445
    %v1447 = vrot.slane %v1434, %v1446
    %v1448 = vlaneseq
    %v1449 = vshrl.u32 %v1448, 7
    %v1450 = vsub.s32 3, %v1449
    %v1451 = vrot.slane %v1434, %v1450
    %v1452 = vlaneseq
    %v1453 = vshrl.u32 %v1452, 7
    %v1454 = vsub.s32 4, %v1453
    %v1455 = vrot.slane %v1434, %v1454
    %v1456 = vlaneseq
    %v1457 = vshrl.u32 %v1456, 7
    %v1458 = vsub.s32 5, %v1457
    %v1459 = vrot.slane %v1434, %v1458
    %v1460 = vlaneseq
    %v1461 = vshrl.u32 %v1460, 7
    %v1462 = vsub.s32 6, %v1461
    %v1463 = vrot.slane %v1434, %v1462
    %v1464 = vlaneseq
    %v1465 = vshrl.u32 %v1464, 7
    %v1466 = vsub.s32 7, %v1465
    %v1467 = vrot.slane %v1434, %v1466
    %v1988 = vunpack.c.l.b16 %v922
    %v1989 = vunpack.c.h.b16 %v922
    %v1990 = vunpack.c.l.b16 %v923
    %v1991 = vunpack.c.h.b16 %v923
    %v1992 = vunpack.c.l.b16 %v924
    %v1993 = vunpack.c.h.b16 %v924
    %v1994 = vunpack.c.l.b16 %v925
    %v1995 = vunpack.c.h.b16 %v925
    %v1996 = vunpack.c.l.b16 %v926
    %v1997 = vunpack.c.h.b16 %v926
    %v1998 = vunpack.c.l.b16 %v927
    %v1999 = vunpack.c.h.b16 %v927
    %v2000 = vunpack.c.l.b16 %v928
    %v2001 = vunpack.c.h.b16 %v928
    %v2002 = vunpack.c.l.b16 %v929
    %v2003 = vunpack.c.h.b16 %v929
    %v2004 = vunpack.c.l.b16 %v930
    %v2005 = vunpack.c.h.b16 %v930
    %v2006 = vunpack.c.l.b16 %v931
    %v2007 = vunpack.c.h.b16 %v931
    %v2008 = vunpack.c.l.b16 %v932
    %v2009 = vunpack.c.h.b16 %v932
    %v2010 = vunpack.c.l.b16 %v933
    %v2011 = vunpack.c.h.b16 %v933
    %v2012 = vunpack.c.l.b16 %v934
    %v2013 = vunpack.c.h.b16 %v934
    %v2014 = vunpack.c.l.b16 %v935
    %v2015 = vunpack.c.h.b16 %v935
    %v2016 = vunpack.c.l.b16 %v936
    %v2017 = vunpack.c.h.b16 %v936
    %v2018 = vunpack.c.l.b16 %v937
    %v2019 = vunpack.c.h.b16 %v937
    %v2020 = vunpack.c.l.b16 %v938
    %v2021 = vunpack.c.h.b16 %v938
    %v2022 = vunpack.c.l.b16 %v939
    %v2023 = vunpack.c.h.b16 %v939
    %v2024 = vunpack.c.l.b16 %v940
    %v2025 = vunpack.c.h.b16 %v940
    %v2026 = vunpack.c.l.b16 %v941
    %v2027 = vunpack.c.h.b16 %v941
    %v2028 = vunpack.c.l.b16 %v942
    %v2029 = vunpack.c.h.b16 %v942
    %v2030 = vunpack.c.l.b16 %v943
    %v2031 = vunpack.c.h.b16 %v943
    %v2032 = vunpack.c.l.b16 %v944
    %v2033 = vunpack.c.h.b16 %v944
    %v2034 = vunpack.c.l.b16 %v945
    %v2035 = vunpack.c.h.b16 %v945
    %v2036 = vunpack.c.l.b16 %v946
    %v2037 = vunpack.c.h.b16 %v946
    %v2038 = vunpack.c.l.b16 %v947
    %v2039 = vunpack.c.h.b16 %v947
    %v2040 = vunpack.c.l.b16 %v948
    %v2041 = vunpack.c.h.b16 %v948
    %v2042 = vunpack.c.l.b16 %v949
    %v2043 = vunpack.c.h.b16 %v949
    %v2044 = vunpack.c.l.b16 %v950
    %v2045 = vunpack.c.h.b16 %v950
    %v2046 = vunpack.c.l.b16 %v951
    %v2047 = vunpack.c.h.b16 %v951
    %v2048 = vunpack.c.l.b16 %v952
    %v2049 = vunpack.c.h.b16 %v952
    %v2050 = vunpack.c.l.b16 %v953
    %v2051 = vunpack.c.h.b16 %v953
    %v2052 = vunpack.c.l.b16 %v954
    %v2053 = vunpack.c.h.b16 %v954
    %v2054 = vunpack.c.l.b16 %v955
    %v2055 = vunpack.c.h.b16 %v955
    %v2056 = vunpack.c.l.b16 %v956
    %v2057 = vunpack.c.h.b16 %v956
    %v2058 = vunpack.c.l.b16 %v957
    %v2059 = vunpack.c.h.b16 %v957
    %v2060 = vunpack.c.l.b16 %v958
    %v2061 = vunpack.c.h.b16 %v958
    %v2062 = vunpack.c.l.b16 %v959
    %v2063 = vunpack.c.h.b16 %v959
    %v2064 = vunpack.c.l.b16 %v960
    %v2065 = vunpack.c.h.b16 %v960
    %v2066 = vunpack.c.l.b16 %v961
    %v2067 = vunpack.c.h.b16 %v961
    %v2068 = vunpack.c.l.b16 %v962
    %v2069 = vunpack.c.h.b16 %v962
    %v2070 = vunpack.c.l.b16 %v963
    %v2071 = vunpack.c.h.b16 %v963
    %v2072 = vunpack.c.l.b16 %v964
    %v2073 = vunpack.c.h.b16 %v964
    %v2074 = vunpack.c.l.b16 %v965
    %v2075 = vunpack.c.h.b16 %v965
    %v2076 = vunpack.c.l.b16 %v966
    %v2077 = vunpack.c.h.b16 %v966
    %v2078 = vunpack.c.l.b16 %v967
    %v2079 = vunpack.c.h.b16 %v967
    %v2080 = vunpack.c.l.b16 %v968
    %v2081 = vunpack.c.h.b16 %v968
    %v2082 = vunpack.c.l.b16 %v969
    %v2083 = vunpack.c.h.b16 %v969
    %v2084 = vunpack.c.l.b16 %v970
    %v2085 = vunpack.c.h.b16 %v970
    %v2086 = vunpack.c.l.b16 %v971
    %v2087 = vunpack.c.h.b16 %v971
    %v2088 = vunpack.c.l.b16 %v972
    %v2089 = vunpack.c.h.b16 %v972
    %v2090 = vunpack.c.l.b16 %v973
    %v2091 = vunpack.c.h.b16 %v973
    %v2092 = vunpack.c.l.b16 %v974
    %v2093 = vunpack.c.h.b16 %v974
    %v2094 = vunpack.c.l.b16 %v975
    %v2095 = vunpack.c.h.b16 %v975
    %v2096 = vunpack.c.l.b16 %v976
    %v2097 = vunpack.c.h.b16 %v976
    %v2098 = vunpack.c.l.b16 %v977
    %v2099 = vunpack.c.h.b16 %v977
    %v2100 = vunpack.c.l.b16 %v978
    %v2101 = vunpack.c.h.b16 %v978
    %v2102 = vunpack.c.l.b16 %v979
    %v2103 = vunpack.c.h.b16 %v979
    %v2104 = vunpack.c.l.b16 %v980
    %v2105 = vunpack.c.h.b16 %v980
    %v2106 = vunpack.c.l.b16 %v981
    %v2107 = vunpack.c.h.b16 %v981
    %v2108 = vunpack.c.l.b16 %v982
    %v2109 = vunpack.c.h.b16 %v982
    %v2110 = vunpack.c.l.b16 %v983
    %v2111 = vunpack.c.h.b16 %v983
    %v2112 = vunpack.c.l.b16 %v984
    %v2113 = vunpack.c.h.b16 %v984
    %v2114 = vunpack.c.l.b16 %v985
    %v2115 = vunpack.c.h.b16 %v985
    %v2116 = vunpack.c.l.b16 %v986
    %v2117 = vunpack.c.h.b16 %v986
    %v2118 = vunpack.c.l.b16 %v987
    %v2119 = vunpack.c.h.b16 %v987
    %v2120 = vunpack.c.l.b16 %v988
    %v2121 = vunpack.c.h.b16 %v988
    %v2122 = vunpack.c.l.b16 %v989
    %v2123 = vunpack.c.h.b16 %v989
    %v2124 = vunpack.c.l.b16 %v990
    %v2125 = vunpack.c.h.b16 %v990
    %v2126 = vunpack.c.l.b16 %v991
    %v2127 = vunpack.c.h.b16 %v991
    %v2128 = vunpack.c.l.b16 %v992
    %v2129 = vunpack.c.h.b16 %v992
    %v2130 = vunpack.c.l.b16 %v993
    %v2131 = vunpack.c.h.b16 %v993
    %v2132 = vunpack.c.l.b16 %v994
    %v2133 = vunpack.c.h.b16 %v994
    %v2134 = vunpack.c.l.b16 %v995
    %v2135 = vunpack.c.h.b16 %v995
    %v2136 = vunpack.c.l.b16 %v996
    %v2137 = vunpack.c.h.b16 %v996
    %v2138 = vunpack.c.l.b16 %v997
    %v2139 = vunpack.c.h.b16 %v997
    %v2140 = vunpack.c.l.b16 %v998
    %v2141 = vunpack.c.h.b16 %v998
    %v2142 = vunpack.c.l.b16 %v999
    %v2143 = vunpack.c.h.b16 %v999
    %v2144 = vunpack.c.l.b16 %v1000
    %v2145 = vunpack.c.h.b16 %v1000
    %v2146 = vunpack.c.l.b16 %v1001
    %v2147 = vunpack.c.h.b16 %v1001
    %v2148 = vunpack.c.l.b16 %v1002
    %v2149 = vunpack.c.h.b16 %v1002
    %v2150 = vunpack.c.l.b16 %v1003
    %v2151 = vunpack.c.h.b16 %v1003
    %v2152 = vunpack.c.l.b16 %v1004
    %v2153 = vunpack.c.h.b16 %v1004
    %v2154 = vunpack.c.l.b16 %v1005
    %v2155 = vunpack.c.h.b16 %v1005
    %v2156 = vunpack.c.l.b16 %v1006
    %v2157 = vunpack.c.h.b16 %v1006
    %v2158 = vunpack.c.l.b16 %v1007
    %v2159 = vunpack.c.h.b16 %v1007
    %v2160 = vunpack.c.l.b16 %v1008
    %v2161 = vunpack.c.h.b16 %v1008
    %v2162 = vunpack.c.l.b16 %v1009
    %v2163 = vunpack.c.h.b16 %v1009
    %v2164 = vunpack.c.l.b16 %v1010
    %v2165 = vunpack.c.h.b16 %v1010
    %v2166 = vunpack.c.l.b16 %v1011
    %v2167 = vunpack.c.h.b16 %v1011
    %v2168 = vunpack.c.l.b16 %v1012
    %v2169 = vunpack.c.h.b16 %v1012
    %v2170 = vunpack.c.l.b16 %v1013
    %v2171 = vunpack.c.h.b16 %v1013
    %v2172 = vunpack.c.l.b16 %v1014
    %v2173 = vunpack.c.h.b16 %v1014
    %v2174 = vunpack.c.l.b16 %v1015
    %v2175 = vunpack.c.h.b16 %v1015
    %v2176 = vunpack.c.l.b16 %v1016
    %v2177 = vunpack.c.h.b16 %v1016
    %v2178 = vunpack.c.l.b16 %v1017
    %v2179 = vunpack.c.h.b16 %v1017
    %v2180 = vunpack.c.l.b16 %v1018
    %v2181 = vunpack.c.h.b16 %v1018
    %v2182 = vunpack.c.l.b16 %v1019
    %v2183 = vunpack.c.h.b16 %v1019
    %v2184 = vunpack.c.l.b16 %v1020
    %v2185 = vunpack.c.h.b16 %v1020
    %v2186 = vunpack.c.l.b16 %v1021
    %v2187 = vunpack.c.h.b16 %v1021
    %v2188 = vunpack.c.l.b16 %v1022
    %v2189 = vunpack.c.h.b16 %v1022
    %v2190 = vunpack.c.l.b16 %v1023
    %v2191 = vunpack.c.h.b16 %v1023
    %v2192 = vunpack.c.l.b16 %v1024
    %v2193 = vunpack.c.h.b16 %v1024
    %v2194 = vunpack.c.l.b16 %v1025
    %v2195 = vunpack.c.h.b16 %v1025
    %v2196 = vunpack.c.l.b16 %v1026
    %v2197 = vunpack.c.h.b16 %v1026
    %v2198 = vunpack.c.l.b16 %v1027
    %v2199 = vunpack.c.h.b16 %v1027
    %v2200 = vunpack.c.l.b16 %v1028
    %v2201 = vunpack.c.h.b16 %v1028
    %v2202 = vunpack.c.l.b16 %v1029
    %v2203 = vunpack.c.h.b16 %v1029
    %v2204 = vunpack.c.l.b16 %v1030
    %v2205 = vunpack.c.h.b16 %v1030
    %v2206 = vunpack.c.l.b16 %v1031
    %v2207 = vunpack.c.h.b16 %v1031
    %v2208 = vunpack.c.l.b16 %v1032
    %v2209 = vunpack.c.h.b16 %v1032
    %v2210 = vunpack.c.l.b16 %v1033
    %v2211 = vunpack.c.h.b16 %v1033
    %v2212 = vunpack.c.l.b16 %v1034
    %v2213 = vunpack.c.h.b16 %v1034
    %v2214 = vunpack.c.l.b16 %v1035
    %v2215 = vunpack.c.h.b16 %v1035
    %v2216 = vunpack.c.l.b16 %v1036
    %v2217 = vunpack.c.h.b16 %v1036
    %v2218 = vunpack.c.l.b16 %v1037
    %v2219 = vunpack.c.h.b16 %v1037
    %v2220 = vunpack.c.l.b16 %v1038
    %v2221 = vunpack.c.h.b16 %v1038
    %v2222 = vunpack.c.l.b16 %v1039
    %v2223 = vunpack.c.h.b16 %v1039
    %v2224 = vunpack.c.l.b16 %v1040
    %v2225 = vunpack.c.h.b16 %v1040
    %v2226 = vunpack.c.l.b16 %v1041
    %v2227 = vunpack.c.h.b16 %v1041
    %v2228 = vunpack.c.l.b16 %v1042
    %v2229 = vunpack.c.h.b16 %v1042
    %v2230 = vunpack.c.l.b16 %v1043
    %v2231 = vunpack.c.h.b16 %v1043
    %v2232 = vunpack.c.l.b16 %v1044
    %v2233 = vunpack.c.h.b16 %v1044
    %v2234 = vunpack.c.l.b16 %v1045
    %v2235 = vunpack.c.h.b16 %v1045
    %v2236 = vunpack.c.l.b16 %v1046
    %v2237 = vunpack.c.h.b16 %v1046
    %v2238 = vunpack.c.l.b16 %v1047
    %v2239 = vunpack.c.h.b16 %v1047
    %v2240 = vunpack.c.l.b16 %v1048
    %v2241 = vunpack.c.h.b16 %v1048
    %v2242 = vunpack.c.l.b16 %v1049
    %v2243 = vunpack.c.h.b16 %v1049
    %v2244 = vunpack.c.l.b16 %v1050
    %v2245 = vunpack.c.h.b16 %v1050
    %v2246 = vunpack.c.l.b16 %v1051
    %v2247 = vunpack.c.h.b16 %v1051
    %v2248 = vunpack.c.l.b16 %v1052
    %v2249 = vunpack.c.h.b16 %v1052
    %v2250 = vunpack.c.l.b16 %v1053
    %v2251 = vunpack.c.h.b16 %v1053
    %v2252 = vunpack.c.l.b16 %v1054
    %v2253 = vunpack.c.h.b16 %v1054
    %v2254 = vunpack.c.l.b16 %v1055
    %v2255 = vunpack.c.h.b16 %v1055
    %v2256 = vunpack.c.l.b16 %v1056
    %v2257 = vunpack.c.h.b16 %v1056
    %v2258 = vunpack.c.l.b16 %v1057
    %v2259 = vunpack.c.h.b16 %v1057
    %v2260 = vunpack.c.l.b16 %v1058
    %v2261 = vunpack.c.h.b16 %v1058
    %v2262 = vunpack.c.l.b16 %v1059
    %v2263 = vunpack.c.h.b16 %v1059
    %v2264 = vunpack.c.l.b16 %v1060
    %v2265 = vunpack.c.h.b16 %v1060
    %v2266 = vunpack.c.l.b16 %v1061
    %v2267 = vunpack.c.h.b16 %v1061
    %v2268 = vunpack.c.l.b16 %v1062
    %v2269 = vunpack.c.h.b16 %v1062
    %v2270 = vunpack.c.l.b16 %v1063
    %v2271 = vunpack.c.h.b16 %v1063
    %v2272 = vunpack.c.l.b16 %v1064
    %v2273 = vunpack.c.h.b16 %v1064
    %v2274 = vunpack.c.l.b16 %v1065
    %v2275 = vunpack.c.h.b16 %v1065
    %v2276 = vunpack.c.l.b16 %v1066
    %v2277 = vunpack.c.h.b16 %v1066
    %v2278 = vunpack.c.l.b16 %v1067
    %v2279 = vunpack.c.h.b16 %v1067
    %v2280 = vunpack.c.l.b16 %v1068
    %v2281 = vunpack.c.h.b16 %v1068
    %v2282 = vunpack.c.l.b16 %v1069
    %v2283 = vunpack.c.h.b16 %v1069
    %v2284 = vunpack.c.l.b16 %v1070
    %v2285 = vunpack.c.h.b16 %v1070
    %v2286 = vunpack.c.l.b16 %v1071
    %v2287 = vunpack.c.h.b16 %v1071
    %v2288 = vunpack.c.l.b16 %v1072
    %v2289 = vunpack.c.h.b16 %v1072
    %v2290 = vunpack.c.l.b16 %v1073
    %v2291 = vunpack.c.h.b16 %v1073
    %v2292 = vunpack.c.l.b16 %v1074
    %v2293 = vunpack.c.h.b16 %v1074
    %v2294 = vunpack.c.l.b16 %v1075
    %v2295 = vunpack.c.h.b16 %v1075
    %v2296 = vunpack.c.l.b16 %v1076
    %v2297 = vunpack.c.h.b16 %v1076
    %v2298 = vunpack.c.l.b16 %v1077
    %v2299 = vunpack.c.h.b16 %v1077
    %v2300 = vunpack.c.l.b16 %v1078
    %v2301 = vunpack.c.h.b16 %v1078
    %v2302 = vunpack.c.l.b16 %v1079
    %v2303 = vunpack.c.h.b16 %v1079
    %v2304 = vunpack.c.l.b16 %v1080
    %v2305 = vunpack.c.h.b16 %v1080
    %v2306 = vunpack.c.l.b16 %v1081
    %v2307 = vunpack.c.h.b16 %v1081
    %v2308 = vunpack.c.l.b16 %v1082
    %v2309 = vunpack.c.h.b16 %v1082
    %v2310 = vunpack.c.l.b16 %v1083
    %v2311 = vunpack.c.h.b16 %v1083
    %v2312 = vunpack.c.l.b16 %v1084
    %v2313 = vunpack.c.h.b16 %v1084
    %v2314 = vunpack.c.l.b16 %v1085
    %v2315 = vunpack.c.h.b16 %v1085
    %v2316 = vunpack.c.l.b16 %v1086
    %v2317 = vunpack.c.h.b16 %v1086
    %v2318 = vunpack.c.l.b16 %v1087
    %v2319 = vunpack.c.h.b16 %v1087
    %v2320 = vunpack.c.l.b16 %v1088
    %v2321 = vunpack.c.h.b16 %v1088
    %v2322 = vunpack.c.l.b16 %v1089
    %v2323 = vunpack.c.h.b16 %v1089
    %v2324 = vunpack.c.l.b16 %v1090
    %v2325 = vunpack.c.h.b16 %v1090
    %v2326 = vunpack.c.l.b16 %v1091
    %v2327 = vunpack.c.h.b16 %v1091
    %v2328 = vunpack.c.l.b16 %v1092
    %v2329 = vunpack.c.h.b16 %v1092
    %v2330 = vunpack.c.l.b16 %v1093
    %v2331 = vunpack.c.h.b16 %v1093
    %v2332 = vunpack.c.l.b16 %v1094
    %v2333 = vunpack.c.h.b16 %v1094
    %v2334 = vunpack.c.l.b16 %v1095
    %v2335 = vunpack.c.h.b16 %v1095
    %v2336 = vunpack.c.l.b16 %v1096
    %v2337 = vunpack.c.h.b16 %v1096
    %v2338 = vunpack.c.l.b16 %v1097
    %v2339 = vunpack.c.h.b16 %v1097
    %v2340 = vunpack.c.l.b16 %v1098
    %v2341 = vunpack.c.h.b16 %v1098
    %v2342 = vunpack.c.l.b16 %v1099
    %v2343 = vunpack.c.h.b16 %v1099
    %v2344 = vunpack.c.l.b16 %v1100
    %v2345 = vunpack.c.h.b16 %v1100
    %v2346 = vunpack.c.l.b16 %v1101
    %v2347 = vunpack.c.h.b16 %v1101
    %v2348 = vunpack.c.l.b16 %v1102
    %v2349 = vunpack.c.h.b16 %v1102
    %v2350 = vunpack.c.l.b16 %v1103
    %v2351 = vunpack.c.h.b16 %v1103
    %v2352 = vunpack.c.l.b16 %v1104
    %v2353 = vunpack.c.h.b16 %v1104
    %v2354 = vunpack.c.l.b16 %v1105
    %v2355 = vunpack.c.h.b16 %v1105
    %v2356 = vunpack.c.l.b16 %v1106
    %v2357 = vunpack.c.h.b16 %v1106
    %v2358 = vunpack.c.l.b16 %v1107
    %v2359 = vunpack.c.h.b16 %v1107
    %v2360 = vunpack.c.l.b16 %v1108
    %v2361 = vunpack.c.h.b16 %v1108
    %v2362 = vunpack.c.l.b16 %v1109
    %v2363 = vunpack.c.h.b16 %v1109
    %v2364 = vunpack.c.l.b16 %v1110
    %v2365 = vunpack.c.h.b16 %v1110
    %v2366 = vunpack.c.l.b16 %v1111
    %v2367 = vunpack.c.h.b16 %v1111
    %v2368 = vunpack.c.l.b16 %v1112
    %v2369 = vunpack.c.h.b16 %v1112
    %v2370 = vunpack.c.l.b16 %v1113
    %v2371 = vunpack.c.h.b16 %v1113
    %v2372 = vunpack.c.l.b16 %v1114
    %v2373 = vunpack.c.h.b16 %v1114
    %v2374 = vunpack.c.l.b16 %v1115
    %v2375 = vunpack.c.h.b16 %v1115
    %v2376 = vunpack.c.l.b16 %v1116
    %v2377 = vunpack.c.h.b16 %v1116
    %v2378 = vunpack.c.l.b16 %v1117
    %v2379 = vunpack.c.h.b16 %v1117
    %v2380 = vunpack.c.l.b16 %v1118
    %v2381 = vunpack.c.h.b16 %v1118
    %v2382 = vunpack.c.l.b16 %v1119
    %v2383 = vunpack.c.h.b16 %v1119
    %v2384 = vunpack.c.l.b16 %v1120
    %v2385 = vunpack.c.h.b16 %v1120
    %v2386 = vunpack.c.l.b16 %v1121
    %v2387 = vunpack.c.h.b16 %v1121
    %v2388 = vunpack.c.l.b16 %v1122
    %v2389 = vunpack.c.h.b16 %v1122
    %v2390 = vunpack.c.l.b16 %v1123
    %v2391 = vunpack.c.h.b16 %v1123
    %v2392 = vunpack.c.l.b16 %v1124
    %v2393 = vunpack.c.h.b16 %v1124
    %v2394 = vunpack.c.l.b16 %v1125
    %v2395 = vunpack.c.h.b16 %v1125
    %v2396 = vunpack.c.l.b16 %v1126
    %v2397 = vunpack.c.h.b16 %v1126
    %v2398 = vunpack.c.l.b16 %v1127
    %v2399 = vunpack.c.h.b16 %v1127
    %v2400 = vunpack.c.l.b16 %v1128
    %v2401 = vunpack.c.h.b16 %v1128
    %v2402 = vunpack.c.l.b16 %v1129
    %v2403 = vunpack.c.h.b16 %v1129
    %v2404 = vunpack.c.l.b16 %v1130
    %v2405 = vunpack.c.h.b16 %v1130
    %v2406 = vunpack.c.l.b16 %v1131
    %v2407 = vunpack.c.h.b16 %v1131
    %v2408 = vunpack.c.l.b16 %v1132
    %v2409 = vunpack.c.h.b16 %v1132
    %v2410 = vunpack.c.l.b16 %v1133
    %v2411 = vunpack.c.h.b16 %v1133
    %v2412 = vunpack.c.l.b16 %v1134
    %v2413 = vunpack.c.h.b16 %v1134
    %v2414 = vunpack.c.l.b16 %v1135
    %v2415 = vunpack.c.h.b16 %v1135
    %v2416 = vunpack.c.l.b16 %v1136
    %v2417 = vunpack.c.h.b16 %v1136
    %v2418 = vunpack.c.l.b16 %v1137
    %v2419 = vunpack.c.h.b16 %v1137
    %v2420 = vunpack.c.l.b16 %v1138
    %v2421 = vunpack.c.h.b16 %v1138
    %v2422 = vunpack.c.l.b16 %v1139
    %v2423 = vunpack.c.h.b16 %v1139
    %v2424 = vunpack.c.l.b16 %v1140
    %v2425 = vunpack.c.h.b16 %v1140
    %v2426 = vunpack.c.l.b16 %v1141
    %v2427 = vunpack.c.h.b16 %v1141
    %v2428 = vunpack.c.l.b16 %v1142
    %v2429 = vunpack.c.h.b16 %v1142
    %v2430 = vunpack.c.l.b16 %v1143
    %v2431 = vunpack.c.h.b16 %v1143
    %v2432 = vunpack.c.l.b16 %v1144
    %v2433 = vunpack.c.h.b16 %v1144
    %v2434 = vunpack.c.l.b16 %v1145
    %v2435 = vunpack.c.h.b16 %v1145
    %v2436 = vunpack.c.l.b16 %v1146
    %v2437 = vunpack.c.h.b16 %v1146
    %v2438 = vunpack.c.l.b16 %v1147
    %v2439 = vunpack.c.h.b16 %v1147
    %v2440 = vunpack.c.l.b16 %v1148
    %v2441 = vunpack.c.h.b16 %v1148
    %v2442 = vunpack.c.l.b16 %v1149
    %v2443 = vunpack.c.h.b16 %v1149
    %v2444 = vunpack.c.l.b16 %v1150
    %v2445 = vunpack.c.h.b16 %v1150
    %v2446 = vunpack.c.l.b16 %v1151
    %v2447 = vunpack.c.h.b16 %v1151
    %v2448 = vunpack.c.l.b16 %v1152
    %v2449 = vunpack.c.h.b16 %v1152
    %v2450 = vunpack.c.l.b16 %v1153
    %v2451 = vunpack.c.h.b16 %v1153
    %v2452 = vunpack.c.l.b16 %v1154
    %v2453 = vunpack.c.h.b16 %v1154
    %v2454 = vunpack.c.l.b16 %v1155
    %v2455 = vunpack.c.h.b16 %v1155
    %v2456 = vunpack.c.l.b16 %v1156
    %v2457 = vunpack.c.h.b16 %v1156
    %v2458 = vunpack.c.l.b16 %v1157
    %v2459 = vunpack.c.h.b16 %v1157
    %v2460 = vunpack.c.l.b16 %v1158
    %v2461 = vunpack.c.h.b16 %v1158
    %v2462 = vunpack.c.l.b16 %v1159
    %v2463 = vunpack.c.h.b16 %v1159
    %v2464 = vunpack.c.l.b16 %v1160
    %v2465 = vunpack.c.h.b16 %v1160
    %v2466 = vunpack.c.l.b16 %v1161
    %v2467 = vunpack.c.h.b16 %v1161
    %v2468 = vunpack.c.l.b16 %v1162
    %v2469 = vunpack.c.h.b16 %v1162
    %v2470 = vunpack.c.l.b16 %v1163
    %v2471 = vunpack.c.h.b16 %v1163
    %v2472 = vunpack.c.l.b16 %v1164
    %v2473 = vunpack.c.h.b16 %v1164
    %v2474 = vunpack.c.l.b16 %v1165
    %v2475 = vunpack.c.h.b16 %v1165
    %v2476 = vunpack.c.l.b16 %v1166
    %v2477 = vunpack.c.h.b16 %v1166
    %v2478 = vunpack.c.l.b16 %v1167
    %v2479 = vunpack.c.h.b16 %v1167
    %v2480 = vunpack.c.l.b16 %v1168
    %v2481 = vunpack.c.h.b16 %v1168
    %v2482 = vunpack.c.l.b16 %v1169
    %v2483 = vunpack.c.h.b16 %v1169
    %v2484 = vunpack.c.l.b16 %v1170
    %v2485 = vunpack.c.h.b16 %v1170
    %v2486 = vunpack.c.l.b16 %v1171
    %v2487 = vunpack.c.h.b16 %v1171
    %v2488 = vunpack.c.l.b16 %v1172
    %v2489 = vunpack.c.h.b16 %v1172
    %v2490 = vunpack.c.l.b16 %v1173
    %v2491 = vunpack.c.h.b16 %v1173
    %v2492 = vunpack.c.l.b16 %v1174
    %v2493 = vunpack.c.h.b16 %v1174
    %v2494 = vunpack.c.l.b16 %v1175
    %v2495 = vunpack.c.h.b16 %v1175
    %v2496 = vunpack.c.l.b16 %v1176
    %v2497 = vunpack.c.h.b16 %v1176
    %v2498 = vunpack.c.l.b16 %v1177
    %v2499 = vunpack.c.h.b16 %v1177
    %v2500 = vunpack.c.l.b16 %v1178
    %v2501 = vunpack.c.h.b16 %v1178
    %v2502 = vunpack.c.l.b16 %v1179
    %v2503 = vunpack.c.h.b16 %v1179
    %v2504 = vunpack.c.l.b16 %v1180
    %v2505 = vunpack.c.h.b16 %v1180
    %v2506 = vunpack.c.l.b16 %v1181
    %v2507 = vunpack.c.h.b16 %v1181
    %v2508 = vunpack.c.l.b16 %v1182
    %v2509 = vunpack.c.h.b16 %v1182
    %v2510 = vunpack.c.l.b16 %v1183
    %v2511 = vunpack.c.h.b16 %v1183
    %v2512 = vunpack.c.l.b16 %v1184
    %v2513 = vunpack.c.h.b16 %v1184
    %v2514 = vunpack.c.l.b16 %v1185
    %v2515 = vunpack.c.h.b16 %v1185
    %v2516 = vunpack.c.l.b16 %v1186
    %v2517 = vunpack.c.h.b16 %v1186
    %v2518 = vunpack.c.l.b16 %v1187
    %v2519 = vunpack.c.h.b16 %v1187
    %v2520 = vunpack.c.l.b16 %v1188
    %v2521 = vunpack.c.h.b16 %v1188
    %v2522 = vunpack.c.l.b16 %v1189
    %v2523 = vunpack.c.h.b16 %v1189
    %v2524 = vunpack.c.l.b16 %v1190
    %v2525 = vunpack.c.h.b16 %v1190
    %v2526 = vunpack.c.l.b16 %v1191
    %v2527 = vunpack.c.h.b16 %v1191
    %v2528 = vunpack.c.l.b16 %v1192
    %v2529 = vunpack.c.h.b16 %v1192
    %v2530 = vunpack.c.l.b16 %v1193
    %v2531 = vunpack.c.h.b16 %v1193
    %v2532 = vunpack.c.l.b16 %v1194
    %v2533 = vunpack.c.h.b16 %v1194
    %v2534 = vunpack.c.l.b16 %v1195
    %v2535 = vunpack.c.h.b16 %v1195
    %v2536 = vunpack.c.l.b16 %v1196
    %v2537 = vunpack.c.h.b16 %v1196
    %v2538 = vunpack.c.l.b16 %v1197
    %v2539 = vunpack.c.h.b16 %v1197
    %v2540 = vunpack.c.l.b16 %v1198
    %v2541 = vunpack.c.h.b16 %v1198
    %v2542 = vunpack.c.l.b16 %v1199
    %v2543 = vunpack.c.h.b16 %v1199
    %v2544 = vunpack.c.l.b16 %v1200
    %v2545 = vunpack.c.h.b16 %v1200
    %v2546 = vunpack.c.l.b16 %v1201
    %v2547 = vunpack.c.h.b16 %v1201
    %v2548 = vunpack.c.l.b16 %v1202
    %v2549 = vunpack.c.h.b16 %v1202
    %v2550 = vunpack.c.l.b16 %v1203
    %v2551 = vunpack.c.h.b16 %v1203
    %v2552 = vunpack.c.l.b16 %v1204
    %v2553 = vunpack.c.h.b16 %v1204
    %v2554 = vunpack.c.l.b16 %v1205
    %v2555 = vunpack.c.h.b16 %v1205
    %v2556 = vunpack.c.l.b16 %v1206
    %v2557 = vunpack.c.h.b16 %v1206
    %v2558 = vunpack.c.l.b16 %v1207
    %v2559 = vunpack.c.h.b16 %v1207
    %v2560 = vunpack.c.l.b16 %v1208
    %v2561 = vunpack.c.h.b16 %v1208
    %v2562 = vunpack.c.l.b16 %v1209
    %v2563 = vunpack.c.h.b16 %v1209
    %v2564 = vunpack.c.l.b16 %v1210
    %v2565 = vunpack.c.h.b16 %v1210
    %v2566 = vunpack.c.l.b16 %v1211
    %v2567 = vunpack.c.h.b16 %v1211
    %v2568 = vunpack.c.l.b16 %v1212
    %v2569 = vunpack.c.h.b16 %v1212
    %v2570 = vunpack.c.l.b16 %v1213
    %v2571 = vunpack.c.h.b16 %v1213
    %v2572 = vunpack.c.l.b16 %v1214
    %v2573 = vunpack.c.h.b16 %v1214
    %v2574 = vunpack.c.l.b16 %v1215
    %v2575 = vunpack.c.h.b16 %v1215
    %v2576 = vunpack.c.l.b16 %v1216
    %v2577 = vunpack.c.h.b16 %v1216
    %v2578 = vunpack.c.l.b16 %v1217
    %v2579 = vunpack.c.h.b16 %v1217
    %v2580 = vunpack.c.l.b16 %v1218
    %v2581 = vunpack.c.h.b16 %v1218
    %v2582 = vunpack.c.l.b16 %v1219
    %v2583 = vunpack.c.h.b16 %v1219
    %v2584 = vunpack.c.l.b16 %v1220
    %v2585 = vunpack.c.h.b16 %v1220
    %v2586 = vunpack.c.l.b16 %v1221
    %v2587 = vunpack.c.h.b16 %v1221
    %v2588 = vunpack.c.l.b16 %v1222
    %v2589 = vunpack.c.h.b16 %v1222
    %v2590 = vunpack.c.l.b16 %v1223
    %v2591 = vunpack.c.h.b16 %v1223
    %v2592 = vunpack.c.l.b16 %v1224
    %v2593 = vunpack.c.h.b16 %v1224
    %v2594 = vunpack.c.l.b16 %v1225
    %v2595 = vunpack.c.h.b16 %v1225
    %v2596 = vunpack.c.l.b16 %v1226
    %v2597 = vunpack.c.h.b16 %v1226
    %v2598 = vunpack.c.l.b16 %v1227
    %v2599 = vunpack.c.h.b16 %v1227
    %v2600 = vunpack.c.l.b16 %v1228
    %v2601 = vunpack.c.h.b16 %v1228
    %v2602 = vunpack.c.l.b16 %v1229
    %v2603 = vunpack.c.h.b16 %v1229
    %v2604 = vunpack.c.l.b16 %v1230
    %v2605 = vunpack.c.h.b16 %v1230
    %v2606 = vunpack.c.l.b16 %v1231
    %v2607 = vunpack.c.h.b16 %v1231
    %v2608 = vunpack.c.l.b16 %v1232
    %v2609 = vunpack.c.h.b16 %v1232
    %v2610 = vunpack.c.l.b16 %v1233
    %v2611 = vunpack.c.h.b16 %v1233
    %v2612 = vunpack.c.l.b16 %v1234
    %v2613 = vunpack.c.h.b16 %v1234
    %v2614 = vunpack.c.l.b16 %v1235
    %v2615 = vunpack.c.h.b16 %v1235
    %v2616 = vunpack.c.l.b16 %v1236
    %v2617 = vunpack.c.h.b16 %v1236
    %v2618 = vunpack.c.l.b16 %v1237
    %v2619 = vunpack.c.h.b16 %v1237
    %v2620 = vunpack.c.l.b16 %v1238
    %v2621 = vunpack.c.h.b16 %v1238
    %v2622 = vunpack.c.l.b16 %v1239
    %v2623 = vunpack.c.h.b16 %v1239
    %v2624 = vunpack.c.l.b16 %v1240
    %v2625 = vunpack.c.h.b16 %v1240
    %v2626 = vunpack.c.l.b16 %v1241
    %v2627 = vunpack.c.h.b16 %v1241
    %v2628 = vunpack.c.l.b16 %v1242
    %v2629 = vunpack.c.h.b16 %v1242
    %v2630 = vunpack.c.l.b16 %v1243
    %v2631 = vunpack.c.h.b16 %v1243
    %v2632 = vunpack.c.l.b16 %v1244
    %v2633 = vunpack.c.h.b16 %v1244
    %v2634 = vunpack.c.l.b16 %v1245
    %v2635 = vunpack.c.h.b16 %v1245
    %v2636 = vunpack.c.l.b16 %v1246
    %v2637 = vunpack.c.h.b16 %v1246
    %v2638 = vunpack.c.l.b16 %v1247
    %v2639 = vunpack.c.h.b16 %v1247
    %v2640 = vunpack.c.l.b16 %v1248
    %v2641 = vunpack.c.h.b16 %v1248
    %v2642 = vunpack.c.l.b16 %v1249
    %v2643 = vunpack.c.h.b16 %v1249
    %v2644 = vunpack.c.l.b16 %v1250
    %v2645 = vunpack.c.h.b16 %v1250
    %v2646 = vunpack.c.l.b16 %v1251
    %v2647 = vunpack.c.h.b16 %v1251
    %v2648 = vunpack.c.l.b16 %v1252
    %v2649 = vunpack.c.h.b16 %v1252
    %v2650 = vunpack.c.l.b16 %v1253
    %v2651 = vunpack.c.h.b16 %v1253
    %v2652 = vunpack.c.l.b16 %v1254
    %v2653 = vunpack.c.h.b16 %v1254
    %v2654 = vunpack.c.l.b16 %v1255
    %v2655 = vunpack.c.h.b16 %v1255
    %v2656 = vunpack.c.l.b16 %v1256
    %v2657 = vunpack.c.h.b16 %v1256
    %v2658 = vunpack.c.l.b16 %v1257
    %v2659 = vunpack.c.h.b16 %v1257
    %v2660 = vunpack.c.l.b16 %v1258
    %v2661 = vunpack.c.h.b16 %v1258
    %v2662 = vunpack.c.l.b16 %v1259
    %v2663 = vunpack.c.h.b16 %v1259
    %v2664 = vunpack.c.l.b16 %v1260
    %v2665 = vunpack.c.h.b16 %v1260
    %v2666 = vunpack.c.l.b16 %v1261
    %v2667 = vunpack.c.h.b16 %v1261
    %v2668 = vunpack.c.l.b16 %v1262
    %v2669 = vunpack.c.h.b16 %v1262
    %v2670 = vunpack.c.l.b16 %v1263
    %v2671 = vunpack.c.h.b16 %v1263
    %v2672 = vunpack.c.l.b16 %v1264
    %v2673 = vunpack.c.h.b16 %v1264
    %v2674 = vunpack.c.l.b16 %v1265
    %v2675 = vunpack.c.h.b16 %v1265
    %v2676 = vunpack.c.l.b16 %v1266
    %v2677 = vunpack.c.h.b16 %v1266
    %v2678 = vunpack.c.l.b16 %v1267
    %v2679 = vunpack.c.h.b16 %v1267
    %v2680 = vunpack.c.l.b16 %v1268
    %v2681 = vunpack.c.h.b16 %v1268
    %v2682 = vunpack.c.l.b16 %v1269
    %v2683 = vunpack.c.h.b16 %v1269
    %v2684 = vunpack.c.l.b16 %v1270
    %v2685 = vunpack.c.h.b16 %v1270
    %v2686 = vunpack.c.l.b16 %v1271
    %v2687 = vunpack.c.h.b16 %v1271
    %v2688 = vunpack.c.l.b16 %v1272
    %v2689 = vunpack.c.h.b16 %v1272
    %v2690 = vunpack.c.l.b16 %v1273
    %v2691 = vunpack.c.h.b16 %v1273
    %v2692 = vunpack.c.l.b16 %v1274
    %v2693 = vunpack.c.h.b16 %v1274
    %v2694 = vunpack.c.l.b16 %v1275
    %v2695 = vunpack.c.h.b16 %v1275
    %v2696 = vunpack.c.l.b16 %v1276
    %v2697 = vunpack.c.h.b16 %v1276
    %v2698 = vunpack.c.l.b16 %v1277
    %v2699 = vunpack.c.h.b16 %v1277
    %v2700 = vunpack.c.l.b16 %v1278
    %v2701 = vunpack.c.h.b16 %v1278
    %v2702 = vunpack.c.l.b16 %v1279
    %v2703 = vunpack.c.h.b16 %v1279
    %v2704 = vunpack.c.l.b16 %v1280
    %v2705 = vunpack.c.h.b16 %v1280
    %v2706 = vunpack.c.l.b16 %v1281
    %v2707 = vunpack.c.h.b16 %v1281
    %v2708 = vunpack.c.l.b16 %v1282
    %v2709 = vunpack.c.h.b16 %v1282
    %v2710 = vunpack.c.l.b16 %v1283
    %v2711 = vunpack.c.h.b16 %v1283
    %v2712 = vunpack.c.l.b16 %v1284
    %v2713 = vunpack.c.h.b16 %v1284
    %v2714 = vunpack.c.l.b16 %v1285
    %v2715 = vunpack.c.h.b16 %v1285
    %v2716 = vunpack.c.l.b16 %v1286
    %v2717 = vunpack.c.h.b16 %v1286
    %v2718 = vunpack.c.l.b16 %v1287
    %v2719 = vunpack.c.h.b16 %v1287
    %v2720 = vunpack.c.l.b16 %v1288
    %v2721 = vunpack.c.h.b16 %v1288
    %v2722 = vunpack.c.l.b16 %v1289
    %v2723 = vunpack.c.h.b16 %v1289
    %v2724 = vunpack.c.l.b16 %v1290
    %v2725 = vunpack.c.h.b16 %v1290
    %v2726 = vunpack.c.l.b16 %v1291
    %v2727 = vunpack.c.h.b16 %v1291
    %v2728 = vunpack.c.l.b16 %v1292
    %v2729 = vunpack.c.h.b16 %v1292
    %v2730 = vunpack.c.l.b16 %v1293
    %v2731 = vunpack.c.h.b16 %v1293
    %v2732 = vunpack.c.l.b16 %v1294
    %v2733 = vunpack.c.h.b16 %v1294
    %v2734 = vunpack.c.l.b16 %v1295
    %v2735 = vunpack.c.h.b16 %v1295
    %v2736 = vunpack.c.l.b16 %v1296
    %v2737 = vunpack.c.h.b16 %v1296
    %v2738 = vunpack.c.l.b16 %v1297
    %v2739 = vunpack.c.h.b16 %v1297
    %v2740 = vunpack.c.l.b16 %v1298
    %v2741 = vunpack.c.h.b16 %v1298
    %v2742 = vunpack.c.l.b16 %v1299
    %v2743 = vunpack.c.h.b16 %v1299
    %v2744 = vunpack.c.l.b16 %v1300
    %v2745 = vunpack.c.h.b16 %v1300
    %v2746 = vunpack.c.l.b16 %v1301
    %v2747 = vunpack.c.h.b16 %v1301
    %v2748 = vunpack.c.l.b16 %v1302
    %v2749 = vunpack.c.h.b16 %v1302
    %v2750 = vunpack.c.l.b16 %v1303
    %v2751 = vunpack.c.h.b16 %v1303
    %v2752 = vunpack.c.l.b16 %v1304
    %v2753 = vunpack.c.h.b16 %v1304
    %v2754 = vunpack.c.l.b16 %v1305
    %v2755 = vunpack.c.h.b16 %v1305
    %v2756 = vunpack.c.l.b16 %v1306
    %v2757 = vunpack.c.h.b16 %v1306
    %v2758 = vunpack.c.l.b16 %v1307
    %v2759 = vunpack.c.h.b16 %v1307
    %v2760 = vunpack.c.l.b16 %v1308
    %v2761 = vunpack.c.h.b16 %v1308
    %v2762 = vunpack.c.l.b16 %v1309
    %v2763 = vunpack.c.h.b16 %v1309
    %v2764 = vunpack.c.l.b16 %v1310
    %v2765 = vunpack.c.h.b16 %v1310
    %v2766 = vunpack.c.l.b16 %v1311
    %v2767 = vunpack.c.h.b16 %v1311
    %v2768 = vunpack.c.l.b16 %v1312
    %v2769 = vunpack.c.h.b16 %v1312
    %v2770 = vunpack.c.l.b16 %v1313
    %v2771 = vunpack.c.h.b16 %v1313
    %v2772 = vunpack.c.l.b16 %v1314
    %v2773 = vunpack.c.h.b16 %v1314
    %v2774 = vunpack.c.l.b16 %v1315
    %v2775 = vunpack.c.h.b16 %v1315
    %v2776 = vunpack.c.l.b16 %v1316
    %v2777 = vunpack.c.h.b16 %v1316
    %v2778 = vunpack.c.l.b16 %v1317
    %v2779 = vunpack.c.h.b16 %v1317
    %v2780 = vunpack.c.l.b16 %v1318
    %v2781 = vunpack.c.h.b16 %v1318
    %v2782 = vunpack.c.l.b16 %v1319
    %v2783 = vunpack.c.h.b16 %v1319
    %v2784 = vunpack.c.l.b16 %v1320
    %v2785 = vunpack.c.h.b16 %v1320
    %v2786 = vunpack.c.l.b16 %v1321
    %v2787 = vunpack.c.h.b16 %v1321
    %v2788 = vunpack.c.l.b16 %v1322
    %v2789 = vunpack.c.h.b16 %v1322
    %v2790 = vunpack.c.l.b16 %v1323
    %v2791 = vunpack.c.h.b16 %v1323
    %v2792 = vunpack.c.l.b16 %v1324
    %v2793 = vunpack.c.h.b16 %v1324
    %v2794 = vunpack.c.l.b16 %v1325
    %v2795 = vunpack.c.h.b16 %v1325
    %v2796 = vunpack.c.l.b16 %v1326
    %v2797 = vunpack.c.h.b16 %v1326
    %v2798 = vunpack.c.l.b16 %v1327
    %v2799 = vunpack.c.h.b16 %v1327
    %v2800 = vunpack.c.l.b16 %v1328
    %v2801 = vunpack.c.h.b16 %v1328
    %v2802 = vunpack.c.l.b16 %v1329
    %v2803 = vunpack.c.h.b16 %v1329
    %v2804 = vunpack.c.l.b16 %v1330
    %v2805 = vunpack.c.h.b16 %v1330
    %v2806 = vunpack.c.l.b16 %v1331
    %v2807 = vunpack.c.h.b16 %v1331
    %v2808 = vunpack.c.l.b16 %v1332
    %v2809 = vunpack.c.h.b16 %v1332
    %v2810 = vunpack.c.l.b16 %v1333
    %v2811 = vunpack.c.h.b16 %v1333
    %v2812 = vunpack.c.l.b16 %v1334
    %v2813 = vunpack.c.h.b16 %v1334
    %v2814 = vunpack.c.l.b16 %v1335
    %v2815 = vunpack.c.h.b16 %v1335
    %v2816 = vunpack.c.l.b16 %v1336
    %v2817 = vunpack.c.h.b16 %v1336
    %v2818 = vunpack.c.l.b16 %v1337
    %v2819 = vunpack.c.h.b16 %v1337
    %v2820 = vunpack.c.l.b16 %v1338
    %v2821 = vunpack.c.h.b16 %v1338
    %v2822 = vunpack.c.l.b16 %v1339
    %v2823 = vunpack.c.h.b16 %v1339
    %v2824 = vunpack.c.l.b16 %v1340
    %v2825 = vunpack.c.h.b16 %v1340
    %v2826 = vunpack.c.l.b16 %v1341
    %v2827 = vunpack.c.h.b16 %v1341
    %v2828 = vunpack.c.l.b16 %v1342
    %v2829 = vunpack.c.h.b16 %v1342
    %v2830 = vunpack.c.l.b16 %v1343
    %v2831 = vunpack.c.h.b16 %v1343
    %v2832 = vunpack.c.l.b16 %v1344
    %v2833 = vunpack.c.h.b16 %v1344
    %v2834 = vunpack.c.l.b16 %v1345
    %v2835 = vunpack.c.h.b16 %v1345
    %v2836 = vunpack.c.l.b16 %v1346
    %v2837 = vunpack.c.h.b16 %v1346
    %v2838 = vunpack.c.l.b16 %v1347
    %v2839 = vunpack.c.h.b16 %v1347
    %v2840 = vunpack.c.l.b16 %v1348
    %v2841 = vunpack.c.h.b16 %v1348
    %v2842 = vunpack.c.l.b16 %v1349
    %v2843 = vunpack.c.h.b16 %v1349
    %v2844 = vunpack.c.l.b16 %v1350
    %v2845 = vunpack.c.h.b16 %v1350
    %v2846 = vunpack.c.l.b16 %v1351
    %v2847 = vunpack.c.h.b16 %v1351
    %v2848 = vunpack.c.l.b16 %v1352
    %v2849 = vunpack.c.h.b16 %v1352
    %v2850 = vunpack.c.l.b16 %v1353
    %v2851 = vunpack.c.h.b16 %v1353
    %v2852 = vunpack.c.l.b16 %v1354
    %v2853 = vunpack.c.h.b16 %v1354
    %v2854 = vunpack.c.l.b16 %v1355
    %v2855 = vunpack.c.h.b16 %v1355
    %v2856 = vunpack.c.l.b16 %v1356
    %v2857 = vunpack.c.h.b16 %v1356
    %v2858 = vunpack.c.l.b16 %v1357
    %v2859 = vunpack.c.h.b16 %v1357
    %v2860 = vunpack.c.l.b16 %v1358
    %v2861 = vunpack.c.h.b16 %v1358
    %v2862 = vunpack.c.l.b16 %v1359
    %v2863 = vunpack.c.h.b16 %v1359
    %v2864 = vunpack.c.l.b16 %v1360
    %v2865 = vunpack.c.h.b16 %v1360
    %v2866 = vunpack.c.l.b16 %v1361
    %v2867 = vunpack.c.h.b16 %v1361
    %v2868 = vunpack.c.l.b16 %v1362
    %v2869 = vunpack.c.h.b16 %v1362
    %v2870 = vunpack.c.l.b16 %v1363
    %v2871 = vunpack.c.h.b16 %v1363
    %v2872 = vunpack.c.l.b16 %v1364
    %v2873 = vunpack.c.h.b16 %v1364
    %v2874 = vunpack.c.l.b16 %v1365
    %v2875 = vunpack.c.h.b16 %v1365
    %v2876 = vunpack.c.l.b16 %v1366
    %v2877 = vunpack.c.h.b16 %v1366
    %v2878 = vunpack.c.l.b16 %v1367
    %v2879 = vunpack.c.h.b16 %v1367
    %v2880 = vunpack.c.l.b16 %v1368
    %v2881 = vunpack.c.h.b16 %v1368
    %v2882 = vunpack.c.l.b16 %v1369
    %v2883 = vunpack.c.h.b16 %v1369
    %v2884 = vunpack.c.l.b16 %v1370
    %v2885 = vunpack.c.h.b16 %v1370
    %v2886 = vunpack.c.l.b16 %v1371
    %v2887 = vunpack.c.h.b16 %v1371
    %v2888 = vunpack.c.l.b16 %v1372
    %v2889 = vunpack.c.h.b16 %v1372
    %v2890 = vunpack.c.l.b16 %v1373
    %v2891 = vunpack.c.h.b16 %v1373
    %v2892 = vunpack.c.l.b16 %v1374
    %v2893 = vunpack.c.h.b16 %v1374
    %v2894 = vunpack.c.l.b16 %v1375
    %v2895 = vunpack.c.h.b16 %v1375
    %v2896 = vunpack.c.l.b16 %v1376
    %v2897 = vunpack.c.h.b16 %v1376
    %v2898 = vunpack.c.l.b16 %v1377
    %v2899 = vunpack.c.h.b16 %v1377
    %v2900 = vunpack.c.l.b16 %v1378
    %v2901 = vunpack.c.h.b16 %v1378
    %v2902 = vunpack.c.l.b16 %v1379
    %v2903 = vunpack.c.h.b16 %v1379
    %v2904 = vunpack.c.l.b16 %v1380
    %v2905 = vunpack.c.h.b16 %v1380
    %v2906 = vunpack.c.l.b16 %v1381
    %v2907 = vunpack.c.h.b16 %v1381
    %v2908 = vunpack.c.l.b16 %v1382
    %v2909 = vunpack.c.h.b16 %v1382
    %v2910 = vunpack.c.l.b16 %v1383
    %v2911 = vunpack.c.h.b16 %v1383
    %v2912 = vunpack.c.l.b16 %v1384
    %v2913 = vunpack.c.h.b16 %v1384
    %v2914 = vunpack.c.l.b16 %v1385
    %v2915 = vunpack.c.h.b16 %v1385
    %v2916 = vunpack.c.l.b16 %v1386
    %v2917 = vunpack.c.h.b16 %v1386
    %v2918 = vunpack.c.l.b16 %v1387
    %v2919 = vunpack.c.h.b16 %v1387
    %v2920 = vunpack.c.l.b16 %v1388
    %v2921 = vunpack.c.h.b16 %v1388
    %v2922 = vunpack.c.l.b16 %v1389
    %v2923 = vunpack.c.h.b16 %v1389
    %v2924 = vunpack.c.l.b16 %v1390
    %v2925 = vunpack.c.h.b16 %v1390
    %v2926 = vunpack.c.l.b16 %v1391
    %v2927 = vunpack.c.h.b16 %v1391
    %v2928 = vunpack.c.l.b16 %v1392
    %v2929 = vunpack.c.h.b16 %v1392
    %v2930 = vunpack.c.l.b16 %v1393
    %v2931 = vunpack.c.h.b16 %v1393
    %v2932 = vunpack.c.l.b16 %v1394
    %v2933 = vunpack.c.h.b16 %v1394
    %v2934 = vunpack.c.l.b16 %v1395
    %v2935 = vunpack.c.h.b16 %v1395
    %v2936 = vunpack.c.l.b16 %v1396
    %v2937 = vunpack.c.h.b16 %v1396
    %v2938 = vunpack.c.l.b16 %v1397
    %v2939 = vunpack.c.h.b16 %v1397
    %v2940 = vunpack.c.l.b16 %v1398
    %v2941 = vunpack.c.h.b16 %v1398
    %v2942 = vunpack.c.l.b16 %v1399
    %v2943 = vunpack.c.h.b16 %v1399
    %v2944 = vunpack.c.l.b16 %v1400
    %v2945 = vunpack.c.h.b16 %v1400
    %v2946 = vunpack.c.l.b16 %v1401
    %v2947 = vunpack.c.h.b16 %v1401
    %v2948 = vunpack.c.l.b16 %v1402
    %v2949 = vunpack.c.h.b16 %v1402
    %v2950 = vunpack.c.l.b16 %v1403
    %v2951 = vunpack.c.h.b16 %v1403
    %v2952 = vunpack.c.l.b16 %v1404
    %v2953 = vunpack.c.h.b16 %v1404
    %v2954 = vunpack.c.l.b16 %v1405
    %v2955 = vunpack.c.h.b16 %v1405
    %v2956 = vunpack.c.l.b16 %v1406
    %v2957 = vunpack.c.h.b16 %v1406
    %v2958 = vunpack.c.l.b16 %v1407
    %v2959 = vunpack.c.h.b16 %v1407
    %v2960 = vunpack.c.l.b16 %v1408
    %v2961 = vunpack.c.h.b16 %v1408
    %v2962 = vunpack.c.l.b16 %v1409
    %v2963 = vunpack.c.h.b16 %v1409
    %v2964 = vunpack.c.l.b16 %v1410
    %v2965 = vunpack.c.h.b16 %v1410
    %v2966 = vunpack.c.l.b16 %v1411
    %v2967 = vunpack.c.h.b16 %v1411
    %v2968 = vunpack.c.l.b16 %v1412
    %v2969 = vunpack.c.h.b16 %v1412
    %v2970 = vunpack.c.l.b16 %v1413
    %v2971 = vunpack.c.h.b16 %v1413
    %v2972 = vunpack.c.l.b16 %v1414
    %v2973 = vunpack.c.h.b16 %v1414
    %v2974 = vunpack.c.l.b16 %v1415
    %v2975 = vunpack.c.h.b16 %v1415
    %v2976 = vunpack.c.l.b16 %v1416
    %v2977 = vunpack.c.h.b16 %v1416
    %v2978 = vunpack.c.l.b16 %v1417
    %v2979 = vunpack.c.h.b16 %v1417
    %v2980 = vunpack.c.l.b16 %v1418
    %v2981 = vunpack.c.h.b16 %v1418
    %v2982 = vunpack.c.l.b16 %v1419
    %v2983 = vunpack.c.h.b16 %v1419
    %v2984 = vunpack.c.l.b16 %v1420
    %v2985 = vunpack.c.h.b16 %v1420
    %v2986 = vunpack.c.l.b16 %v1421
    %v2987 = vunpack.c.h.b16 %v1421
    %v2988 = vunpack.c.l.b16 %v1422
    %v2989 = vunpack.c.h.b16 %v1422
    %v2990 = vunpack.c.l.b16 %v1423
    %v2991 = vunpack.c.h.b16 %v1423
    %v2992 = vunpack.c.l.b16 %v1424
    %v2993 = vunpack.c.h.b16 %v1424
    %v2994 = vunpack.c.l.b16 %v1425
    %v2995 = vunpack.c.h.b16 %v1425
    %v2996 = vunpack.c.l.b16 %v1426
    %v2997 = vunpack.c.h.b16 %v1426
    %v2998 = vunpack.c.l.b16 %v1427
    %v2999 = vunpack.c.h.b16 %v1427
    %v3000 = vunpack.c.l.b16 %v1428
    %v3001 = vunpack.c.h.b16 %v1428
    %v3002 = vunpack.c.l.b16 %v1429
    %v3003 = vunpack.c.h.b16 %v1429
    %v3004 = vunpack.c.l.b16 %v1430
    %v3005 = vunpack.c.h.b16 %v1430
    %v3006 = vunpack.c.l.b16 %v1431
    %v3007 = vunpack.c.h.b16 %v1431
    %v3008 = vunpack.c.l.b16 %v1432
    %v3009 = vunpack.c.h.b16 %v1432
    %v3010 = vunpack.c.l.b16 %v1433
    %v3011 = vunpack.c.h.b16 %v1433
    %v3012 = vpack.c.b16 %v1996, %v1988
    %v3013 = vpack.c.b16 %v1997, %v1989
    %v3014 = vpack.c.b16 %v1998, %v1990
    %v3015 = vpack.c.b16 %v1999, %v1991
    %v3016 = vpack.c.b16 %v2000, %v1992
    %v3017 = vpack.c.b16 %v2001, %v1993
    %v3018 = vpack.c.b16 %v2002, %v1994
    %v3019 = vpack.c.b16 %v2003, %v1995
    %v3020 = vpack.c.b16 %v2012, %v2004
    %v3021 = vpack.c.b16 %v2013, %v2005
    %v3022 = vpack.c.b16 %v2014, %v2006
    %v3023 = vpack.c.b16 %v2015, %v2007
    %v3024 = vpack.c.b16 %v2016, %v2008
    %v3025 = vpack.c.b16 %v2017, %v2009
    %v3026 = vpack.c.b16 %v2018, %v2010
    %v3027 = vpack.c.b16 %v2019, %v2011
    %v3028 = vpack.c.b16 %v2028, %v2020
    %v3029 = vpack.c.b16 %v2029, %v2021
    %v3030 = vpack.c.b16 %v2030, %v2022
    %v3031 = vpack.c.b16 %v2031, %v2023
    %v3032 = vpack.c.b16 %v2032, %v2024
    %v3033 = vpack.c.b16 %v2033, %v2025
    %v3034 = vpack.c.b16 %v2034, %v2026
    %v3035 = vpack.c.b16 %v2035, %v2027
    %v3036 = vpack.c.b16 %v2044, %v2036
    %v3037 = vpack.c.b16 %v2045, %v2037
    %v3038 = vpack.c.b16 %v2046, %v2038
    %v3039 = vpack.c.b16 %v2047, %v2039
    %v3040 = vpack.c.b16 %v2048, %v2040
    %v3041 = vpack.c.b16 %v2049, %v2041
    %v3042 = vpack.c.b16 %v2050, %v2042
    %v3043 = vpack.c.b16 %v2051, %v2043
    %v3044 = vpack.c.b16 %v2060, %v2052
    %v3045 = vpack.c.b16 %v2061, %v2053
    %v3046 = vpack.c.b16 %v2062, %v2054
    %v3047 = vpack.c.b16 %v2063, %v2055
    %v3048 = vpack.c.b16 %v2064, %v2056
    %v3049 = vpack.c.b16 %v2065, %v2057
    %v3050 = vpack.c.b16 %v2066, %v2058
    %v3051 = vpack.c.b16 %v2067, %v2059
    %v3052 = vpack.c.b16 %v2076, %v2068
    %v3053 = vpack.c.b16 %v2077, %v2069
    %v3054 = vpack.c.b16 %v2078, %v2070
    %v3055 = vpack.c.b16 %v2079, %v2071
    %v3056 = vpack.c.b16 %v2080, %v2072
    %v3057 = vpack.c.b16 %v2081, %v2073
    %v3058 = vpack.c.b16 %v2082, %v2074
    %v3059 = vpack.c.b16 %v2083, %v2075
    %v3060 = vpack.c.b16 %v2092, %v2084
    %v3061 = vpack.c.b16 %v2093, %v2085
    %v3062 = vpack.c.b16 %v2094, %v2086
    %v3063 = vpack.c.b16 %v2095, %v2087
    %v3064 = vpack.c.b16 %v2096, %v2088
    %v3065 = vpack.c.b16 %v2097, %v2089
    %v3066 = vpack.c.b16 %v2098, %v2090
    %v3067 = vpack.c.b16 %v2099, %v2091
    %v3068 = vpack.c.b16 %v2108, %v2100
    %v3069 = vpack.c.b16 %v2109, %v2101
    %v3070 = vpack.c.b16 %v2110, %v2102
    %v3071 = vpack.c.b16 %v2111, %v2103
    %v3072 = vpack.c.b16 %v2112, %v2104
    %v3073 = vpack.c.b16 %v2113, %v2105
    %v3074 = vpack.c.b16 %v2114, %v2106
    %v3075 = vpack.c.b16 %v2115, %v2107
    %v3076 = vpack.c.b16 %v2124, %v2116
    %v3077 = vpack.c.b16 %v2125, %v2117
    %v3078 = vpack.c.b16 %v2126, %v2118
    %v3079 = vpack.c.b16 %v2127, %v2119
    %v3080 = vpack.c.b16 %v2128, %v2120
    %v3081 = vpack.c.b16 %v2129, %v2121
    %v3082 = vpack.c.b16 %v2130, %v2122
    %v3083 = vpack.c.b16 %v2131, %v2123
    %v3084 = vpack.c.b16 %v2140, %v2132
    %v3085 = vpack.c.b16 %v2141, %v2133
    %v3086 = vpack.c.b16 %v2142, %v2134
    %v3087 = vpack.c.b16 %v2143, %v2135
    %v3088 = vpack.c.b16 %v2144, %v2136
    %v3089 = vpack.c.b16 %v2145, %v2137
    %v3090 = vpack.c.b16 %v2146, %v2138
    %v3091 = vpack.c.b16 %v2147, %v2139
    %v3092 = vpack.c.b16 %v2156, %v2148
    %v3093 = vpack.c.b16 %v2157, %v2149
    %v3094 = vpack.c.b16 %v2158, %v2150
    %v3095 = vpack.c.b16 %v2159, %v2151
    %v3096 = vpack.c.b16 %v2160, %v2152
    %v3097 = vpack.c.b16 %v2161, %v2153
    %v3098 = vpack.c.b16 %v2162, %v2154
    %v3099 = vpack.c.b16 %v2163, %v2155
    %v3100 = vpack.c.b16 %v2172, %v2164
    %v3101 = vpack.c.b16 %v2173, %v2165
    %v3102 = vpack.c.b16 %v2174, %v2166
    %v3103 = vpack.c.b16 %v2175, %v2167
    %v3104 = vpack.c.b16 %v2176, %v2168
    %v3105 = vpack.c.b16 %v2177, %v2169
    %v3106 = vpack.c.b16 %v2178, %v2170
    %v3107 = vpack.c.b16 %v2179, %v2171
    %v3108 = vpack.c.b16 %v2188, %v2180
    %v3109 = vpack.c.b16 %v2189, %v2181
    %v3110 = vpack.c.b16 %v2190, %v2182
    %v3111 = vpack.c.b16 %v2191, %v2183
    %v3112 = vpack.c.b16 %v2192, %v2184
    %v3113 = vpack.c.b16 %v2193, %v2185
    %v3114 = vpack.c.b16 %v2194, %v2186
    %v3115 = vpack.c.b16 %v2195, %v2187
    %v3116 = vpack.c.b16 %v2204, %v2196
    %v3117 = vpack.c.b16 %v2205, %v2197
    %v3118 = vpack.c.b16 %v2206, %v2198
    %v3119 = vpack.c.b16 %v2207, %v2199
    %v3120 = vpack.c.b16 %v2208, %v2200
    %v3121 = vpack.c.b16 %v2209, %v2201
    %v3122 = vpack.c.b16 %v2210, %v2202
    %v3123 = vpack.c.b16 %v2211, %v2203
    %v3124 = vpack.c.b16 %v2220, %v2212
    %v3125 = vpack.c.b16 %v2221, %v2213
    %v3126 = vpack.c.b16 %v2222, %v2214
    %v3127 = vpack.c.b16 %v2223, %v2215
    %v3128 = vpack.c.b16 %v2224, %v2216
    %v3129 = vpack.c.b16 %v2225, %v2217
    %v3130 = vpack.c.b16 %v2226, %v2218
    %v3131 = vpack.c.b16 %v2227, %v2219
    %v3132 = vpack.c.b16 %v2236, %v2228
    %v3133 = vpack.c.b16 %v2237, %v2229
    %v3134 = vpack.c.b16 %v2238, %v2230
    %v3135 = vpack.c.b16 %v2239, %v2231
    %v3136 = vpack.c.b16 %v2240, %v2232
    %v3137 = vpack.c.b16 %v2241, %v2233
    %v3138 = vpack.c.b16 %v2242, %v2234
    %v3139 = vpack.c.b16 %v2243, %v2235
    %v3140 = vpack.c.b16 %v2252, %v2244
    %v3141 = vpack.c.b16 %v2253, %v2245
    %v3142 = vpack.c.b16 %v2254, %v2246
    %v3143 = vpack.c.b16 %v2255, %v2247
    %v3144 = vpack.c.b16 %v2256, %v2248
    %v3145 = vpack.c.b16 %v2257, %v2249
    %v3146 = vpack.c.b16 %v2258, %v2250
    %v3147 = vpack.c.b16 %v2259, %v2251
    %v3148 = vpack.c.b16 %v2268, %v2260
    %v3149 = vpack.c.b16 %v2269, %v2261
    %v3150 = vpack.c.b16 %v2270, %v2262
    %v3151 = vpack.c.b16 %v2271, %v2263
    %v3152 = vpack.c.b16 %v2272, %v2264
    %v3153 = vpack.c.b16 %v2273, %v2265
    %v3154 = vpack.c.b16 %v2274, %v2266
    %v3155 = vpack.c.b16 %v2275, %v2267
    %v3156 = vpack.c.b16 %v2284, %v2276
    %v3157 = vpack.c.b16 %v2285, %v2277
    %v3158 = vpack.c.b16 %v2286, %v2278
    %v3159 = vpack.c.b16 %v2287, %v2279
    %v3160 = vpack.c.b16 %v2288, %v2280
    %v3161 = vpack.c.b16 %v2289, %v2281
    %v3162 = vpack.c.b16 %v2290, %v2282
    %v3163 = vpack.c.b16 %v2291, %v2283
    %v3164 = vpack.c.b16 %v2300, %v2292
    %v3165 = vpack.c.b16 %v2301, %v2293
    %v3166 = vpack.c.b16 %v2302, %v2294
    %v3167 = vpack.c.b16 %v2303, %v2295
    %v3168 = vpack.c.b16 %v2304, %v2296
    %v3169 = vpack.c.b16 %v2305, %v2297
    %v3170 = vpack.c.b16 %v2306, %v2298
    %v3171 = vpack.c.b16 %v2307, %v2299
    %v3172 = vpack.c.b16 %v2316, %v2308
    %v3173 = vpack.c.b16 %v2317, %v2309
    %v3174 = vpack.c.b16 %v2318, %v2310
    %v3175 = vpack.c.b16 %v2319, %v2311
    %v3176 = vpack.c.b16 %v2320, %v2312
    %v3177 = vpack.c.b16 %v2321, %v2313
    %v3178 = vpack.c.b16 %v2322, %v2314
    %v3179 = vpack.c.b16 %v2323, %v2315
    %v3180 = vpack.c.b16 %v2332, %v2324
    %v3181 = vpack.c.b16 %v2333, %v2325
    %v3182 = vpack.c.b16 %v2334, %v2326
    %v3183 = vpack.c.b16 %v2335, %v2327
    %v3184 = vpack.c.b16 %v2336, %v2328
    %v3185 = vpack.c.b16 %v2337, %v2329
    %v3186 = vpack.c.b16 %v2338, %v2330
    %v3187 = vpack.c.b16 %v2339, %v2331
    %v3188 = vpack.c.b16 %v2348, %v2340
    %v3189 = vpack.c.b16 %v2349, %v2341
    %v3190 = vpack.c.b16 %v2350, %v2342
    %v3191 = vpack.c.b16 %v2351, %v2343
    %v3192 = vpack.c.b16 %v2352, %v2344
    %v3193 = vpack.c.b16 %v2353, %v2345
    %v3194 = vpack.c.b16 %v2354, %v2346
    %v3195 = vpack.c.b16 %v2355, %v2347
    %v3196 = vpack.c.b16 %v2364, %v2356
    %v3197 = vpack.c.b16 %v2365, %v2357
    %v3198 = vpack.c.b16 %v2366, %v2358
    %v3199 = vpack.c.b16 %v2367, %v2359
    %v3200 = vpack.c.b16 %v2368, %v2360
    %v3201 = vpack.c.b16 %v2369, %v2361
    %v3202 = vpack.c.b16 %v2370, %v2362
    %v3203 = vpack.c.b16 %v2371, %v2363
    %v3204 = vpack.c.b16 %v2380, %v2372
    %v3205 = vpack.c.b16 %v2381, %v2373
    %v3206 = vpack.c.b16 %v2382, %v2374
    %v3207 = vpack.c.b16 %v2383, %v2375
    %v3208 = vpack.c.b16 %v2384, %v2376
    %v3209 = vpack.c.b16 %v2385, %v2377
    %v3210 = vpack.c.b16 %v2386, %v2378
    %v3211 = vpack.c.b16 %v2387, %v2379
    %v3212 = vpack.c.b16 %v2396, %v2388
    %v3213 = vpack.c.b16 %v2397, %v2389
    %v3214 = vpack.c.b16 %v2398, %v2390
    %v3215 = vpack.c.b16 %v2399, %v2391
    %v3216 = vpack.c.b16 %v2400, %v2392
    %v3217 = vpack.c.b16 %v2401, %v2393
    %v3218 = vpack.c.b16 %v2402, %v2394
    %v3219 = vpack.c.b16 %v2403, %v2395
    %v3220 = vpack.c.b16 %v2412, %v2404
    %v3221 = vpack.c.b16 %v2413, %v2405
    %v3222 = vpack.c.b16 %v2414, %v2406
    %v3223 = vpack.c.b16 %v2415, %v2407
    %v3224 = vpack.c.b16 %v2416, %v2408
    %v3225 = vpack.c.b16 %v2417, %v2409
    %v3226 = vpack.c.b16 %v2418, %v2410
    %v3227 = vpack.c.b16 %v2419, %v2411
    %v3228 = vpack.c.b16 %v2428, %v2420
    %v3229 = vpack.c.b16 %v2429, %v2421
    %v3230 = vpack.c.b16 %v2430, %v2422
    %v3231 = vpack.c.b16 %v2431, %v2423
    %v3232 = vpack.c.b16 %v2432, %v2424
    %v3233 = vpack.c.b16 %v2433, %v2425
    %v3234 = vpack.c.b16 %v2434, %v2426
    %v3235 = vpack.c.b16 %v2435, %v2427
    %v3236 = vpack.c.b16 %v2444, %v2436
    %v3237 = vpack.c.b16 %v2445, %v2437
    %v3238 = vpack.c.b16 %v2446, %v2438
    %v3239 = vpack.c.b16 %v2447, %v2439
    %v3240 = vpack.c.b16 %v2448, %v2440
    %v3241 = vpack.c.b16 %v2449, %v2441
    %v3242 = vpack.c.b16 %v2450, %v2442
    %v3243 = vpack.c.b16 %v2451, %v2443
    %v3244 = vpack.c.b16 %v2460, %v2452
    %v3245 = vpack.c.b16 %v2461, %v2453
    %v3246 = vpack.c.b16 %v2462, %v2454
    %v3247 = vpack.c.b16 %v2463, %v2455
    %v3248 = vpack.c.b16 %v2464, %v2456
    %v3249 = vpack.c.b16 %v2465, %v2457
    %v3250 = vpack.c.b16 %v2466, %v2458
    %v3251 = vpack.c.b16 %v2467, %v2459
    %v3252 = vpack.c.b16 %v2476, %v2468
    %v3253 = vpack.c.b16 %v2477, %v2469
    %v3254 = vpack.c.b16 %v2478, %v2470
    %v3255 = vpack.c.b16 %v2479, %v2471
    %v3256 = vpack.c.b16 %v2480, %v2472
    %v3257 = vpack.c.b16 %v2481, %v2473
    %v3258 = vpack.c.b16 %v2482, %v2474
    %v3259 = vpack.c.b16 %v2483, %v2475
    %v3260 = vpack.c.b16 %v2492, %v2484
    %v3261 = vpack.c.b16 %v2493, %v2485
    %v3262 = vpack.c.b16 %v2494, %v2486
    %v3263 = vpack.c.b16 %v2495, %v2487
    %v3264 = vpack.c.b16 %v2496, %v2488
    %v3265 = vpack.c.b16 %v2497, %v2489
    %v3266 = vpack.c.b16 %v2498, %v2490
    %v3267 = vpack.c.b16 %v2499, %v2491
    %v3268 = vpack.c.b16 %v2508, %v2500
    %v3269 = vpack.c.b16 %v2509, %v2501
    %v3270 = vpack.c.b16 %v2510, %v2502
    %v3271 = vpack.c.b16 %v2511, %v2503
    %v3272 = vpack.c.b16 %v2512, %v2504
    %v3273 = vpack.c.b16 %v2513, %v2505
    %v3274 = vpack.c.b16 %v2514, %v2506
    %v3275 = vpack.c.b16 %v2515, %v2507
    %v3276 = vpack.c.b16 %v2524, %v2516
    %v3277 = vpack.c.b16 %v2525, %v2517
    %v3278 = vpack.c.b16 %v2526, %v2518
    %v3279 = vpack.c.b16 %v2527, %v2519
    %v3280 = vpack.c.b16 %v2528, %v2520
    %v3281 = vpack.c.b16 %v2529, %v2521
    %v3282 = vpack.c.b16 %v2530, %v2522
    %v3283 = vpack.c.b16 %v2531, %v2523
    %v3284 = vpack.c.b16 %v2540, %v2532
    %v3285 = vpack.c.b16 %v2541, %v2533
    %v3286 = vpack.c.b16 %v2542, %v2534
    %v3287 = vpack.c.b16 %v2543, %v2535
    %v3288 = vpack.c.b16 %v2544, %v2536
    %v3289 = vpack.c.b16 %v2545, %v2537
    %v3290 = vpack.c.b16 %v2546, %v2538
    %v3291 = vpack.c.b16 %v2547, %v2539
    %v3292 = vpack.c.b16 %v2556, %v2548
    %v3293 = vpack.c.b16 %v2557, %v2549
    %v3294 = vpack.c.b16 %v2558, %v2550
    %v3295 = vpack.c.b16 %v2559, %v2551
    %v3296 = vpack.c.b16 %v2560, %v2552
    %v3297 = vpack.c.b16 %v2561, %v2553
    %v3298 = vpack.c.b16 %v2562, %v2554
    %v3299 = vpack.c.b16 %v2563, %v2555
    %v3300 = vpack.c.b16 %v2572, %v2564
    %v3301 = vpack.c.b16 %v2573, %v2565
    %v3302 = vpack.c.b16 %v2574, %v2566
    %v3303 = vpack.c.b16 %v2575, %v2567
    %v3304 = vpack.c.b16 %v2576, %v2568
    %v3305 = vpack.c.b16 %v2577, %v2569
    %v3306 = vpack.c.b16 %v2578, %v2570
    %v3307 = vpack.c.b16 %v2579, %v2571
    %v3308 = vpack.c.b16 %v2588, %v2580
    %v3309 = vpack.c.b16 %v2589, %v2581
    %v3310 = vpack.c.b16 %v2590, %v2582
    %v3311 = vpack.c.b16 %v2591, %v2583
    %v3312 = vpack.c.b16 %v2592, %v2584
    %v3313 = vpack.c.b16 %v2593, %v2585
    %v3314 = vpack.c.b16 %v2594, %v2586
    %v3315 = vpack.c.b16 %v2595, %v2587
    %v3316 = vpack.c.b16 %v2604, %v2596
    %v3317 = vpack.c.b16 %v2605, %v2597
    %v3318 = vpack.c.b16 %v2606, %v2598
    %v3319 = vpack.c.b16 %v2607, %v2599
    %v3320 = vpack.c.b16 %v2608, %v2600
    %v3321 = vpack.c.b16 %v2609, %v2601
    %v3322 = vpack.c.b16 %v2610, %v2602
    %v3323 = vpack.c.b16 %v2611, %v2603
    %v3324 = vpack.c.b16 %v2620, %v2612
    %v3325 = vpack.c.b16 %v2621, %v2613
    %v3326 = vpack.c.b16 %v2622, %v2614
    %v3327 = vpack.c.b16 %v2623, %v2615
    %v3328 = vpack.c.b16 %v2624, %v2616
    %v3329 = vpack.c.b16 %v2625, %v2617
    %v3330 = vpack.c.b16 %v2626, %v2618
    %v3331 = vpack.c.b16 %v2627, %v2619
    %v3332 = vpack.c.b16 %v2636, %v2628
    %v3333 = vpack.c.b16 %v2637, %v2629
    %v3334 = vpack.c.b16 %v2638, %v2630
    %v3335 = vpack.c.b16 %v2639, %v2631
    %v3336 = vpack.c.b16 %v2640, %v2632
    %v3337 = vpack.c.b16 %v2641, %v2633
    %v3338 = vpack.c.b16 %v2642, %v2634
    %v3339 = vpack.c.b16 %v2643, %v2635
    %v3340 = vpack.c.b16 %v2652, %v2644
    %v3341 = vpack.c.b16 %v2653, %v2645
    %v3342 = vpack.c.b16 %v2654, %v2646
    %v3343 = vpack.c.b16 %v2655, %v2647
    %v3344 = vpack.c.b16 %v2656, %v2648
    %v3345 = vpack.c.b16 %v2657, %v2649
    %v3346 = vpack.c.b16 %v2658, %v2650
    %v3347 = vpack.c.b16 %v2659, %v2651
    %v3348 = vpack.c.b16 %v2668, %v2660
    %v3349 = vpack.c.b16 %v2669, %v2661
    %v3350 = vpack.c.b16 %v2670, %v2662
    %v3351 = vpack.c.b16 %v2671, %v2663
    %v3352 = vpack.c.b16 %v2672, %v2664
    %v3353 = vpack.c.b16 %v2673, %v2665
    %v3354 = vpack.c.b16 %v2674, %v2666
    %v3355 = vpack.c.b16 %v2675, %v2667
    %v3356 = vpack.c.b16 %v2684, %v2676
    %v3357 = vpack.c.b16 %v2685, %v2677
    %v3358 = vpack.c.b16 %v2686, %v2678
    %v3359 = vpack.c.b16 %v2687, %v2679
    %v3360 = vpack.c.b16 %v2688, %v2680
    %v3361 = vpack.c.b16 %v2689, %v2681
    %v3362 = vpack.c.b16 %v2690, %v2682
    %v3363 = vpack.c.b16 %v2691, %v2683
    %v3364 = vpack.c.b16 %v2700, %v2692
    %v3365 = vpack.c.b16 %v2701, %v2693
    %v3366 = vpack.c.b16 %v2702, %v2694
    %v3367 = vpack.c.b16 %v2703, %v2695
    %v3368 = vpack.c.b16 %v2704, %v2696
    %v3369 = vpack.c.b16 %v2705, %v2697
    %v3370 = vpack.c.b16 %v2706, %v2698
    %v3371 = vpack.c.b16 %v2707, %v2699
    %v3372 = vpack.c.b16 %v2716, %v2708
    %v3373 = vpack.c.b16 %v2717, %v2709
    %v3374 = vpack.c.b16 %v2718, %v2710
    %v3375 = vpack.c.b16 %v2719, %v2711
    %v3376 = vpack.c.b16 %v2720, %v2712
    %v3377 = vpack.c.b16 %v2721, %v2713
    %v3378 = vpack.c.b16 %v2722, %v2714
    %v3379 = vpack.c.b16 %v2723, %v2715
    %v3380 = vpack.c.b16 %v2732, %v2724
    %v3381 = vpack.c.b16 %v2733, %v2725
    %v3382 = vpack.c.b16 %v2734, %v2726
    %v3383 = vpack.c.b16 %v2735, %v2727
    %v3384 = vpack.c.b16 %v2736, %v2728
    %v3385 = vpack.c.b16 %v2737, %v2729
    %v3386 = vpack.c.b16 %v2738, %v2730
    %v3387 = vpack.c.b16 %v2739, %v2731
    %v3388 = vpack.c.b16 %v2748, %v2740
    %v3389 = vpack.c.b16 %v2749, %v2741
    %v3390 = vpack.c.b16 %v2750, %v2742
    %v3391 = vpack.c.b16 %v2751, %v2743
    %v3392 = vpack.c.b16 %v2752, %v2744
    %v3393 = vpack.c.b16 %v2753, %v2745
    %v3394 = vpack.c.b16 %v2754, %v2746
    %v3395 = vpack.c.b16 %v2755, %v2747
    %v3396 = vpack.c.b16 %v2764, %v2756
    %v3397 = vpack.c.b16 %v2765, %v2757
    %v3398 = vpack.c.b16 %v2766, %v2758
    %v3399 = vpack.c.b16 %v2767, %v2759
    %v3400 = vpack.c.b16 %v2768, %v2760
    %v3401 = vpack.c.b16 %v2769, %v2761
    %v3402 = vpack.c.b16 %v2770, %v2762
    %v3403 = vpack.c.b16 %v2771, %v2763
    %v3404 = vpack.c.b16 %v2780, %v2772
    %v3405 = vpack.c.b16 %v2781, %v2773
    %v3406 = vpack.c.b16 %v2782, %v2774
    %v3407 = vpack.c.b16 %v2783, %v2775
    %v3408 = vpack.c.b16 %v2784, %v2776
    %v3409 = vpack.c.b16 %v2785, %v2777
    %v3410 = vpack.c.b16 %v2786, %v2778
    %v3411 = vpack.c.b16 %v2787, %v2779
    %v3412 = vpack.c.b16 %v2796, %v2788
    %v3413 = vpack.c.b16 %v2797, %v2789
    %v3414 = vpack.c.b16 %v2798, %v2790
    %v3415 = vpack.c.b16 %v2799, %v2791
    %v3416 = vpack.c.b16 %v2800, %v2792
    %v3417 = vpack.c.b16 %v2801, %v2793
    %v3418 = vpack.c.b16 %v2802, %v2794
    %v3419 = vpack.c.b16 %v2803, %v2795
    %v3420 = vpack.c.b16 %v2812, %v2804
    %v3421 = vpack.c.b16 %v2813, %v2805
    %v3422 = vpack.c.b16 %v2814, %v2806
    %v3423 = vpack.c.b16 %v2815, %v2807
    %v3424 = vpack.c.b16 %v2816, %v2808
    %v3425 = vpack.c.b16 %v2817, %v2809
    %v3426 = vpack.c.b16 %v2818, %v2810
    %v3427 = vpack.c.b16 %v2819, %v2811
    %v3428 = vpack.c.b16 %v2828, %v2820
    %v3429 = vpack.c.b16 %v2829, %v2821
    %v3430 = vpack.c.b16 %v2830, %v2822
    %v3431 = vpack.c.b16 %v2831, %v2823
    %v3432 = vpack.c.b16 %v2832, %v2824
    %v3433 = vpack.c.b16 %v2833, %v2825
    %v3434 = vpack.c.b16 %v2834, %v2826
    %v3435 = vpack.c.b16 %v2835, %v2827
    %v3436 = vpack.c.b16 %v2844, %v2836
    %v3437 = vpack.c.b16 %v2845, %v2837
    %v3438 = vpack.c.b16 %v2846, %v2838
    %v3439 = vpack.c.b16 %v2847, %v2839
    %v3440 = vpack.c.b16 %v2848, %v2840
    %v3441 = vpack.c.b16 %v2849, %v2841
    %v3442 = vpack.c.b16 %v2850, %v2842
    %v3443 = vpack.c.b16 %v2851, %v2843
    %v3444 = vpack.c.b16 %v2860, %v2852
    %v3445 = vpack.c.b16 %v2861, %v2853
    %v3446 = vpack.c.b16 %v2862, %v2854
    %v3447 = vpack.c.b16 %v2863, %v2855
    %v3448 = vpack.c.b16 %v2864, %v2856
    %v3449 = vpack.c.b16 %v2865, %v2857
    %v3450 = vpack.c.b16 %v2866, %v2858
    %v3451 = vpack.c.b16 %v2867, %v2859
    %v3452 = vpack.c.b16 %v2876, %v2868
    %v3453 = vpack.c.b16 %v2877, %v2869
    %v3454 = vpack.c.b16 %v2878, %v2870
    %v3455 = vpack.c.b16 %v2879, %v2871
    %v3456 = vpack.c.b16 %v2880, %v2872
    %v3457 = vpack.c.b16 %v2881, %v2873
    %v3458 = vpack.c.b16 %v2882, %v2874
    %v3459 = vpack.c.b16 %v2883, %v2875
    %v3460 = vpack.c.b16 %v2892, %v2884
    %v3461 = vpack.c.b16 %v2893, %v2885
    %v3462 = vpack.c.b16 %v2894, %v2886
    %v3463 = vpack.c.b16 %v2895, %v2887
    %v3464 = vpack.c.b16 %v2896, %v2888
    %v3465 = vpack.c.b16 %v2897, %v2889
    %v3466 = vpack.c.b16 %v2898, %v2890
    %v3467 = vpack.c.b16 %v2899, %v2891
    %v3468 = vpack.c.b16 %v2908, %v2900
    %v3469 = vpack.c.b16 %v2909, %v2901
    %v3470 = vpack.c.b16 %v2910, %v2902
    %v3471 = vpack.c.b16 %v2911, %v2903
    %v3472 = vpack.c.b16 %v2912, %v2904
    %v3473 = vpack.c.b16 %v2913, %v2905
    %v3474 = vpack.c.b16 %v2914, %v2906
    %v3475 = vpack.c.b16 %v2915, %v2907
    %v3476 = vpack.c.b16 %v2924, %v2916
    %v3477 = vpack.c.b16 %v2925, %v2917
    %v3478 = vpack.c.b16 %v2926, %v2918
    %v3479 = vpack.c.b16 %v2927, %v2919
    %v3480 = vpack.c.b16 %v2928, %v2920
    %v3481 = vpack.c.b16 %v2929, %v2921
    %v3482 = vpack.c.b16 %v2930, %v2922
    %v3483 = vpack.c.b16 %v2931, %v2923
    %v3484 = vpack.c.b16 %v2940, %v2932
    %v3485 = vpack.c.b16 %v2941, %v2933
    %v3486 = vpack.c.b16 %v2942, %v2934
    %v3487 = vpack.c.b16 %v2943, %v2935
    %v3488 = vpack.c.b16 %v2944, %v2936
    %v3489 = vpack.c.b16 %v2945, %v2937
    %v3490 = vpack.c.b16 %v2946, %v2938
    %v3491 = vpack.c.b16 %v2947, %v2939
    %v3492 = vpack.c.b16 %v2956, %v2948
    %v3493 = vpack.c.b16 %v2957, %v2949
    %v3494 = vpack.c.b16 %v2958, %v2950
    %v3495 = vpack.c.b16 %v2959, %v2951
    %v3496 = vpack.c.b16 %v2960, %v2952
    %v3497 = vpack.c.b16 %v2961, %v2953
    %v3498 = vpack.c.b16 %v2962, %v2954
    %v3499 = vpack.c.b16 %v2963, %v2955
    %v3500 = vpack.c.b16 %v2972, %v2964
    %v3501 = vpack.c.b16 %v2973, %v2965
    %v3502 = vpack.c.b16 %v2974, %v2966
    %v3503 = vpack.c.b16 %v2975, %v2967
    %v3504 = vpack.c.b16 %v2976, %v2968
    %v3505 = vpack.c.b16 %v2977, %v2969
    %v3506 = vpack.c.b16 %v2978, %v2970
    %v3507 = vpack.c.b16 %v2979, %v2971
    %v3508 = vpack.c.b16 %v2988, %v2980
    %v3509 = vpack.c.b16 %v2989, %v2981
    %v3510 = vpack.c.b16 %v2990, %v2982
    %v3511 = vpack.c.b16 %v2991, %v2983
    %v3512 = vpack.c.b16 %v2992, %v2984
    %v3513 = vpack.c.b16 %v2993, %v2985
    %v3514 = vpack.c.b16 %v2994, %v2986
    %v3515 = vpack.c.b16 %v2995, %v2987
    %v3516 = vpack.c.b16 %v3004, %v2996
    %v3517 = vpack.c.b16 %v3005, %v2997
    %v3518 = vpack.c.b16 %v3006, %v2998
    %v3519 = vpack.c.b16 %v3007, %v2999
    %v3520 = vpack.c.b16 %v3008, %v3000
    %v3521 = vpack.c.b16 %v3009, %v3001
    %v3522 = vpack.c.b16 %v3010, %v3002
    %v3523 = vpack.c.b16 %v3011, %v3003
    %4036 = vmatprep.subr.bf16.mxu0 %v3069
    %4037 = vmatpush1.bf16.msra.mxu0 %v3068
    %4038 = vmatprep.subr.bf16.mxu0 %v3061
    %4039 = vmatpush1.bf16.msra.mxu0 %v3060
    %4040 = vmatprep.subr.bf16.mxu0 %v3053
    %4041 = vmatpush1.bf16.msra.mxu0 %v3052
    %4042 = vmatprep.subr.bf16.mxu0 %v3045
    %4043 = vmatpush1.bf16.msra.mxu0 %v3044
    %4044 = vmatprep.subr.bf16.mxu0 %v3037
    %4045 = vmatpush1.bf16.msra.mxu0 %v3036
    %4046 = vmatprep.subr.bf16.mxu0 %v3029
    %4047 = vmatpush1.bf16.msra.mxu0 %v3028
    %4048 = vmatprep.subr.bf16.mxu0 %v3021
    %4049 = vmatpush1.bf16.msra.mxu0 %v3020
    %4050 = vmatprep.subr.bf16.mxu0 %v3013
    %4051 = vmatpush1.bf16.msra.mxu0 %v3012
    %4052 = vmatprep.subr.bf16.mxu0 %v3133
    %4053 = vmatpush2.bf16.msra.mxu0 %v3132
    %4054 = vmatprep.subr.bf16.mxu0 %v3125
    %4055 = vmatpush2.bf16.msra.mxu0 %v3124
    %4056 = vmatprep.subr.bf16.mxu0 %v3117
    %4057 = vmatpush2.bf16.msra.mxu0 %v3116
    %4058 = vmatprep.subr.bf16.mxu0 %v3109
    %4059 = vmatpush2.bf16.msra.mxu0 %v3108
    %4060 = vmatprep.subr.bf16.mxu0 %v3101
    %4061 = vmatpush2.bf16.msra.mxu0 %v3100
    %4062 = vmatprep.subr.bf16.mxu0 %v3093
    %4063 = vmatpush2.bf16.msra.mxu0 %v3092
    %4064 = vmatprep.subr.bf16.mxu0 %v3085
    %4065 = vmatpush2.bf16.msra.mxu0 %v3084
    %4066 = vmatprep.subr.bf16.mxu0 %v3077
    %4067 = vmatpush2.bf16.msra.mxu0 %v3076
    %4068 = vmatprep.mubr.bf16.mxu0 %v915
    %4069 = vmatmul.mubr.bf16.gmra.mxu0 %v914
    %v4070 = vpop.f32.mrf.mxu0
    %v4071 = vadd.f32 %v1439, %v4070
    %v4072 = vpop.f32.mrf.mxu0
    %v4073 = vadd.f32 %v1443, %v4072
    %v4074 = vpop.f32.mrf.mxu0
    %v4075 = vpop.f32.mrf.mxu0
    %4076 = vdwg.mxu0
    %4077 = vmatprep.subr.bf16.mxu0 %v3197
    %4078 = vmatpush1.bf16.msra.mxu0 %v3196
    %4079 = vmatprep.subr.bf16.mxu0 %v3189
    %4080 = vmatpush1.bf16.msra.mxu0 %v3188
    %4081 = vmatprep.subr.bf16.mxu0 %v3181
    %4082 = vmatpush1.bf16.msra.mxu0 %v3180
    %4083 = vmatprep.subr.bf16.mxu0 %v3173
    %4084 = vmatpush1.bf16.msra.mxu0 %v3172
    %4085 = vmatprep.subr.bf16.mxu0 %v3165
    %4086 = vmatpush1.bf16.msra.mxu0 %v3164
    %4087 = vmatprep.subr.bf16.mxu0 %v3157
    %4088 = vmatpush1.bf16.msra.mxu0 %v3156
    %4089 = vmatprep.subr.bf16.mxu0 %v3149
    %4090 = vmatpush1.bf16.msra.mxu0 %v3148
    %4091 = vmatprep.subr.bf16.mxu0 %v3141
    %4092 = vmatpush1.bf16.msra.mxu0 %v3140
    %4093 = vmatprep.subr.bf16.mxu0 %v3261
    %4094 = vmatpush2.bf16.msra.mxu0 %v3260
    %4095 = vmatprep.subr.bf16.mxu0 %v3253
    %4096 = vmatpush2.bf16.msra.mxu0 %v3252
    %4097 = vmatprep.subr.bf16.mxu0 %v3245
    %4098 = vmatpush2.bf16.msra.mxu0 %v3244
    %4099 = vmatprep.subr.bf16.mxu0 %v3237
    %4100 = vmatpush2.bf16.msra.mxu0 %v3236
    %4101 = vmatprep.subr.bf16.mxu0 %v3229
    %4102 = vmatpush2.bf16.msra.mxu0 %v3228
    %4103 = vmatprep.subr.bf16.mxu0 %v3221
    %4104 = vmatpush2.bf16.msra.mxu0 %v3220
    %4105 = vmatprep.subr.bf16.mxu0 %v3213
    %4106 = vmatpush2.bf16.msra.mxu0 %v3212
    %4107 = vmatprep.subr.bf16.mxu0 %v3205
    %4108 = vmatpush2.bf16.msra.mxu0 %v3204
    %4109 = vmatprep.mubr.bf16.mxu0 %v917
    %4110 = vmatmul.mubr.bf16.gmra.mxu0 %v916
    %v4111 = vpop.f32.mrf.mxu0
    %v4112 = vadd.f32 %v4071, %v4111
    %v4113 = vpop.f32.mrf.mxu0
    %v4114 = vadd.f32 %v4073, %v4113
    %v4115 = vpop.f32.mrf.mxu0
    %v4116 = vpop.f32.mrf.mxu0
    %4117 = vdwg.mxu0
    %4118 = vmatprep.subr.bf16.mxu0 %v3325
    %4119 = vmatpush1.bf16.msra.mxu0 %v3324
    %4120 = vmatprep.subr.bf16.mxu0 %v3317
    %4121 = vmatpush1.bf16.msra.mxu0 %v3316
    %4122 = vmatprep.subr.bf16.mxu0 %v3309
    %4123 = vmatpush1.bf16.msra.mxu0 %v3308
    %4124 = vmatprep.subr.bf16.mxu0 %v3301
    %4125 = vmatpush1.bf16.msra.mxu0 %v3300
    %4126 = vmatprep.subr.bf16.mxu0 %v3293
    %4127 = vmatpush1.bf16.msra.mxu0 %v3292
    %4128 = vmatprep.subr.bf16.mxu0 %v3285
    %4129 = vmatpush1.bf16.msra.mxu0 %v3284
    %4130 = vmatprep.subr.bf16.mxu0 %v3277
    %4131 = vmatpush1.bf16.msra.mxu0 %v3276
    %4132 = vmatprep.subr.bf16.mxu0 %v3269
    %4133 = vmatpush1.bf16.msra.mxu0 %v3268
    %4134 = vmatprep.subr.bf16.mxu0 %v3389
    %4135 = vmatpush2.bf16.msra.mxu0 %v3388
    %4136 = vmatprep.subr.bf16.mxu0 %v3381
    %4137 = vmatpush2.bf16.msra.mxu0 %v3380
    %4138 = vmatprep.subr.bf16.mxu0 %v3373
    %4139 = vmatpush2.bf16.msra.mxu0 %v3372
    %4140 = vmatprep.subr.bf16.mxu0 %v3365
    %4141 = vmatpush2.bf16.msra.mxu0 %v3364
    %4142 = vmatprep.subr.bf16.mxu0 %v3357
    %4143 = vmatpush2.bf16.msra.mxu0 %v3356
    %4144 = vmatprep.subr.bf16.mxu0 %v3349
    %4145 = vmatpush2.bf16.msra.mxu0 %v3348
    %4146 = vmatprep.subr.bf16.mxu0 %v3341
    %4147 = vmatpush2.bf16.msra.mxu0 %v3340
    %4148 = vmatprep.subr.bf16.mxu0 %v3333
    %4149 = vmatpush2.bf16.msra.mxu0 %v3332
    %4150 = vmatprep.mubr.bf16.mxu0 %v919
    %4151 = vmatmul.mubr.bf16.gmra.mxu0 %v918
    %v4152 = vpop.f32.mrf.mxu0
    %v4153 = vadd.f32 %v4112, %v4152
    %v4154 = vpop.f32.mrf.mxu0
    %v4155 = vadd.f32 %v4114, %v4154
    %v4156 = vpop.f32.mrf.mxu0
    %v4157 = vpop.f32.mrf.mxu0
    %4158 = vdwg.mxu0
    %4159 = vmatprep.subr.bf16.mxu0 %v3453
    %4160 = vmatpush1.bf16.msra.mxu0 %v3452
    %4161 = vmatprep.subr.bf16.mxu0 %v3445
    %4162 = vmatpush1.bf16.msra.mxu0 %v3444
    %4163 = vmatprep.subr.bf16.mxu0 %v3437
    %4164 = vmatpush1.bf16.msra.mxu0 %v3436
    %4165 = vmatprep.subr.bf16.mxu0 %v3429
    %4166 = vmatpush1.bf16.msra.mxu0 %v3428
    %4167 = vmatprep.subr.bf16.mxu0 %v3421
    %4168 = vmatpush1.bf16.msra.mxu0 %v3420
    %4169 = vmatprep.subr.bf16.mxu0 %v3413
    %4170 = vmatpush1.bf16.msra.mxu0 %v3412
    %4171 = vmatprep.subr.bf16.mxu0 %v3405
    %4172 = vmatpush1.bf16.msra.mxu0 %v3404
    %4173 = vmatprep.subr.bf16.mxu0 %v3397
    %4174 = vmatpush1.bf16.msra.mxu0 %v3396
    %4175 = vmatprep.subr.bf16.mxu0 %v3517
    %4176 = vmatpush2.bf16.msra.mxu0 %v3516
    %4177 = vmatprep.subr.bf16.mxu0 %v3509
    %4178 = vmatpush2.bf16.msra.mxu0 %v3508
    %4179 = vmatprep.subr.bf16.mxu0 %v3501
    %4180 = vmatpush2.bf16.msra.mxu0 %v3500
    %4181 = vmatprep.subr.bf16.mxu0 %v3493
    %4182 = vmatpush2.bf16.msra.mxu0 %v3492
    %4183 = vmatprep.subr.bf16.mxu0 %v3485
    %4184 = vmatpush2.bf16.msra.mxu0 %v3484
    %4185 = vmatprep.subr.bf16.mxu0 %v3477
    %4186 = vmatpush2.bf16.msra.mxu0 %v3476
    %4187 = vmatprep.subr.bf16.mxu0 %v3469
    %4188 = vmatpush2.bf16.msra.mxu0 %v3468
    %4189 = vmatprep.subr.bf16.mxu0 %v3461
    %4190 = vmatpush2.bf16.msra.mxu0 %v3460
    %4191 = vmatprep.mubr.bf16.mxu0 %v921
    %4192 = vmatmul.mubr.bf16.gmra.mxu0 %v920
    %v4193 = vpop.f32.mrf.mxu0
    %v4194 = vadd.f32 %v4153, %v4193
    %v4195 = vpop.f32.mrf.mxu0
    %v4196 = vadd.f32 %v4155, %v4195
    %v4197 = vpop.f32.mrf.mxu0
    %v4198 = vpop.f32.mrf.mxu0
    %4199 = vdwg.mxu0
    %4200 = vmatprep.subr.bf16.mxu0 %v3071
    %4201 = vmatpush1.bf16.msra.mxu0 %v3070
    %4202 = vmatprep.subr.bf16.mxu0 %v3063
    %4203 = vmatpush1.bf16.msra.mxu0 %v3062
    %4204 = vmatprep.subr.bf16.mxu0 %v3055
    %4205 = vmatpush1.bf16.msra.mxu0 %v3054
    %4206 = vmatprep.subr.bf16.mxu0 %v3047
    %4207 = vmatpush1.bf16.msra.mxu0 %v3046
    %4208 = vmatprep.subr.bf16.mxu0 %v3039
    %4209 = vmatpush1.bf16.msra.mxu0 %v3038
    %4210 = vmatprep.subr.bf16.mxu0 %v3031
    %4211 = vmatpush1.bf16.msra.mxu0 %v3030
    %4212 = vmatprep.subr.bf16.mxu0 %v3023
    %4213 = vmatpush1.bf16.msra.mxu0 %v3022
    %4214 = vmatprep.subr.bf16.mxu0 %v3015
    %4215 = vmatpush1.bf16.msra.mxu0 %v3014
    %4216 = vmatprep.subr.bf16.mxu0 %v3135
    %4217 = vmatpush2.bf16.msra.mxu0 %v3134
    %4218 = vmatprep.subr.bf16.mxu0 %v3127
    %4219 = vmatpush2.bf16.msra.mxu0 %v3126
    %4220 = vmatprep.subr.bf16.mxu0 %v3119
    %4221 = vmatpush2.bf16.msra.mxu0 %v3118
    %4222 = vmatprep.subr.bf16.mxu0 %v3111
    %4223 = vmatpush2.bf16.msra.mxu0 %v3110
    %4224 = vmatprep.subr.bf16.mxu0 %v3103
    %4225 = vmatpush2.bf16.msra.mxu0 %v3102
    %4226 = vmatprep.subr.bf16.mxu0 %v3095
    %4227 = vmatpush2.bf16.msra.mxu0 %v3094
    %4228 = vmatprep.subr.bf16.mxu0 %v3087
    %4229 = vmatpush2.bf16.msra.mxu0 %v3086
    %4230 = vmatprep.subr.bf16.mxu0 %v3079
    %4231 = vmatpush2.bf16.msra.mxu0 %v3078
    %4232 = vmatprep.mubr.bf16.mxu0 %v915
    %4233 = vmatmul.mubr.bf16.gmra.mxu0 %v914
    %v4234 = vpop.f32.mrf.mxu0
    %v4235 = vadd.f32 %v1447, %v4234
    %v4236 = vpop.f32.mrf.mxu0
    %v4237 = vadd.f32 %v1451, %v4236
    %v4238 = vpop.f32.mrf.mxu0
    %v4239 = vpop.f32.mrf.mxu0
    %4240 = vdwg.mxu0
    %4241 = vmatprep.subr.bf16.mxu0 %v3199
    %4242 = vmatpush1.bf16.msra.mxu0 %v3198
    %4243 = vmatprep.subr.bf16.mxu0 %v3191
    %4244 = vmatpush1.bf16.msra.mxu0 %v3190
    %4245 = vmatprep.subr.bf16.mxu0 %v3183
    %4246 = vmatpush1.bf16.msra.mxu0 %v3182
    %4247 = vmatprep.subr.bf16.mxu0 %v3175
    %4248 = vmatpush1.bf16.msra.mxu0 %v3174
    %4249 = vmatprep.subr.bf16.mxu0 %v3167
    %4250 = vmatpush1.bf16.msra.mxu0 %v3166
    %4251 = vmatprep.subr.bf16.mxu0 %v3159
    %4252 = vmatpush1.bf16.msra.mxu0 %v3158
    %4253 = vmatprep.subr.bf16.mxu0 %v3151
    %4254 = vmatpush1.bf16.msra.mxu0 %v3150
    %4255 = vmatprep.subr.bf16.mxu0 %v3143
    %4256 = vmatpush1.bf16.msra.mxu0 %v3142
    %4257 = vmatprep.subr.bf16.mxu0 %v3263
    %4258 = vmatpush2.bf16.msra.mxu0 %v3262
    %4259 = vmatprep.subr.bf16.mxu0 %v3255
    %4260 = vmatpush2.bf16.msra.mxu0 %v3254
    %4261 = vmatprep.subr.bf16.mxu0 %v3247
    %4262 = vmatpush2.bf16.msra.mxu0 %v3246
    %4263 = vmatprep.subr.bf16.mxu0 %v3239
    %4264 = vmatpush2.bf16.msra.mxu0 %v3238
    %4265 = vmatprep.subr.bf16.mxu0 %v3231
    %4266 = vmatpush2.bf16.msra.mxu0 %v3230
    %4267 = vmatprep.subr.bf16.mxu0 %v3223
    %4268 = vmatpush2.bf16.msra.mxu0 %v3222
    %4269 = vmatprep.subr.bf16.mxu0 %v3215
    %4270 = vmatpush2.bf16.msra.mxu0 %v3214
    %4271 = vmatprep.subr.bf16.mxu0 %v3207
    %4272 = vmatpush2.bf16.msra.mxu0 %v3206
    %4273 = vmatprep.mubr.bf16.mxu0 %v917
    %4274 = vmatmul.mubr.bf16.gmra.mxu0 %v916
    %v4275 = vpop.f32.mrf.mxu0
    %v4276 = vadd.f32 %v4235, %v4275
    %v4277 = vpop.f32.mrf.mxu0
    %v4278 = vadd.f32 %v4237, %v4277
    %v4279 = vpop.f32.mrf.mxu0
    %v4280 = vpop.f32.mrf.mxu0
    %4281 = vdwg.mxu0
    %4282 = vmatprep.subr.bf16.mxu0 %v3327
    %4283 = vmatpush1.bf16.msra.mxu0 %v3326
    %4284 = vmatprep.subr.bf16.mxu0 %v3319
    %4285 = vmatpush1.bf16.msra.mxu0 %v3318
    %4286 = vmatprep.subr.bf16.mxu0 %v3311
    %4287 = vmatpush1.bf16.msra.mxu0 %v3310
    %4288 = vmatprep.subr.bf16.mxu0 %v3303
    %4289 = vmatpush1.bf16.msra.mxu0 %v3302
    %4290 = vmatprep.subr.bf16.mxu0 %v3295
    %4291 = vmatpush1.bf16.msra.mxu0 %v3294
    %4292 = vmatprep.subr.bf16.mxu0 %v3287
    %4293 = vmatpush1.bf16.msra.mxu0 %v3286
    %4294 = vmatprep.subr.bf16.mxu0 %v3279
    %4295 = vmatpush1.bf16.msra.mxu0 %v3278
    %4296 = vmatprep.subr.bf16.mxu0 %v3271
    %4297 = vmatpush1.bf16.msra.mxu0 %v3270
    %4298 = vmatprep.subr.bf16.mxu0 %v3391
    %4299 = vmatpush2.bf16.msra.mxu0 %v3390
    %4300 = vmatprep.subr.bf16.mxu0 %v3383
    %4301 = vmatpush2.bf16.msra.mxu0 %v3382
    %4302 = vmatprep.subr.bf16.mxu0 %v3375
    %4303 = vmatpush2.bf16.msra.mxu0 %v3374
    %4304 = vmatprep.subr.bf16.mxu0 %v3367
    %4305 = vmatpush2.bf16.msra.mxu0 %v3366
    %4306 = vmatprep.subr.bf16.mxu0 %v3359
    %4307 = vmatpush2.bf16.msra.mxu0 %v3358
    %4308 = vmatprep.subr.bf16.mxu0 %v3351
    %4309 = vmatpush2.bf16.msra.mxu0 %v3350
    %4310 = vmatprep.subr.bf16.mxu0 %v3343
    %4311 = vmatpush2.bf16.msra.mxu0 %v3342
    %4312 = vmatprep.subr.bf16.mxu0 %v3335
    %4313 = vmatpush2.bf16.msra.mxu0 %v3334
    %4314 = vmatprep.mubr.bf16.mxu0 %v919
    %4315 = vmatmul.mubr.bf16.gmra.mxu0 %v918
    %v4316 = vpop.f32.mrf.mxu0
    %v4317 = vadd.f32 %v4276, %v4316
    %v4318 = vpop.f32.mrf.mxu0
    %v4319 = vadd.f32 %v4278, %v4318
    %v4320 = vpop.f32.mrf.mxu0
    %v4321 = vpop.f32.mrf.mxu0
    %4322 = vdwg.mxu0
    %4323 = vmatprep.subr.bf16.mxu0 %v3455
    %4324 = vmatpush1.bf16.msra.mxu0 %v3454
    %4325 = vmatprep.subr.bf16.mxu0 %v3447
    %4326 = vmatpush1.bf16.msra.mxu0 %v3446
    %4327 = vmatprep.subr.bf16.mxu0 %v3439
    %4328 = vmatpush1.bf16.msra.mxu0 %v3438
    %4329 = vmatprep.subr.bf16.mxu0 %v3431
    %4330 = vmatpush1.bf16.msra.mxu0 %v3430
    %4331 = vmatprep.subr.bf16.mxu0 %v3423
    %4332 = vmatpush1.bf16.msra.mxu0 %v3422
    %4333 = vmatprep.subr.bf16.mxu0 %v3415
    %4334 = vmatpush1.bf16.msra.mxu0 %v3414
    %4335 = vmatprep.subr.bf16.mxu0 %v3407
    %4336 = vmatpush1.bf16.msra.mxu0 %v3406
    %4337 = vmatprep.subr.bf16.mxu0 %v3399
    %4338 = vmatpush1.bf16.msra.mxu0 %v3398
    %4339 = vmatprep.subr.bf16.mxu0 %v3519
    %4340 = vmatpush2.bf16.msra.mxu0 %v3518
    %4341 = vmatprep.subr.bf16.mxu0 %v3511
    %4342 = vmatpush2.bf16.msra.mxu0 %v3510
    %4343 = vmatprep.subr.bf16.mxu0 %v3503
    %4344 = vmatpush2.bf16.msra.mxu0 %v3502
    %4345 = vmatprep.subr.bf16.mxu0 %v3495
    %4346 = vmatpush2.bf16.msra.mxu0 %v3494
    %4347 = vmatprep.subr.bf16.mxu0 %v3487
    %4348 = vmatpush2.bf16.msra.mxu0 %v3486
    %4349 = vmatprep.subr.bf16.mxu0 %v3479
    %4350 = vmatpush2.bf16.msra.mxu0 %v3478
    %4351 = vmatprep.subr.bf16.mxu0 %v3471
    %4352 = vmatpush2.bf16.msra.mxu0 %v3470
    %4353 = vmatprep.subr.bf16.mxu0 %v3463
    %4354 = vmatpush2.bf16.msra.mxu0 %v3462
    %4355 = vmatprep.mubr.bf16.mxu0 %v921
    %4356 = vmatmul.mubr.bf16.gmra.mxu0 %v920
    %v4357 = vpop.f32.mrf.mxu0
    %v4358 = vadd.f32 %v4317, %v4357
    %v4359 = vpop.f32.mrf.mxu0
    %v4360 = vadd.f32 %v4319, %v4359
    %v4361 = vpop.f32.mrf.mxu0
    %v4362 = vpop.f32.mrf.mxu0
    %4363 = vdwg.mxu0
    %4364 = vmatprep.subr.bf16.mxu0 %v3073
    %4365 = vmatpush1.bf16.msra.mxu0 %v3072
    %4366 = vmatprep.subr.bf16.mxu0 %v3065
    %4367 = vmatpush1.bf16.msra.mxu0 %v3064
    %4368 = vmatprep.subr.bf16.mxu0 %v3057
    %4369 = vmatpush1.bf16.msra.mxu0 %v3056
    %4370 = vmatprep.subr.bf16.mxu0 %v3049
    %4371 = vmatpush1.bf16.msra.mxu0 %v3048
    %4372 = vmatprep.subr.bf16.mxu0 %v3041
    %4373 = vmatpush1.bf16.msra.mxu0 %v3040
    %4374 = vmatprep.subr.bf16.mxu0 %v3033
    %4375 = vmatpush1.bf16.msra.mxu0 %v3032
    %4376 = vmatprep.subr.bf16.mxu0 %v3025
    %4377 = vmatpush1.bf16.msra.mxu0 %v3024
    %4378 = vmatprep.subr.bf16.mxu0 %v3017
    %4379 = vmatpush1.bf16.msra.mxu0 %v3016
    %4380 = vmatprep.subr.bf16.mxu0 %v3137
    %4381 = vmatpush2.bf16.msra.mxu0 %v3136
    %4382 = vmatprep.subr.bf16.mxu0 %v3129
    %4383 = vmatpush2.bf16.msra.mxu0 %v3128
    %4384 = vmatprep.subr.bf16.mxu0 %v3121
    %4385 = vmatpush2.bf16.msra.mxu0 %v3120
    %4386 = vmatprep.subr.bf16.mxu0 %v3113
    %4387 = vmatpush2.bf16.msra.mxu0 %v3112
    %4388 = vmatprep.subr.bf16.mxu0 %v3105
    %4389 = vmatpush2.bf16.msra.mxu0 %v3104
    %4390 = vmatprep.subr.bf16.mxu0 %v3097
    %4391 = vmatpush2.bf16.msra.mxu0 %v3096
    %4392 = vmatprep.subr.bf16.mxu0 %v3089
    %4393 = vmatpush2.bf16.msra.mxu0 %v3088
    %4394 = vmatprep.subr.bf16.mxu0 %v3081
    %4395 = vmatpush2.bf16.msra.mxu0 %v3080
    %4396 = vmatprep.mubr.bf16.mxu0 %v915
    %4397 = vmatmul.mubr.bf16.gmra.mxu0 %v914
    %v4398 = vpop.f32.mrf.mxu0
    %v4399 = vadd.f32 %v1455, %v4398
    %v4400 = vpop.f32.mrf.mxu0
    %v4401 = vadd.f32 %v1459, %v4400
    %v4402 = vpop.f32.mrf.mxu0
    %v4403 = vpop.f32.mrf.mxu0
    %4404 = vdwg.mxu0
    %4405 = vmatprep.subr.bf16.mxu0 %v3201
    %4406 = vmatpush1.bf16.msra.mxu0 %v3200
    %4407 = vmatprep.subr.bf16.mxu0 %v3193
    %4408 = vmatpush1.bf16.msra.mxu0 %v3192
    %4409 = vmatprep.subr.bf16.mxu0 %v3185
    %4410 = vmatpush1.bf16.msra.mxu0 %v3184
    %4411 = vmatprep.subr.bf16.mxu0 %v3177
    %4412 = vmatpush1.bf16.msra.mxu0 %v3176
    %4413 = vmatprep.subr.bf16.mxu0 %v3169
    %4414 = vmatpush1.bf16.msra.mxu0 %v3168
    %4415 = vmatprep.subr.bf16.mxu0 %v3161
    %4416 = vmatpush1.bf16.msra.mxu0 %v3160
    %4417 = vmatprep.subr.bf16.mxu0 %v3153
    %4418 = vmatpush1.bf16.msra.mxu0 %v3152
    %4419 = vmatprep.subr.bf16.mxu0 %v3145
    %4420 = vmatpush1.bf16.msra.mxu0 %v3144
    %4421 = vmatprep.subr.bf16.mxu0 %v3265
    %4422 = vmatpush2.bf16.msra.mxu0 %v3264
    %4423 = vmatprep.subr.bf16.mxu0 %v3257
    %4424 = vmatpush2.bf16.msra.mxu0 %v3256
    %4425 = vmatprep.subr.bf16.mxu0 %v3249
    %4426 = vmatpush2.bf16.msra.mxu0 %v3248
    %4427 = vmatprep.subr.bf16.mxu0 %v3241
    %4428 = vmatpush2.bf16.msra.mxu0 %v3240
    %4429 = vmatprep.subr.bf16.mxu0 %v3233
    %4430 = vmatpush2.bf16.msra.mxu0 %v3232
    %4431 = vmatprep.subr.bf16.mxu0 %v3225
    %4432 = vmatpush2.bf16.msra.mxu0 %v3224
    %4433 = vmatprep.subr.bf16.mxu0 %v3217
    %4434 = vmatpush2.bf16.msra.mxu0 %v3216
    %4435 = vmatprep.subr.bf16.mxu0 %v3209
    %4436 = vmatpush2.bf16.msra.mxu0 %v3208
    %4437 = vmatprep.mubr.bf16.mxu0 %v917
    %4438 = vmatmul.mubr.bf16.gmra.mxu0 %v916
    %v4439 = vpop.f32.mrf.mxu0
    %v4440 = vadd.f32 %v4399, %v4439
    %v4441 = vpop.f32.mrf.mxu0
    %v4442 = vadd.f32 %v4401, %v4441
    %v4443 = vpop.f32.mrf.mxu0
    %v4444 = vpop.f32.mrf.mxu0
    %4445 = vdwg.mxu0
    %4446 = vmatprep.subr.bf16.mxu0 %v3329
    %4447 = vmatpush1.bf16.msra.mxu0 %v3328
    %4448 = vmatprep.subr.bf16.mxu0 %v3321
    %4449 = vmatpush1.bf16.msra.mxu0 %v3320
    %4450 = vmatprep.subr.bf16.mxu0 %v3313
    %4451 = vmatpush1.bf16.msra.mxu0 %v3312
    %4452 = vmatprep.subr.bf16.mxu0 %v3305
    %4453 = vmatpush1.bf16.msra.mxu0 %v3304
    %4454 = vmatprep.subr.bf16.mxu0 %v3297
    %4455 = vmatpush1.bf16.msra.mxu0 %v3296
    %4456 = vmatprep.subr.bf16.mxu0 %v3289
    %4457 = vmatpush1.bf16.msra.mxu0 %v3288
    %4458 = vmatprep.subr.bf16.mxu0 %v3281
    %4459 = vmatpush1.bf16.msra.mxu0 %v3280
    %4460 = vmatprep.subr.bf16.mxu0 %v3273
    %4461 = vmatpush1.bf16.msra.mxu0 %v3272
    %4462 = vmatprep.subr.bf16.mxu0 %v3393
    %4463 = vmatpush2.bf16.msra.mxu0 %v3392
    %4464 = vmatprep.subr.bf16.mxu0 %v3385
    %4465 = vmatpush2.bf16.msra.mxu0 %v3384
    %4466 = vmatprep.subr.bf16.mxu0 %v3377
    %4467 = vmatpush2.bf16.msra.mxu0 %v3376
    %4468 = vmatprep.subr.bf16.mxu0 %v3369
    %4469 = vmatpush2.bf16.msra.mxu0 %v3368
    %4470 = vmatprep.subr.bf16.mxu0 %v3361
    %4471 = vmatpush2.bf16.msra.mxu0 %v3360
    %4472 = vmatprep.subr.bf16.mxu0 %v3353
    %4473 = vmatpush2.bf16.msra.mxu0 %v3352
    %4474 = vmatprep.subr.bf16.mxu0 %v3345
    %4475 = vmatpush2.bf16.msra.mxu0 %v3344
    %4476 = vmatprep.subr.bf16.mxu0 %v3337
    %4477 = vmatpush2.bf16.msra.mxu0 %v3336
    %4478 = vmatprep.mubr.bf16.mxu0 %v919
    %4479 = vmatmul.mubr.bf16.gmra.mxu0 %v918
    %v4480 = vpop.f32.mrf.mxu0
    %v4481 = vadd.f32 %v4440, %v4480
    %v4482 = vpop.f32.mrf.mxu0
    %v4483 = vadd.f32 %v4442, %v4482
    %v4484 = vpop.f32.mrf.mxu0
    %v4485 = vpop.f32.mrf.mxu0
    %4486 = vdwg.mxu0
    %4487 = vmatprep.subr.bf16.mxu0 %v3457
    %4488 = vmatpush1.bf16.msra.mxu0 %v3456
    %4489 = vmatprep.subr.bf16.mxu0 %v3449
    %4490 = vmatpush1.bf16.msra.mxu0 %v3448
    %4491 = vmatprep.subr.bf16.mxu0 %v3441
    %4492 = vmatpush1.bf16.msra.mxu0 %v3440
    %4493 = vmatprep.subr.bf16.mxu0 %v3433
    %4494 = vmatpush1.bf16.msra.mxu0 %v3432
    %4495 = vmatprep.subr.bf16.mxu0 %v3425
    %4496 = vmatpush1.bf16.msra.mxu0 %v3424
    %4497 = vmatprep.subr.bf16.mxu0 %v3417
    %4498 = vmatpush1.bf16.msra.mxu0 %v3416
    %4499 = vmatprep.subr.bf16.mxu0 %v3409
    %4500 = vmatpush1.bf16.msra.mxu0 %v3408
    %4501 = vmatprep.subr.bf16.mxu0 %v3401
    %4502 = vmatpush1.bf16.msra.mxu0 %v3400
    %4503 = vmatprep.subr.bf16.mxu0 %v3521
    %4504 = vmatpush2.bf16.msra.mxu0 %v3520
    %4505 = vmatprep.subr.bf16.mxu0 %v3513
    %4506 = vmatpush2.bf16.msra.mxu0 %v3512
    %4507 = vmatprep.subr.bf16.mxu0 %v3505
    %4508 = vmatpush2.bf16.msra.mxu0 %v3504
    %4509 = vmatprep.subr.bf16.mxu0 %v3497
    %4510 = vmatpush2.bf16.msra.mxu0 %v3496
    %4511 = vmatprep.subr.bf16.mxu0 %v3489
    %4512 = vmatpush2.bf16.msra.mxu0 %v3488
    %4513 = vmatprep.subr.bf16.mxu0 %v3481
    %4514 = vmatpush2.bf16.msra.mxu0 %v3480
    %4515 = vmatprep.subr.bf16.mxu0 %v3473
    %4516 = vmatpush2.bf16.msra.mxu0 %v3472
    %4517 = vmatprep.subr.bf16.mxu0 %v3465
    %4518 = vmatpush2.bf16.msra.mxu0 %v3464
    %4519 = vmatprep.mubr.bf16.mxu0 %v921
    %4520 = vmatmul.mubr.bf16.gmra.mxu0 %v920
    %v4521 = vpop.f32.mrf.mxu0
    %v4522 = vadd.f32 %v4481, %v4521
    %v4523 = vpop.f32.mrf.mxu0
    %v4524 = vadd.f32 %v4483, %v4523
    %v4525 = vpop.f32.mrf.mxu0
    %v4526 = vpop.f32.mrf.mxu0
    %4527 = vdwg.mxu0
    %4528 = vmatprep.subr.bf16.mxu0 %v3075
    %4529 = vmatpush1.bf16.msra.mxu0 %v3074
    %4530 = vmatprep.subr.bf16.mxu0 %v3067
    %4531 = vmatpush1.bf16.msra.mxu0 %v3066
    %4532 = vmatprep.subr.bf16.mxu0 %v3059
    %4533 = vmatpush1.bf16.msra.mxu0 %v3058
    %4534 = vmatprep.subr.bf16.mxu0 %v3051
    %4535 = vmatpush1.bf16.msra.mxu0 %v3050
    %4536 = vmatprep.subr.bf16.mxu0 %v3043
    %4537 = vmatpush1.bf16.msra.mxu0 %v3042
    %4538 = vmatprep.subr.bf16.mxu0 %v3035
    %4539 = vmatpush1.bf16.msra.mxu0 %v3034
    %4540 = vmatprep.subr.bf16.mxu0 %v3027
    %4541 = vmatpush1.bf16.msra.mxu0 %v3026
    %4542 = vmatprep.subr.bf16.mxu0 %v3019
    %4543 = vmatpush1.bf16.msra.mxu0 %v3018
    %4544 = vmatprep.subr.bf16.mxu0 %v3139
    %4545 = vmatpush2.bf16.msra.mxu0 %v3138
    %4546 = vmatprep.subr.bf16.mxu0 %v3131
    %4547 = vmatpush2.bf16.msra.mxu0 %v3130
    %4548 = vmatprep.subr.bf16.mxu0 %v3123
    %4549 = vmatpush2.bf16.msra.mxu0 %v3122
    %4550 = vmatprep.subr.bf16.mxu0 %v3115
    %4551 = vmatpush2.bf16.msra.mxu0 %v3114
    %4552 = vmatprep.subr.bf16.mxu0 %v3107
    %4553 = vmatpush2.bf16.msra.mxu0 %v3106
    %4554 = vmatprep.subr.bf16.mxu0 %v3099
    %4555 = vmatpush2.bf16.msra.mxu0 %v3098
    %4556 = vmatprep.subr.bf16.mxu0 %v3091
    %4557 = vmatpush2.bf16.msra.mxu0 %v3090
    %4558 = vmatprep.subr.bf16.mxu0 %v3083
    %4559 = vmatpush2.bf16.msra.mxu0 %v3082
    %4560 = vmatprep.mubr.bf16.mxu0 %v915
    %4561 = vmatmul.mubr.bf16.gmra.mxu0 %v914
    %v4562 = vpop.f32.mrf.mxu0
    %v4563 = vadd.f32 %v1463, %v4562
    %v4564 = vpop.f32.mrf.mxu0
    %v4565 = vadd.f32 %v1467, %v4564
    %v4566 = vpop.f32.mrf.mxu0
    %v4567 = vpop.f32.mrf.mxu0
    %4568 = vdwg.mxu0
    %4569 = vmatprep.subr.bf16.mxu0 %v3203
    %4570 = vmatpush1.bf16.msra.mxu0 %v3202
    %4571 = vmatprep.subr.bf16.mxu0 %v3195
    %4572 = vmatpush1.bf16.msra.mxu0 %v3194
    %4573 = vmatprep.subr.bf16.mxu0 %v3187
    %4574 = vmatpush1.bf16.msra.mxu0 %v3186
    %4575 = vmatprep.subr.bf16.mxu0 %v3179
    %4576 = vmatpush1.bf16.msra.mxu0 %v3178
    %4577 = vmatprep.subr.bf16.mxu0 %v3171
    %4578 = vmatpush1.bf16.msra.mxu0 %v3170
    %4579 = vmatprep.subr.bf16.mxu0 %v3163
    %4580 = vmatpush1.bf16.msra.mxu0 %v3162
    %4581 = vmatprep.subr.bf16.mxu0 %v3155
    %4582 = vmatpush1.bf16.msra.mxu0 %v3154
    %4583 = vmatprep.subr.bf16.mxu0 %v3147
    %4584 = vmatpush1.bf16.msra.mxu0 %v3146
    %4585 = vmatprep.subr.bf16.mxu0 %v3267
    %4586 = vmatpush2.bf16.msra.mxu0 %v3266
    %4587 = vmatprep.subr.bf16.mxu0 %v3259
    %4588 = vmatpush2.bf16.msra.mxu0 %v3258
    %4589 = vmatprep.subr.bf16.mxu0 %v3251
    %4590 = vmatpush2.bf16.msra.mxu0 %v3250
    %4591 = vmatprep.subr.bf16.mxu0 %v3243
    %4592 = vmatpush2.bf16.msra.mxu0 %v3242
    %4593 = vmatprep.subr.bf16.mxu0 %v3235
    %4594 = vmatpush2.bf16.msra.mxu0 %v3234
    %4595 = vmatprep.subr.bf16.mxu0 %v3227
    %4596 = vmatpush2.bf16.msra.mxu0 %v3226
    %4597 = vmatprep.subr.bf16.mxu0 %v3219
    %4598 = vmatpush2.bf16.msra.mxu0 %v3218
    %4599 = vmatprep.subr.bf16.mxu0 %v3211
    %4600 = vmatpush2.bf16.msra.mxu0 %v3210
    %4601 = vmatprep.mubr.bf16.mxu0 %v917
    %4602 = vmatmul.mubr.bf16.gmra.mxu0 %v916
    %v4603 = vpop.f32.mrf.mxu0
    %v4604 = vadd.f32 %v4563, %v4603
    %v4605 = vpop.f32.mrf.mxu0
    %v4606 = vadd.f32 %v4565, %v4605
    %v4607 = vpop.f32.mrf.mxu0
    %v4608 = vpop.f32.mrf.mxu0
    %4609 = vdwg.mxu0
    %4610 = vmatprep.subr.bf16.mxu0 %v3331
    %4611 = vmatpush1.bf16.msra.mxu0 %v3330
    %4612 = vmatprep.subr.bf16.mxu0 %v3323
    %4613 = vmatpush1.bf16.msra.mxu0 %v3322
    %4614 = vmatprep.subr.bf16.mxu0 %v3315
    %4615 = vmatpush1.bf16.msra.mxu0 %v3314
    %4616 = vmatprep.subr.bf16.mxu0 %v3307
    %4617 = vmatpush1.bf16.msra.mxu0 %v3306
    %4618 = vmatprep.subr.bf16.mxu0 %v3299
    %4619 = vmatpush1.bf16.msra.mxu0 %v3298
    %4620 = vmatprep.subr.bf16.mxu0 %v3291
    %4621 = vmatpush1.bf16.msra.mxu0 %v3290
    %4622 = vmatprep.subr.bf16.mxu0 %v3283
    %4623 = vmatpush1.bf16.msra.mxu0 %v3282
    %4624 = vmatprep.subr.bf16.mxu0 %v3275
    %4625 = vmatpush1.bf16.msra.mxu0 %v3274
    %4626 = vmatprep.subr.bf16.mxu0 %v3395
    %4627 = vmatpush2.bf16.msra.mxu0 %v3394
    %4628 = vmatprep.subr.bf16.mxu0 %v3387
    %4629 = vmatpush2.bf16.msra.mxu0 %v3386
    %4630 = vmatprep.subr.bf16.mxu0 %v3379
    %4631 = vmatpush2.bf16.msra.mxu0 %v3378
    %4632 = vmatprep.subr.bf16.mxu0 %v3371
    %4633 = vmatpush2.bf16.msra.mxu0 %v3370
    %4634 = vmatprep.subr.bf16.mxu0 %v3363
    %4635 = vmatpush2.bf16.msra.mxu0 %v3362
    %4636 = vmatprep.subr.bf16.mxu0 %v3355
    %4637 = vmatpush2.bf16.msra.mxu0 %v3354
    %4638 = vmatprep.subr.bf16.mxu0 %v3347
    %4639 = vmatpush2.bf16.msra.mxu0 %v3346
    %4640 = vmatprep.subr.bf16.mxu0 %v3339
    %4641 = vmatpush2.bf16.msra.mxu0 %v3338
    %4642 = vmatprep.mubr.bf16.mxu0 %v919
    %4643 = vmatmul.mubr.bf16.gmra.mxu0 %v918
    %v4644 = vpop.f32.mrf.mxu0
    %v4645 = vadd.f32 %v4604, %v4644
    %v4646 = vpop.f32.mrf.mxu0
    %v4647 = vadd.f32 %v4606, %v4646
    %v4648 = vpop.f32.mrf.mxu0
    %v4649 = vpop.f32.mrf.mxu0
    %4650 = vdwg.mxu0
    %4651 = vmatprep.subr.bf16.mxu0 %v3459
    %4652 = vmatpush1.bf16.msra.mxu0 %v3458
    %4653 = vmatprep.subr.bf16.mxu0 %v3451
    %4654 = vmatpush1.bf16.msra.mxu0 %v3450
    %4655 = vmatprep.subr.bf16.mxu0 %v3443
    %4656 = vmatpush1.bf16.msra.mxu0 %v3442
    %4657 = vmatprep.subr.bf16.mxu0 %v3435
    %4658 = vmatpush1.bf16.msra.mxu0 %v3434
    %4659 = vmatprep.subr.bf16.mxu0 %v3427
    %4660 = vmatpush1.bf16.msra.mxu0 %v3426
    %4661 = vmatprep.subr.bf16.mxu0 %v3419
    %4662 = vmatpush1.bf16.msra.mxu0 %v3418
    %4663 = vmatprep.subr.bf16.mxu0 %v3411
    %4664 = vmatpush1.bf16.msra.mxu0 %v3410
    %4665 = vmatprep.subr.bf16.mxu0 %v3403
    %4666 = vmatpush1.bf16.msra.mxu0 %v3402
    %4667 = vmatprep.subr.bf16.mxu0 %v3523
    %4668 = vmatpush2.bf16.msra.mxu0 %v3522
    %4669 = vmatprep.subr.bf16.mxu0 %v3515
    %4670 = vmatpush2.bf16.msra.mxu0 %v3514
    %4671 = vmatprep.subr.bf16.mxu0 %v3507
    %4672 = vmatpush2.bf16.msra.mxu0 %v3506
    %4673 = vmatprep.subr.bf16.mxu0 %v3499
    %4674 = vmatpush2.bf16.msra.mxu0 %v3498
    %4675 = vmatprep.subr.bf16.mxu0 %v3491
    %4676 = vmatpush2.bf16.msra.mxu0 %v3490
    %4677 = vmatprep.subr.bf16.mxu0 %v3483
    %4678 = vmatpush2.bf16.msra.mxu0 %v3482
    %4679 = vmatprep.subr.bf16.mxu0 %v3475
    %4680 = vmatpush2.bf16.msra.mxu0 %v3474
    %4681 = vmatprep.subr.bf16.mxu0 %v3467
    %4682 = vmatpush2.bf16.msra.mxu0 %v3466
    %4683 = vmatprep.mubr.bf16.mxu0 %v921
    %4684 = vmatmul.mubr.bf16.gmra.mxu0 %v920
    %v4685 = vpop.f32.mrf.mxu0
    %v4686 = vadd.f32 %v4645, %v4685
    %v4687 = vpop.f32.mrf.mxu0
    %v4688 = vadd.f32 %v4647, %v4687
    %v4689 = vpop.f32.mrf.mxu0
    %v4690 = vpop.f32.mrf.mxu0
    %4691 = vdwg.mxu0
    %v4692 = vmax.f32 %v4194, 0.0
    %v4693 = vmax.f32 %v4196, 0.0
    %v4694 = vmax.f32 %v4358, 0.0
    %v4695 = vmax.f32 %v4360, 0.0
    %v4696 = vmax.f32 %v4522, 0.0
    %v4697 = vmax.f32 %v4524, 0.0
    %v4698 = vmax.f32 %v4686, 0.0
    %v4699 = vmax.f32 %v4688, 0.0
    %v4700 = vpack.c.bf16 %v4692, %v4692
    %v4701 = vpack.c.bf16 %v4693, %v4693
    %v4702 = vpack.c.bf16 %v4694, %v4694
    %v4703 = vpack.c.bf16 %v4695, %v4695
    %v4704 = vpack.c.bf16 %v4696, %v4696
    %v4705 = vpack.c.bf16 %v4697, %v4697
    %v4706 = vpack.c.bf16 %v4698, %v4698
    %v4707 = vpack.c.bf16 %v4699, %v4699
    %v4708 = vld [vmem:[#allocation16] sm:$0xff]
    %v4709 = vld [vmem:[#allocation16 + $0x8] sm:$0xff]
    %v4710 = vld [vmem:[#allocation16 + $0x10] sm:$0xff]
    %v4711 = vld [vmem:[#allocation16 + $0x18] sm:$0xff]
    %v4712 = vld [vmem:[#allocation16 + $0x20] sm:$0xff]
    %v4713 = vld [vmem:[#allocation16 + $0x28] sm:$0xff]
    %v4714 = vld [vmem:[#allocation16 + $0x30] sm:$0xff]
    %v4715 = vld [vmem:[#allocation16 + $0x38] sm:$0xff]
    %v4716 = vld [vmem:[#allocation16 + $0x40] sm:$0xff]
    %v4717 = vld [vmem:[#allocation16 + $0x48] sm:$0xff]
    %v4718 = vld [vmem:[#allocation16 + $0x50] sm:$0xff]
    %v4719 = vld [vmem:[#allocation16 + $0x58] sm:$0xff]
    %v4720 = vld [vmem:[#allocation16 + $0x60] sm:$0xff]
    %v4721 = vld [vmem:[#allocation16 + $0x68] sm:$0xff]
    %v4722 = vld [vmem:[#allocation16 + $0x70] sm:$0xff]
    %v4723 = vld [vmem:[#allocation16 + $0x78] sm:$0xff]
    %v4724 = vld [vmem:[#allocation16 + $0x80] sm:$0xff]
    %v4725 = vld [vmem:[#allocation16 + $0x88] sm:$0xff]
    %v4726 = vld [vmem:[#allocation16 + $0x90] sm:$0xff]
    %v4727 = vld [vmem:[#allocation16 + $0x98] sm:$0xff]
    %v4728 = vld [vmem:[#allocation16 + $0xa0] sm:$0xff]
    %v4729 = vld [vmem:[#allocation16 + $0xa8] sm:$0xff]
    %v4730 = vld [vmem:[#allocation16 + $0xb0] sm:$0xff]
    %v4731 = vld [vmem:[#allocation16 + $0xb8] sm:$0xff]
    %v4732 = vld [vmem:[#allocation16 + $0xc0] sm:$0xff]
    %v4733 = vld [vmem:[#allocation16 + $0xc8] sm:$0xff]
    %v4734 = vld [vmem:[#allocation16 + $0xd0] sm:$0xff]
    %v4735 = vld [vmem:[#allocation16 + $0xd8] sm:$0xff]
    %v4736 = vld [vmem:[#allocation16 + $0xe0] sm:$0xff]
    %v4737 = vld [vmem:[#allocation16 + $0xe8] sm:$0xff]
    %v4738 = vld [vmem:[#allocation16 + $0xf0] sm:$0xff]
    %v4739 = vld [vmem:[#allocation16 + $0xf8] sm:$0xff]
    %v4740 = vld [vmem:[#allocation16 + $0x100] sm:$0xff]
    %v4741 = vld [vmem:[#allocation16 + $0x108] sm:$0xff]
    %v4742 = vld [vmem:[#allocation16 + $0x110] sm:$0xff]
    %v4743 = vld [vmem:[#allocation16 + $0x118] sm:$0xff]
    %v4744 = vld [vmem:[#allocation16 + $0x120] sm:$0xff]
    %v4745 = vld [vmem:[#allocation16 + $0x128] sm:$0xff]
    %v4746 = vld [vmem:[#allocation16 + $0x130] sm:$0xff]
    %v4747 = vld [vmem:[#allocation16 + $0x138] sm:$0xff]
    %v4748 = vld [vmem:[#allocation16 + $0x140] sm:$0xff]
    %v4749 = vld [vmem:[#allocation16 + $0x148] sm:$0xff]
    %v4750 = vld [vmem:[#allocation16 + $0x150] sm:$0xff]
    %v4751 = vld [vmem:[#allocation16 + $0x158] sm:$0xff]
    %v4752 = vld [vmem:[#allocation16 + $0x160] sm:$0xff]
    %v4753 = vld [vmem:[#allocation16 + $0x168] sm:$0xff]
    %v4754 = vld [vmem:[#allocation16 + $0x170] sm:$0xff]
    %v4755 = vld [vmem:[#allocation16 + $0x178] sm:$0xff]
    %v4756 = vld [vmem:[#allocation16 + $0x180] sm:$0xff]
    %v4757 = vld [vmem:[#allocation16 + $0x188] sm:$0xff]
    %v4758 = vld [vmem:[#allocation16 + $0x190] sm:$0xff]
    %v4759 = vld [vmem:[#allocation16 + $0x198] sm:$0xff]
    %v4760 = vld [vmem:[#allocation16 + $0x1a0] sm:$0xff]
    %v4761 = vld [vmem:[#allocation16 + $0x1a8] sm:$0xff]
    %v4762 = vld [vmem:[#allocation16 + $0x1b0] sm:$0xff]
    %v4763 = vld [vmem:[#allocation16 + $0x1b8] sm:$0xff]
    %v4764 = vld [vmem:[#allocation16 + $0x1c0] sm:$0xff]
    %v4765 = vld [vmem:[#allocation16 + $0x1c8] sm:$0xff]
    %v4766 = vld [vmem:[#allocation16 + $0x1d0] sm:$0xff]
    %v4767 = vld [vmem:[#allocation16 + $0x1d8] sm:$0xff]
    %v4768 = vld [vmem:[#allocation16 + $0x1e0] sm:$0xff]
    %v4769 = vld [vmem:[#allocation16 + $0x1e8] sm:$0xff]
    %v4770 = vld [vmem:[#allocation16 + $0x1f0] sm:$0xff]
    %v4771 = vld [vmem:[#allocation16 + $0x1f8] sm:$0xff]
    %v4772 = vld [vmem:[#allocation16 + $0x200] sm:$0xff]
    %v4773 = vld [vmem:[#allocation16 + $0x208] sm:$0xff]
    %v4774 = vld [vmem:[#allocation16 + $0x210] sm:$0xff]
    %v4775 = vld [vmem:[#allocation16 + $0x218] sm:$0xff]
    %v4776 = vld [vmem:[#allocation16 + $0x220] sm:$0xff]
    %v4777 = vld [vmem:[#allocation16 + $0x228] sm:$0xff]
    %v4778 = vld [vmem:[#allocation16 + $0x230] sm:$0xff]
    %v4779 = vld [vmem:[#allocation16 + $0x238] sm:$0xff]
    %v4780 = vld [vmem:[#allocation16 + $0x240] sm:$0xff]
    %v4781 = vld [vmem:[#allocation16 + $0x248] sm:$0xff]
    %v4782 = vld [vmem:[#allocation16 + $0x250] sm:$0xff]
    %v4783 = vld [vmem:[#allocation16 + $0x258] sm:$0xff]
    %v4784 = vld [vmem:[#allocation16 + $0x260] sm:$0xff]
    %v4785 = vld [vmem:[#allocation16 + $0x268] sm:$0xff]
    %v4786 = vld [vmem:[#allocation16 + $0x270] sm:$0xff]
    %v4787 = vld [vmem:[#allocation16 + $0x278] sm:$0xff]
    %v4788 = vld [vmem:[#allocation16 + $0x280] sm:$0xff]
    %v4789 = vld [vmem:[#allocation16 + $0x288] sm:$0xff]
    %v4790 = vld [vmem:[#allocation16 + $0x290] sm:$0xff]
    %v4791 = vld [vmem:[#allocation16 + $0x298] sm:$0xff]
    %v4792 = vld [vmem:[#allocation16 + $0x2a0] sm:$0xff]
    %v4793 = vld [vmem:[#allocation16 + $0x2a8] sm:$0xff]
    %v4794 = vld [vmem:[#allocation16 + $0x2b0] sm:$0xff]
    %v4795 = vld [vmem:[#allocation16 + $0x2b8] sm:$0xff]
    %v4796 = vld [vmem:[#allocation16 + $0x2c0] sm:$0xff]
    %v4797 = vld [vmem:[#allocation16 + $0x2c8] sm:$0xff]
    %v4798 = vld [vmem:[#allocation16 + $0x2d0] sm:$0xff]
    %v4799 = vld [vmem:[#allocation16 + $0x2d8] sm:$0xff]
    %v4800 = vld [vmem:[#allocation16 + $0x2e0] sm:$0xff]
    %v4801 = vld [vmem:[#allocation16 + $0x2e8] sm:$0xff]
    %v4802 = vld [vmem:[#allocation16 + $0x2f0] sm:$0xff]
    %v4803 = vld [vmem:[#allocation16 + $0x2f8] sm:$0xff]
    %v4804 = vld [vmem:[#allocation16 + $0x300] sm:$0xff]
    %v4805 = vld [vmem:[#allocation16 + $0x308] sm:$0xff]
    %v4806 = vld [vmem:[#allocation16 + $0x310] sm:$0xff]
    %v4807 = vld [vmem:[#allocation16 + $0x318] sm:$0xff]
    %v4808 = vld [vmem:[#allocation16 + $0x320] sm:$0xff]
    %v4809 = vld [vmem:[#allocation16 + $0x328] sm:$0xff]
    %v4810 = vld [vmem:[#allocation16 + $0x330] sm:$0xff]
    %v4811 = vld [vmem:[#allocation16 + $0x338] sm:$0xff]
    %v4812 = vld [vmem:[#allocation16 + $0x340] sm:$0xff]
    %v4813 = vld [vmem:[#allocation16 + $0x348] sm:$0xff]
    %v4814 = vld [vmem:[#allocation16 + $0x350] sm:$0xff]
    %v4815 = vld [vmem:[#allocation16 + $0x358] sm:$0xff]
    %v4816 = vld [vmem:[#allocation16 + $0x360] sm:$0xff]
    %v4817 = vld [vmem:[#allocation16 + $0x368] sm:$0xff]
    %v4818 = vld [vmem:[#allocation16 + $0x370] sm:$0xff]
    %v4819 = vld [vmem:[#allocation16 + $0x378] sm:$0xff]
    %v4820 = vld [vmem:[#allocation16 + $0x380] sm:$0xff]
    %v4821 = vld [vmem:[#allocation16 + $0x388] sm:$0xff]
    %v4822 = vld [vmem:[#allocation16 + $0x390] sm:$0xff]
    %v4823 = vld [vmem:[#allocation16 + $0x398] sm:$0xff]
    %v4824 = vld [vmem:[#allocation16 + $0x3a0] sm:$0xff]
    %v4825 = vld [vmem:[#allocation16 + $0x3a8] sm:$0xff]
    %v4826 = vld [vmem:[#allocation16 + $0x3b0] sm:$0xff]
    %v4827 = vld [vmem:[#allocation16 + $0x3b8] sm:$0xff]
    %v4828 = vld [vmem:[#allocation16 + $0x3c0] sm:$0xff]
    %v4829 = vld [vmem:[#allocation16 + $0x3c8] sm:$0xff]
    %v4830 = vld [vmem:[#allocation16 + $0x3d0] sm:$0xff]
    %v4831 = vld [vmem:[#allocation16 + $0x3d8] sm:$0xff]
    %v4832 = vld [vmem:[#allocation16 + $0x3e0] sm:$0xff]
    %v4833 = vld [vmem:[#allocation16 + $0x3e8] sm:$0xff]
    %v4834 = vld [vmem:[#allocation16 + $0x3f0] sm:$0xff]
    %v4835 = vld [vmem:[#allocation16 + $0x3f8] sm:$0xff]
    %v4836 = vld [vmem:[#allocation16 + $0x400] sm:$0xff]
    %v4837 = vld [vmem:[#allocation16 + $0x408] sm:$0xff]
    %v4838 = vld [vmem:[#allocation16 + $0x410] sm:$0xff]
    %v4839 = vld [vmem:[#allocation16 + $0x418] sm:$0xff]
    %v4840 = vld [vmem:[#allocation16 + $0x420] sm:$0xff]
    %v4841 = vld [vmem:[#allocation16 + $0x428] sm:$0xff]
    %v4842 = vld [vmem:[#allocation16 + $0x430] sm:$0xff]
    %v4843 = vld [vmem:[#allocation16 + $0x438] sm:$0xff]
    %v4844 = vld [vmem:[#allocation16 + $0x440] sm:$0xff]
    %v4845 = vld [vmem:[#allocation16 + $0x448] sm:$0xff]
    %v4846 = vld [vmem:[#allocation16 + $0x450] sm:$0xff]
    %v4847 = vld [vmem:[#allocation16 + $0x458] sm:$0xff]
    %v4848 = vld [vmem:[#allocation16 + $0x460] sm:$0xff]
    %v4849 = vld [vmem:[#allocation16 + $0x468] sm:$0xff]
    %v4850 = vld [vmem:[#allocation16 + $0x470] sm:$0xff]
    %v4851 = vld [vmem:[#allocation16 + $0x478] sm:$0xff]
    %v4852 = vld [vmem:[#allocation16 + $0x480] sm:$0xff]
    %v4853 = vld [vmem:[#allocation16 + $0x488] sm:$0xff]
    %v4854 = vld [vmem:[#allocation16 + $0x490] sm:$0xff]
    %v4855 = vld [vmem:[#allocation16 + $0x498] sm:$0xff]
    %v4856 = vld [vmem:[#allocation16 + $0x4a0] sm:$0xff]
    %v4857 = vld [vmem:[#allocation16 + $0x4a8] sm:$0xff]
    %v4858 = vld [vmem:[#allocation16 + $0x4b0] sm:$0xff]
    %v4859 = vld [vmem:[#allocation16 + $0x4b8] sm:$0xff]
    %v4860 = vld [vmem:[#allocation16 + $0x4c0] sm:$0xff]
    %v4861 = vld [vmem:[#allocation16 + $0x4c8] sm:$0xff]
    %v4862 = vld [vmem:[#allocation16 + $0x4d0] sm:$0xff]
    %v4863 = vld [vmem:[#allocation16 + $0x4d8] sm:$0xff]
    %v4864 = vld [vmem:[#allocation16 + $0x4e0] sm:$0xff]
    %v4865 = vld [vmem:[#allocation16 + $0x4e8] sm:$0xff]
    %v4866 = vld [vmem:[#allocation16 + $0x4f0] sm:$0xff]
    %v4867 = vld [vmem:[#allocation16 + $0x4f8] sm:$0xff]
    %v4868 = vld [vmem:[#allocation16 + $0x500] sm:$0xff]
    %v4869 = vld [vmem:[#allocation16 + $0x508] sm:$0xff]
    %v4870 = vld [vmem:[#allocation16 + $0x510] sm:$0xff]
    %v4871 = vld [vmem:[#allocation16 + $0x518] sm:$0xff]
    %v4872 = vld [vmem:[#allocation16 + $0x520] sm:$0xff]
    %v4873 = vld [vmem:[#allocation16 + $0x528] sm:$0xff]
    %v4874 = vld [vmem:[#allocation16 + $0x530] sm:$0xff]
    %v4875 = vld [vmem:[#allocation16 + $0x538] sm:$0xff]
    %v4876 = vld [vmem:[#allocation16 + $0x540] sm:$0xff]
    %v4877 = vld [vmem:[#allocation16 + $0x548] sm:$0xff]
    %v4878 = vld [vmem:[#allocation16 + $0x550] sm:$0xff]
    %v4879 = vld [vmem:[#allocation16 + $0x558] sm:$0xff]
    %v4880 = vld [vmem:[#allocation16 + $0x560] sm:$0xff]
    %v4881 = vld [vmem:[#allocation16 + $0x568] sm:$0xff]
    %v4882 = vld [vmem:[#allocation16 + $0x570] sm:$0xff]
    %v4883 = vld [vmem:[#allocation16 + $0x578] sm:$0xff]
    %v4884 = vld [vmem:[#allocation16 + $0x580] sm:$0xff]
    %v4885 = vld [vmem:[#allocation16 + $0x588] sm:$0xff]
    %v4886 = vld [vmem:[#allocation16 + $0x590] sm:$0xff]
    %v4887 = vld [vmem:[#allocation16 + $0x598] sm:$0xff]
    %v4888 = vld [vmem:[#allocation16 + $0x5a0] sm:$0xff]
    %v4889 = vld [vmem:[#allocation16 + $0x5a8] sm:$0xff]
    %v4890 = vld [vmem:[#allocation16 + $0x5b0] sm:$0xff]
    %v4891 = vld [vmem:[#allocation16 + $0x5b8] sm:$0xff]
    %v4892 = vld [vmem:[#allocation16 + $0x5c0] sm:$0xff]
    %v4893 = vld [vmem:[#allocation16 + $0x5c8] sm:$0xff]
    %v4894 = vld [vmem:[#allocation16 + $0x5d0] sm:$0xff]
    %v4895 = vld [vmem:[#allocation16 + $0x5d8] sm:$0xff]
    %v4896 = vld [vmem:[#allocation16 + $0x5e0] sm:$0xff]
    %v4897 = vld [vmem:[#allocation16 + $0x5e8] sm:$0xff]
    %v4898 = vld [vmem:[#allocation16 + $0x5f0] sm:$0xff]
    %v4899 = vld [vmem:[#allocation16 + $0x5f8] sm:$0xff]
    %v4900 = vld [vmem:[#allocation16 + $0x600] sm:$0xff]
    %v4901 = vld [vmem:[#allocation16 + $0x608] sm:$0xff]
    %v4902 = vld [vmem:[#allocation16 + $0x610] sm:$0xff]
    %v4903 = vld [vmem:[#allocation16 + $0x618] sm:$0xff]
    %v4904 = vld [vmem:[#allocation16 + $0x620] sm:$0xff]
    %v4905 = vld [vmem:[#allocation16 + $0x628] sm:$0xff]
    %v4906 = vld [vmem:[#allocation16 + $0x630] sm:$0xff]
    %v4907 = vld [vmem:[#allocation16 + $0x638] sm:$0xff]
    %v4908 = vld [vmem:[#allocation16 + $0x640] sm:$0xff]
    %v4909 = vld [vmem:[#allocation16 + $0x648] sm:$0xff]
    %v4910 = vld [vmem:[#allocation16 + $0x650] sm:$0xff]
    %v4911 = vld [vmem:[#allocation16 + $0x658] sm:$0xff]
    %v4912 = vld [vmem:[#allocation16 + $0x660] sm:$0xff]
    %v4913 = vld [vmem:[#allocation16 + $0x668] sm:$0xff]
    %v4914 = vld [vmem:[#allocation16 + $0x670] sm:$0xff]
    %v4915 = vld [vmem:[#allocation16 + $0x678] sm:$0xff]
    %v4916 = vld [vmem:[#allocation16 + $0x680] sm:$0xff]
    %v4917 = vld [vmem:[#allocation16 + $0x688] sm:$0xff]
    %v4918 = vld [vmem:[#allocation16 + $0x690] sm:$0xff]
    %v4919 = vld [vmem:[#allocation16 + $0x698] sm:$0xff]
    %v4920 = vld [vmem:[#allocation16 + $0x6a0] sm:$0xff]
    %v4921 = vld [vmem:[#allocation16 + $0x6a8] sm:$0xff]
    %v4922 = vld [vmem:[#allocation16 + $0x6b0] sm:$0xff]
    %v4923 = vld [vmem:[#allocation16 + $0x6b8] sm:$0xff]
    %v4924 = vld [vmem:[#allocation16 + $0x6c0] sm:$0xff]
    %v4925 = vld [vmem:[#allocation16 + $0x6c8] sm:$0xff]
    %v4926 = vld [vmem:[#allocation16 + $0x6d0] sm:$0xff]
    %v4927 = vld [vmem:[#allocation16 + $0x6d8] sm:$0xff]
    %v4928 = vld [vmem:[#allocation16 + $0x6e0] sm:$0xff]
    %v4929 = vld [vmem:[#allocation16 + $0x6e8] sm:$0xff]
    %v4930 = vld [vmem:[#allocation16 + $0x6f0] sm:$0xff]
    %v4931 = vld [vmem:[#allocation16 + $0x6f8] sm:$0xff]
    %v4932 = vld [vmem:[#allocation16 + $0x700] sm:$0xff]
    %v4933 = vld [vmem:[#allocation16 + $0x708] sm:$0xff]
    %v4934 = vld [vmem:[#allocation16 + $0x710] sm:$0xff]
    %v4935 = vld [vmem:[#allocation16 + $0x718] sm:$0xff]
    %v4936 = vld [vmem:[#allocation16 + $0x720] sm:$0xff]
    %v4937 = vld [vmem:[#allocation16 + $0x728] sm:$0xff]
    %v4938 = vld [vmem:[#allocation16 + $0x730] sm:$0xff]
    %v4939 = vld [vmem:[#allocation16 + $0x738] sm:$0xff]
    %v4940 = vld [vmem:[#allocation16 + $0x740] sm:$0xff]
    %v4941 = vld [vmem:[#allocation16 + $0x748] sm:$0xff]
    %v4942 = vld [vmem:[#allocation16 + $0x750] sm:$0xff]
    %v4943 = vld [vmem:[#allocation16 + $0x758] sm:$0xff]
    %v4944 = vld [vmem:[#allocation16 + $0x760] sm:$0xff]
    %v4945 = vld [vmem:[#allocation16 + $0x768] sm:$0xff]
    %v4946 = vld [vmem:[#allocation16 + $0x770] sm:$0xff]
    %v4947 = vld [vmem:[#allocation16 + $0x778] sm:$0xff]
    %v4948 = vld [vmem:[#allocation16 + $0x780] sm:$0xff]
    %v4949 = vld [vmem:[#allocation16 + $0x788] sm:$0xff]
    %v4950 = vld [vmem:[#allocation16 + $0x790] sm:$0xff]
    %v4951 = vld [vmem:[#allocation16 + $0x798] sm:$0xff]
    %v4952 = vld [vmem:[#allocation16 + $0x7a0] sm:$0xff]
    %v4953 = vld [vmem:[#allocation16 + $0x7a8] sm:$0xff]
    %v4954 = vld [vmem:[#allocation16 + $0x7b0] sm:$0xff]
    %v4955 = vld [vmem:[#allocation16 + $0x7b8] sm:$0xff]
    %v4956 = vld [vmem:[#allocation16 + $0x7c0] sm:$0xff]
    %v4957 = vld [vmem:[#allocation16 + $0x7c8] sm:$0xff]
    %v4958 = vld [vmem:[#allocation16 + $0x7d0] sm:$0xff]
    %v4959 = vld [vmem:[#allocation16 + $0x7d8] sm:$0xff]
    %v4960 = vld [vmem:[#allocation16 + $0x7e0] sm:$0xff]
    %v4961 = vld [vmem:[#allocation16 + $0x7e8] sm:$0xff]
    %v4962 = vld [vmem:[#allocation16 + $0x7f0] sm:$0xff]
    %v4963 = vld [vmem:[#allocation16 + $0x7f8] sm:$0xff]
    %v4964 = vld [vmem:[#allocation17] sm:$0xf]
    %v4966 = vlaneseq
    %v4967 = vshrl.u32 %v4966, 7
    %v4968 = vsub.s32 0, %v4967
    %v4969 = vrot.slane %v4964, %v4968
    %v4970 = vlaneseq
    %v4971 = vshrl.u32 %v4970, 7
    %v4972 = vsub.s32 1, %v4971
    %v4973 = vrot.slane %v4964, %v4972
    %v4974 = vlaneseq
    %v4975 = vshrl.u32 %v4974, 7
    %v4976 = vsub.s32 2, %v4975
    %v4977 = vrot.slane %v4964, %v4976
    %v4978 = vlaneseq
    %v4979 = vshrl.u32 %v4978, 7
    %v4980 = vsub.s32 3, %v4979
    %v4981 = vrot.slane %v4964, %v4980
    %v5242 = vunpack.c.l.b16 %v4708
    %v5243 = vunpack.c.h.b16 %v4708
    %v5244 = vunpack.c.l.b16 %v4709
    %v5245 = vunpack.c.h.b16 %v4709
    %v5246 = vunpack.c.l.b16 %v4710
    %v5247 = vunpack.c.h.b16 %v4710
    %v5248 = vunpack.c.l.b16 %v4711
    %v5249 = vunpack.c.h.b16 %v4711
    %v5250 = vunpack.c.l.b16 %v4712
    %v5251 = vunpack.c.h.b16 %v4712
    %v5252 = vunpack.c.l.b16 %v4713
    %v5253 = vunpack.c.h.b16 %v4713
    %v5254 = vunpack.c.l.b16 %v4714
    %v5255 = vunpack.c.h.b16 %v4714
    %v5256 = vunpack.c.l.b16 %v4715
    %v5257 = vunpack.c.h.b16 %v4715
    %v5258 = vunpack.c.l.b16 %v4716
    %v5259 = vunpack.c.h.b16 %v4716
    %v5260 = vunpack.c.l.b16 %v4717
    %v5261 = vunpack.c.h.b16 %v4717
    %v5262 = vunpack.c.l.b16 %v4718
    %v5263 = vunpack.c.h.b16 %v4718
    %v5264 = vunpack.c.l.b16 %v4719
    %v5265 = vunpack.c.h.b16 %v4719
    %v5266 = vunpack.c.l.b16 %v4720
    %v5267 = vunpack.c.h.b16 %v4720
    %v5268 = vunpack.c.l.b16 %v4721
    %v5269 = vunpack.c.h.b16 %v4721
    %v5270 = vunpack.c.l.b16 %v4722
    %v5271 = vunpack.c.h.b16 %v4722
    %v5272 = vunpack.c.l.b16 %v4723
    %v5273 = vunpack.c.h.b16 %v4723
    %v5274 = vunpack.c.l.b16 %v4724
    %v5275 = vunpack.c.h.b16 %v4724
    %v5276 = vunpack.c.l.b16 %v4725
    %v5277 = vunpack.c.h.b16 %v4725
    %v5278 = vunpack.c.l.b16 %v4726
    %v5279 = vunpack.c.h.b16 %v4726
    %v5280 = vunpack.c.l.b16 %v4727
    %v5281 = vunpack.c.h.b16 %v4727
    %v5282 = vunpack.c.l.b16 %v4728
    %v5283 = vunpack.c.h.b16 %v4728
    %v5284 = vunpack.c.l.b16 %v4729
    %v5285 = vunpack.c.h.b16 %v4729
    %v5286 = vunpack.c.l.b16 %v4730
    %v5287 = vunpack.c.h.b16 %v4730
    %v5288 = vunpack.c.l.b16 %v4731
    %v5289 = vunpack.c.h.b16 %v4731
    %v5290 = vunpack.c.l.b16 %v4732
    %v5291 = vunpack.c.h.b16 %v4732
    %v5292 = vunpack.c.l.b16 %v4733
    %v5293 = vunpack.c.h.b16 %v4733
    %v5294 = vunpack.c.l.b16 %v4734
    %v5295 = vunpack.c.h.b16 %v4734
    %v5296 = vunpack.c.l.b16 %v4735
    %v5297 = vunpack.c.h.b16 %v4735
    %v5298 = vunpack.c.l.b16 %v4736
    %v5299 = vunpack.c.h.b16 %v4736
    %v5300 = vunpack.c.l.b16 %v4737
    %v5301 = vunpack.c.h.b16 %v4737
    %v5302 = vunpack.c.l.b16 %v4738
    %v5303 = vunpack.c.h.b16 %v4738
    %v5304 = vunpack.c.l.b16 %v4739
    %v5305 = vunpack.c.h.b16 %v4739
    %v5306 = vunpack.c.l.b16 %v4740
    %v5307 = vunpack.c.h.b16 %v4740
    %v5308 = vunpack.c.l.b16 %v4741
    %v5309 = vunpack.c.h.b16 %v4741
    %v5310 = vunpack.c.l.b16 %v4742
    %v5311 = vunpack.c.h.b16 %v4742
    %v5312 = vunpack.c.l.b16 %v4743
    %v5313 = vunpack.c.h.b16 %v4743
    %v5314 = vunpack.c.l.b16 %v4744
    %v5315 = vunpack.c.h.b16 %v4744
    %v5316 = vunpack.c.l.b16 %v4745
    %v5317 = vunpack.c.h.b16 %v4745
    %v5318 = vunpack.c.l.b16 %v4746
    %v5319 = vunpack.c.h.b16 %v4746
    %v5320 = vunpack.c.l.b16 %v4747
    %v5321 = vunpack.c.h.b16 %v4747
    %v5322 = vunpack.c.l.b16 %v4748
    %v5323 = vunpack.c.h.b16 %v4748
    %v5324 = vunpack.c.l.b16 %v4749
    %v5325 = vunpack.c.h.b16 %v4749
    %v5326 = vunpack.c.l.b16 %v4750
    %v5327 = vunpack.c.h.b16 %v4750
    %v5328 = vunpack.c.l.b16 %v4751
    %v5329 = vunpack.c.h.b16 %v4751
    %v5330 = vunpack.c.l.b16 %v4752
    %v5331 = vunpack.c.h.b16 %v4752
    %v5332 = vunpack.c.l.b16 %v4753
    %v5333 = vunpack.c.h.b16 %v4753
    %v5334 = vunpack.c.l.b16 %v4754
    %v5335 = vunpack.c.h.b16 %v4754
    %v5336 = vunpack.c.l.b16 %v4755
    %v5337 = vunpack.c.h.b16 %v4755
    %v5338 = vunpack.c.l.b16 %v4756
    %v5339 = vunpack.c.h.b16 %v4756
    %v5340 = vunpack.c.l.b16 %v4757
    %v5341 = vunpack.c.h.b16 %v4757
    %v5342 = vunpack.c.l.b16 %v4758
    %v5343 = vunpack.c.h.b16 %v4758
    %v5344 = vunpack.c.l.b16 %v4759
    %v5345 = vunpack.c.h.b16 %v4759
    %v5346 = vunpack.c.l.b16 %v4760
    %v5347 = vunpack.c.h.b16 %v4760
    %v5348 = vunpack.c.l.b16 %v4761
    %v5349 = vunpack.c.h.b16 %v4761
    %v5350 = vunpack.c.l.b16 %v4762
    %v5351 = vunpack.c.h.b16 %v4762
    %v5352 = vunpack.c.l.b16 %v4763
    %v5353 = vunpack.c.h.b16 %v4763
    %v5354 = vunpack.c.l.b16 %v4764
    %v5355 = vunpack.c.h.b16 %v4764
    %v5356 = vunpack.c.l.b16 %v4765
    %v5357 = vunpack.c.h.b16 %v4765
    %v5358 = vunpack.c.l.b16 %v4766
    %v5359 = vunpack.c.h.b16 %v4766
    %v5360 = vunpack.c.l.b16 %v4767
    %v5361 = vunpack.c.h.b16 %v4767
    %v5362 = vunpack.c.l.b16 %v4768
    %v5363 = vunpack.c.h.b16 %v4768
    %v5364 = vunpack.c.l.b16 %v4769
    %v5365 = vunpack.c.h.b16 %v4769
    %v5366 = vunpack.c.l.b16 %v4770
    %v5367 = vunpack.c.h.b16 %v4770
    %v5368 = vunpack.c.l.b16 %v4771
    %v5369 = vunpack.c.h.b16 %v4771
    %v5370 = vunpack.c.l.b16 %v4772
    %v5371 = vunpack.c.h.b16 %v4772
    %v5372 = vunpack.c.l.b16 %v4773
    %v5373 = vunpack.c.h.b16 %v4773
    %v5374 = vunpack.c.l.b16 %v4774
    %v5375 = vunpack.c.h.b16 %v4774
    %v5376 = vunpack.c.l.b16 %v4775
    %v5377 = vunpack.c.h.b16 %v4775
    %v5378 = vunpack.c.l.b16 %v4776
    %v5379 = vunpack.c.h.b16 %v4776
    %v5380 = vunpack.c.l.b16 %v4777
    %v5381 = vunpack.c.h.b16 %v4777
    %v5382 = vunpack.c.l.b16 %v4778
    %v5383 = vunpack.c.h.b16 %v4778
    %v5384 = vunpack.c.l.b16 %v4779
    %v5385 = vunpack.c.h.b16 %v4779
    %v5386 = vunpack.c.l.b16 %v4780
    %v5387 = vunpack.c.h.b16 %v4780
    %v5388 = vunpack.c.l.b16 %v4781
    %v5389 = vunpack.c.h.b16 %v4781
    %v5390 = vunpack.c.l.b16 %v4782
    %v5391 = vunpack.c.h.b16 %v4782
    %v5392 = vunpack.c.l.b16 %v4783
    %v5393 = vunpack.c.h.b16 %v4783
    %v5394 = vunpack.c.l.b16 %v4784
    %v5395 = vunpack.c.h.b16 %v4784
    %v5396 = vunpack.c.l.b16 %v4785
    %v5397 = vunpack.c.h.b16 %v4785
    %v5398 = vunpack.c.l.b16 %v4786
    %v5399 = vunpack.c.h.b16 %v4786
    %v5400 = vunpack.c.l.b16 %v4787
    %v5401 = vunpack.c.h.b16 %v4787
    %v5402 = vunpack.c.l.b16 %v4788
    %v5403 = vunpack.c.h.b16 %v4788
    %v5404 = vunpack.c.l.b16 %v4789
    %v5405 = vunpack.c.h.b16 %v4789
    %v5406 = vunpack.c.l.b16 %v4790
    %v5407 = vunpack.c.h.b16 %v4790
    %v5408 = vunpack.c.l.b16 %v4791
    %v5409 = vunpack.c.h.b16 %v4791
    %v5410 = vunpack.c.l.b16 %v4792
    %v5411 = vunpack.c.h.b16 %v4792
    %v5412 = vunpack.c.l.b16 %v4793
    %v5413 = vunpack.c.h.b16 %v4793
    %v5414 = vunpack.c.l.b16 %v4794
    %v5415 = vunpack.c.h.b16 %v4794
    %v5416 = vunpack.c.l.b16 %v4795
    %v5417 = vunpack.c.h.b16 %v4795
    %v5418 = vunpack.c.l.b16 %v4796
    %v5419 = vunpack.c.h.b16 %v4796
    %v5420 = vunpack.c.l.b16 %v4797
    %v5421 = vunpack.c.h.b16 %v4797
    %v5422 = vunpack.c.l.b16 %v4798
    %v5423 = vunpack.c.h.b16 %v4798
    %v5424 = vunpack.c.l.b16 %v4799
    %v5425 = vunpack.c.h.b16 %v4799
    %v5426 = vunpack.c.l.b16 %v4800
    %v5427 = vunpack.c.h.b16 %v4800
    %v5428 = vunpack.c.l.b16 %v4801
    %v5429 = vunpack.c.h.b16 %v4801
    %v5430 = vunpack.c.l.b16 %v4802
    %v5431 = vunpack.c.h.b16 %v4802
    %v5432 = vunpack.c.l.b16 %v4803
    %v5433 = vunpack.c.h.b16 %v4803
    %v5434 = vunpack.c.l.b16 %v4804
    %v5435 = vunpack.c.h.b16 %v4804
    %v5436 = vunpack.c.l.b16 %v4805
    %v5437 = vunpack.c.h.b16 %v4805
    %v5438 = vunpack.c.l.b16 %v4806
    %v5439 = vunpack.c.h.b16 %v4806
    %v5440 = vunpack.c.l.b16 %v4807
    %v5441 = vunpack.c.h.b16 %v4807
    %v5442 = vunpack.c.l.b16 %v4808
    %v5443 = vunpack.c.h.b16 %v4808
    %v5444 = vunpack.c.l.b16 %v4809
    %v5445 = vunpack.c.h.b16 %v4809
    %v5446 = vunpack.c.l.b16 %v4810
    %v5447 = vunpack.c.h.b16 %v4810
    %v5448 = vunpack.c.l.b16 %v4811
    %v5449 = vunpack.c.h.b16 %v4811
    %v5450 = vunpack.c.l.b16 %v4812
    %v5451 = vunpack.c.h.b16 %v4812
    %v5452 = vunpack.c.l.b16 %v4813
    %v5453 = vunpack.c.h.b16 %v4813
    %v5454 = vunpack.c.l.b16 %v4814
    %v5455 = vunpack.c.h.b16 %v4814
    %v5456 = vunpack.c.l.b16 %v4815
    %v5457 = vunpack.c.h.b16 %v4815
    %v5458 = vunpack.c.l.b16 %v4816
    %v5459 = vunpack.c.h.b16 %v4816
    %v5460 = vunpack.c.l.b16 %v4817
    %v5461 = vunpack.c.h.b16 %v4817
    %v5462 = vunpack.c.l.b16 %v4818
    %v5463 = vunpack.c.h.b16 %v4818
    %v5464 = vunpack.c.l.b16 %v4819
    %v5465 = vunpack.c.h.b16 %v4819
    %v5466 = vunpack.c.l.b16 %v4820
    %v5467 = vunpack.c.h.b16 %v4820
    %v5468 = vunpack.c.l.b16 %v4821
    %v5469 = vunpack.c.h.b16 %v4821
    %v5470 = vunpack.c.l.b16 %v4822
    %v5471 = vunpack.c.h.b16 %v4822
    %v5472 = vunpack.c.l.b16 %v4823
    %v5473 = vunpack.c.h.b16 %v4823
    %v5474 = vunpack.c.l.b16 %v4824
    %v5475 = vunpack.c.h.b16 %v4824
    %v5476 = vunpack.c.l.b16 %v4825
    %v5477 = vunpack.c.h.b16 %v4825
    %v5478 = vunpack.c.l.b16 %v4826
    %v5479 = vunpack.c.h.b16 %v4826
    %v5480 = vunpack.c.l.b16 %v4827
    %v5481 = vunpack.c.h.b16 %v4827
    %v5482 = vunpack.c.l.b16 %v4828
    %v5483 = vunpack.c.h.b16 %v4828
    %v5484 = vunpack.c.l.b16 %v4829
    %v5485 = vunpack.c.h.b16 %v4829
    %v5486 = vunpack.c.l.b16 %v4830
    %v5487 = vunpack.c.h.b16 %v4830
    %v5488 = vunpack.c.l.b16 %v4831
    %v5489 = vunpack.c.h.b16 %v4831
    %v5490 = vunpack.c.l.b16 %v4832
    %v5491 = vunpack.c.h.b16 %v4832
    %v5492 = vunpack.c.l.b16 %v4833
    %v5493 = vunpack.c.h.b16 %v4833
    %v5494 = vunpack.c.l.b16 %v4834
    %v5495 = vunpack.c.h.b16 %v4834
    %v5496 = vunpack.c.l.b16 %v4835
    %v5497 = vunpack.c.h.b16 %v4835
    %v5498 = vunpack.c.l.b16 %v4836
    %v5499 = vunpack.c.h.b16 %v4836
    %v5500 = vunpack.c.l.b16 %v4837
    %v5501 = vunpack.c.h.b16 %v4837
    %v5502 = vunpack.c.l.b16 %v4838
    %v5503 = vunpack.c.h.b16 %v4838
    %v5504 = vunpack.c.l.b16 %v4839
    %v5505 = vunpack.c.h.b16 %v4839
    %v5506 = vunpack.c.l.b16 %v4840
    %v5507 = vunpack.c.h.b16 %v4840
    %v5508 = vunpack.c.l.b16 %v4841
    %v5509 = vunpack.c.h.b16 %v4841
    %v5510 = vunpack.c.l.b16 %v4842
    %v5511 = vunpack.c.h.b16 %v4842
    %v5512 = vunpack.c.l.b16 %v4843
    %v5513 = vunpack.c.h.b16 %v4843
    %v5514 = vunpack.c.l.b16 %v4844
    %v5515 = vunpack.c.h.b16 %v4844
    %v5516 = vunpack.c.l.b16 %v4845
    %v5517 = vunpack.c.h.b16 %v4845
    %v5518 = vunpack.c.l.b16 %v4846
    %v5519 = vunpack.c.h.b16 %v4846
    %v5520 = vunpack.c.l.b16 %v4847
    %v5521 = vunpack.c.h.b16 %v4847
    %v5522 = vunpack.c.l.b16 %v4848
    %v5523 = vunpack.c.h.b16 %v4848
    %v5524 = vunpack.c.l.b16 %v4849
    %v5525 = vunpack.c.h.b16 %v4849
    %v5526 = vunpack.c.l.b16 %v4850
    %v5527 = vunpack.c.h.b16 %v4850
    %v5528 = vunpack.c.l.b16 %v4851
    %v5529 = vunpack.c.h.b16 %v4851
    %v5530 = vunpack.c.l.b16 %v4852
    %v5531 = vunpack.c.h.b16 %v4852
    %v5532 = vunpack.c.l.b16 %v4853
    %v5533 = vunpack.c.h.b16 %v4853
    %v5534 = vunpack.c.l.b16 %v4854
    %v5535 = vunpack.c.h.b16 %v4854
    %v5536 = vunpack.c.l.b16 %v4855
    %v5537 = vunpack.c.h.b16 %v4855
    %v5538 = vunpack.c.l.b16 %v4856
    %v5539 = vunpack.c.h.b16 %v4856
    %v5540 = vunpack.c.l.b16 %v4857
    %v5541 = vunpack.c.h.b16 %v4857
    %v5542 = vunpack.c.l.b16 %v4858
    %v5543 = vunpack.c.h.b16 %v4858
    %v5544 = vunpack.c.l.b16 %v4859
    %v5545 = vunpack.c.h.b16 %v4859
    %v5546 = vunpack.c.l.b16 %v4860
    %v5547 = vunpack.c.h.b16 %v4860
    %v5548 = vunpack.c.l.b16 %v4861
    %v5549 = vunpack.c.h.b16 %v4861
    %v5550 = vunpack.c.l.b16 %v4862
    %v5551 = vunpack.c.h.b16 %v4862
    %v5552 = vunpack.c.l.b16 %v4863
    %v5553 = vunpack.c.h.b16 %v4863
    %v5554 = vunpack.c.l.b16 %v4864
    %v5555 = vunpack.c.h.b16 %v4864
    %v5556 = vunpack.c.l.b16 %v4865
    %v5557 = vunpack.c.h.b16 %v4865
    %v5558 = vunpack.c.l.b16 %v4866
    %v5559 = vunpack.c.h.b16 %v4866
    %v5560 = vunpack.c.l.b16 %v4867
    %v5561 = vunpack.c.h.b16 %v4867
    %v5562 = vunpack.c.l.b16 %v4868
    %v5563 = vunpack.c.h.b16 %v4868
    %v5564 = vunpack.c.l.b16 %v4869
    %v5565 = vunpack.c.h.b16 %v4869
    %v5566 = vunpack.c.l.b16 %v4870
    %v5567 = vunpack.c.h.b16 %v4870
    %v5568 = vunpack.c.l.b16 %v4871
    %v5569 = vunpack.c.h.b16 %v4871
    %v5570 = vunpack.c.l.b16 %v4872
    %v5571 = vunpack.c.h.b16 %v4872
    %v5572 = vunpack.c.l.b16 %v4873
    %v5573 = vunpack.c.h.b16 %v4873
    %v5574 = vunpack.c.l.b16 %v4874
    %v5575 = vunpack.c.h.b16 %v4874
    %v5576 = vunpack.c.l.b16 %v4875
    %v5577 = vunpack.c.h.b16 %v4875
    %v5578 = vunpack.c.l.b16 %v4876
    %v5579 = vunpack.c.h.b16 %v4876
    %v5580 = vunpack.c.l.b16 %v4877
    %v5581 = vunpack.c.h.b16 %v4877
    %v5582 = vunpack.c.l.b16 %v4878
    %v5583 = vunpack.c.h.b16 %v4878
    %v5584 = vunpack.c.l.b16 %v4879
    %v5585 = vunpack.c.h.b16 %v4879
    %v5586 = vunpack.c.l.b16 %v4880
    %v5587 = vunpack.c.h.b16 %v4880
    %v5588 = vunpack.c.l.b16 %v4881
    %v5589 = vunpack.c.h.b16 %v4881
    %v5590 = vunpack.c.l.b16 %v4882
    %v5591 = vunpack.c.h.b16 %v4882
    %v5592 = vunpack.c.l.b16 %v4883
    %v5593 = vunpack.c.h.b16 %v4883
    %v5594 = vunpack.c.l.b16 %v4884
    %v5595 = vunpack.c.h.b16 %v4884
    %v5596 = vunpack.c.l.b16 %v4885
    %v5597 = vunpack.c.h.b16 %v4885
    %v5598 = vunpack.c.l.b16 %v4886
    %v5599 = vunpack.c.h.b16 %v4886
    %v5600 = vunpack.c.l.b16 %v4887
    %v5601 = vunpack.c.h.b16 %v4887
    %v5602 = vunpack.c.l.b16 %v4888
    %v5603 = vunpack.c.h.b16 %v4888
    %v5604 = vunpack.c.l.b16 %v4889
    %v5605 = vunpack.c.h.b16 %v4889
    %v5606 = vunpack.c.l.b16 %v4890
    %v5607 = vunpack.c.h.b16 %v4890
    %v5608 = vunpack.c.l.b16 %v4891
    %v5609 = vunpack.c.h.b16 %v4891
    %v5610 = vunpack.c.l.b16 %v4892
    %v5611 = vunpack.c.h.b16 %v4892
    %v5612 = vunpack.c.l.b16 %v4893
    %v5613 = vunpack.c.h.b16 %v4893
    %v5614 = vunpack.c.l.b16 %v4894
    %v5615 = vunpack.c.h.b16 %v4894
    %v5616 = vunpack.c.l.b16 %v4895
    %v5617 = vunpack.c.h.b16 %v4895
    %v5618 = vunpack.c.l.b16 %v4896
    %v5619 = vunpack.c.h.b16 %v4896
    %v5620 = vunpack.c.l.b16 %v4897
    %v5621 = vunpack.c.h.b16 %v4897
    %v5622 = vunpack.c.l.b16 %v4898
    %v5623 = vunpack.c.h.b16 %v4898
    %v5624 = vunpack.c.l.b16 %v4899
    %v5625 = vunpack.c.h.b16 %v4899
    %v5626 = vunpack.c.l.b16 %v4900
    %v5627 = vunpack.c.h.b16 %v4900
    %v5628 = vunpack.c.l.b16 %v4901
    %v5629 = vunpack.c.h.b16 %v4901
    %v5630 = vunpack.c.l.b16 %v4902
    %v5631 = vunpack.c.h.b16 %v4902
    %v5632 = vunpack.c.l.b16 %v4903
    %v5633 = vunpack.c.h.b16 %v4903
    %v5634 = vunpack.c.l.b16 %v4904
    %v5635 = vunpack.c.h.b16 %v4904
    %v5636 = vunpack.c.l.b16 %v4905
    %v5637 = vunpack.c.h.b16 %v4905
    %v5638 = vunpack.c.l.b16 %v4906
    %v5639 = vunpack.c.h.b16 %v4906
    %v5640 = vunpack.c.l.b16 %v4907
    %v5641 = vunpack.c.h.b16 %v4907
    %v5642 = vunpack.c.l.b16 %v4908
    %v5643 = vunpack.c.h.b16 %v4908
    %v5644 = vunpack.c.l.b16 %v4909
    %v5645 = vunpack.c.h.b16 %v4909
    %v5646 = vunpack.c.l.b16 %v4910
    %v5647 = vunpack.c.h.b16 %v4910
    %v5648 = vunpack.c.l.b16 %v4911
    %v5649 = vunpack.c.h.b16 %v4911
    %v5650 = vunpack.c.l.b16 %v4912
    %v5651 = vunpack.c.h.b16 %v4912
    %v5652 = vunpack.c.l.b16 %v4913
    %v5653 = vunpack.c.h.b16 %v4913
    %v5654 = vunpack.c.l.b16 %v4914
    %v5655 = vunpack.c.h.b16 %v4914
    %v5656 = vunpack.c.l.b16 %v4915
    %v5657 = vunpack.c.h.b16 %v4915
    %v5658 = vunpack.c.l.b16 %v4916
    %v5659 = vunpack.c.h.b16 %v4916
    %v5660 = vunpack.c.l.b16 %v4917
    %v5661 = vunpack.c.h.b16 %v4917
    %v5662 = vunpack.c.l.b16 %v4918
    %v5663 = vunpack.c.h.b16 %v4918
    %v5664 = vunpack.c.l.b16 %v4919
    %v5665 = vunpack.c.h.b16 %v4919
    %v5666 = vunpack.c.l.b16 %v4920
    %v5667 = vunpack.c.h.b16 %v4920
    %v5668 = vunpack.c.l.b16 %v4921
    %v5669 = vunpack.c.h.b16 %v4921
    %v5670 = vunpack.c.l.b16 %v4922
    %v5671 = vunpack.c.h.b16 %v4922
    %v5672 = vunpack.c.l.b16 %v4923
    %v5673 = vunpack.c.h.b16 %v4923
    %v5674 = vunpack.c.l.b16 %v4924
    %v5675 = vunpack.c.h.b16 %v4924
    %v5676 = vunpack.c.l.b16 %v4925
    %v5677 = vunpack.c.h.b16 %v4925
    %v5678 = vunpack.c.l.b16 %v4926
    %v5679 = vunpack.c.h.b16 %v4926
    %v5680 = vunpack.c.l.b16 %v4927
    %v5681 = vunpack.c.h.b16 %v4927
    %v5682 = vunpack.c.l.b16 %v4928
    %v5683 = vunpack.c.h.b16 %v4928
    %v5684 = vunpack.c.l.b16 %v4929
    %v5685 = vunpack.c.h.b16 %v4929
    %v5686 = vunpack.c.l.b16 %v4930
    %v5687 = vunpack.c.h.b16 %v4930
    %v5688 = vunpack.c.l.b16 %v4931
    %v5689 = vunpack.c.h.b16 %v4931
    %v5690 = vunpack.c.l.b16 %v4932
    %v5691 = vunpack.c.h.b16 %v4932
    %v5692 = vunpack.c.l.b16 %v4933
    %v5693 = vunpack.c.h.b16 %v4933
    %v5694 = vunpack.c.l.b16 %v4934
    %v5695 = vunpack.c.h.b16 %v4934
    %v5696 = vunpack.c.l.b16 %v4935
    %v5697 = vunpack.c.h.b16 %v4935
    %v5698 = vunpack.c.l.b16 %v4936
    %v5699 = vunpack.c.h.b16 %v4936
    %v5700 = vunpack.c.l.b16 %v4937
    %v5701 = vunpack.c.h.b16 %v4937
    %v5702 = vunpack.c.l.b16 %v4938
    %v5703 = vunpack.c.h.b16 %v4938
    %v5704 = vunpack.c.l.b16 %v4939
    %v5705 = vunpack.c.h.b16 %v4939
    %v5706 = vunpack.c.l.b16 %v4940
    %v5707 = vunpack.c.h.b16 %v4940
    %v5708 = vunpack.c.l.b16 %v4941
    %v5709 = vunpack.c.h.b16 %v4941
    %v5710 = vunpack.c.l.b16 %v4942
    %v5711 = vunpack.c.h.b16 %v4942
    %v5712 = vunpack.c.l.b16 %v4943
    %v5713 = vunpack.c.h.b16 %v4943
    %v5714 = vunpack.c.l.b16 %v4944
    %v5715 = vunpack.c.h.b16 %v4944
    %v5716 = vunpack.c.l.b16 %v4945
    %v5717 = vunpack.c.h.b16 %v4945
    %v5718 = vunpack.c.l.b16 %v4946
    %v5719 = vunpack.c.h.b16 %v4946
    %v5720 = vunpack.c.l.b16 %v4947
    %v5721 = vunpack.c.h.b16 %v4947
    %v5722 = vunpack.c.l.b16 %v4948
    %v5723 = vunpack.c.h.b16 %v4948
    %v5724 = vunpack.c.l.b16 %v4949
    %v5725 = vunpack.c.h.b16 %v4949
    %v5726 = vunpack.c.l.b16 %v4950
    %v5727 = vunpack.c.h.b16 %v4950
    %v5728 = vunpack.c.l.b16 %v4951
    %v5729 = vunpack.c.h.b16 %v4951
    %v5730 = vunpack.c.l.b16 %v4952
    %v5731 = vunpack.c.h.b16 %v4952
    %v5732 = vunpack.c.l.b16 %v4953
    %v5733 = vunpack.c.h.b16 %v4953
    %v5734 = vunpack.c.l.b16 %v4954
    %v5735 = vunpack.c.h.b16 %v4954
    %v5736 = vunpack.c.l.b16 %v4955
    %v5737 = vunpack.c.h.b16 %v4955
    %v5738 = vunpack.c.l.b16 %v4956
    %v5739 = vunpack.c.h.b16 %v4956
    %v5740 = vunpack.c.l.b16 %v4957
    %v5741 = vunpack.c.h.b16 %v4957
    %v5742 = vunpack.c.l.b16 %v4958
    %v5743 = vunpack.c.h.b16 %v4958
    %v5744 = vunpack.c.l.b16 %v4959
    %v5745 = vunpack.c.h.b16 %v4959
    %v5746 = vunpack.c.l.b16 %v4960
    %v5747 = vunpack.c.h.b16 %v4960
    %v5748 = vunpack.c.l.b16 %v4961
    %v5749 = vunpack.c.h.b16 %v4961
    %v5750 = vunpack.c.l.b16 %v4962
    %v5751 = vunpack.c.h.b16 %v4962
    %v5752 = vunpack.c.l.b16 %v4963
    %v5753 = vunpack.c.h.b16 %v4963
    %v5754 = vpack.c.b16 %v5246, %v5242
    %v5755 = vpack.c.b16 %v5247, %v5243
    %v5756 = vpack.c.b16 %v5248, %v5244
    %v5757 = vpack.c.b16 %v5249, %v5245
    %v5758 = vpack.c.b16 %v5254, %v5250
    %v5759 = vpack.c.b16 %v5255, %v5251
    %v5760 = vpack.c.b16 %v5256, %v5252
    %v5761 = vpack.c.b16 %v5257, %v5253
    %v5762 = vpack.c.b16 %v5262, %v5258
    %v5763 = vpack.c.b16 %v5263, %v5259
    %v5764 = vpack.c.b16 %v5264, %v5260
    %v5765 = vpack.c.b16 %v5265, %v5261
    %v5766 = vpack.c.b16 %v5270, %v5266
    %v5767 = vpack.c.b16 %v5271, %v5267
    %v5768 = vpack.c.b16 %v5272, %v5268
    %v5769 = vpack.c.b16 %v5273, %v5269
    %v5770 = vpack.c.b16 %v5278, %v5274
    %v5771 = vpack.c.b16 %v5279, %v5275
    %v5772 = vpack.c.b16 %v5280, %v5276
    %v5773 = vpack.c.b16 %v5281, %v5277
    %v5774 = vpack.c.b16 %v5286, %v5282
    %v5775 = vpack.c.b16 %v5287, %v5283
    %v5776 = vpack.c.b16 %v5288, %v5284
    %v5777 = vpack.c.b16 %v5289, %v5285
    %v5778 = vpack.c.b16 %v5294, %v5290
    %v5779 = vpack.c.b16 %v5295, %v5291
    %v5780 = vpack.c.b16 %v5296, %v5292
    %v5781 = vpack.c.b16 %v5297, %v5293
    %v5782 = vpack.c.b16 %v5302, %v5298
    %v5783 = vpack.c.b16 %v5303, %v5299
    %v5784 = vpack.c.b16 %v5304, %v5300
    %v5785 = vpack.c.b16 %v5305, %v5301
    %v5786 = vpack.c.b16 %v5310, %v5306
    %v5787 = vpack.c.b16 %v5311, %v5307
    %v5788 = vpack.c.b16 %v5312, %v5308
    %v5789 = vpack.c.b16 %v5313, %v5309
    %v5790 = vpack.c.b16 %v5318, %v5314
    %v5791 = vpack.c.b16 %v5319, %v5315
    %v5792 = vpack.c.b16 %v5320, %v5316
    %v5793 = vpack.c.b16 %v5321, %v5317
    %v5794 = vpack.c.b16 %v5326, %v5322
    %v5795 = vpack.c.b16 %v5327, %v5323
    %v5796 = vpack.c.b16 %v5328, %v5324
    %v5797 = vpack.c.b16 %v5329, %v5325
    %v5798 = vpack.c.b16 %v5334, %v5330
    %v5799 = vpack.c.b16 %v5335, %v5331
    %v5800 = vpack.c.b16 %v5336, %v5332
    %v5801 = vpack.c.b16 %v5337, %v5333
    %v5802 = vpack.c.b16 %v5342, %v5338
    %v5803 = vpack.c.b16 %v5343, %v5339
    %v5804 = vpack.c.b16 %v5344, %v5340
    %v5805 = vpack.c.b16 %v5345, %v5341
    %v5806 = vpack.c.b16 %v5350, %v5346
    %v5807 = vpack.c.b16 %v5351, %v5347
    %v5808 = vpack.c.b16 %v5352, %v5348
    %v5809 = vpack.c.b16 %v5353, %v5349
    %v5810 = vpack.c.b16 %v5358, %v5354
    %v5811 = vpack.c.b16 %v5359, %v5355
    %v5812 = vpack.c.b16 %v5360, %v5356
    %v5813 = vpack.c.b16 %v5361, %v5357
    %v5814 = vpack.c.b16 %v5366, %v5362
    %v5815 = vpack.c.b16 %v5367, %v5363
    %v5816 = vpack.c.b16 %v5368, %v5364
    %v5817 = vpack.c.b16 %v5369, %v5365
    %v5818 = vpack.c.b16 %v5374, %v5370
    %v5819 = vpack.c.b16 %v5375, %v5371
    %v5820 = vpack.c.b16 %v5376, %v5372
    %v5821 = vpack.c.b16 %v5377, %v5373
    %v5822 = vpack.c.b16 %v5382, %v5378
    %v5823 = vpack.c.b16 %v5383, %v5379
    %v5824 = vpack.c.b16 %v5384, %v5380
    %v5825 = vpack.c.b16 %v5385, %v5381
    %v5826 = vpack.c.b16 %v5390, %v5386
    %v5827 = vpack.c.b16 %v5391, %v5387
    %v5828 = vpack.c.b16 %v5392, %v5388
    %v5829 = vpack.c.b16 %v5393, %v5389
    %v5830 = vpack.c.b16 %v5398, %v5394
    %v5831 = vpack.c.b16 %v5399, %v5395
    %v5832 = vpack.c.b16 %v5400, %v5396
    %v5833 = vpack.c.b16 %v5401, %v5397
    %v5834 = vpack.c.b16 %v5406, %v5402
    %v5835 = vpack.c.b16 %v5407, %v5403
    %v5836 = vpack.c.b16 %v5408, %v5404
    %v5837 = vpack.c.b16 %v5409, %v5405
    %v5838 = vpack.c.b16 %v5414, %v5410
    %v5839 = vpack.c.b16 %v5415, %v5411
    %v5840 = vpack.c.b16 %v5416, %v5412
    %v5841 = vpack.c.b16 %v5417, %v5413
    %v5842 = vpack.c.b16 %v5422, %v5418
    %v5843 = vpack.c.b16 %v5423, %v5419
    %v5844 = vpack.c.b16 %v5424, %v5420
    %v5845 = vpack.c.b16 %v5425, %v5421
    %v5846 = vpack.c.b16 %v5430, %v5426
    %v5847 = vpack.c.b16 %v5431, %v5427
    %v5848 = vpack.c.b16 %v5432, %v5428
    %v5849 = vpack.c.b16 %v5433, %v5429
    %v5850 = vpack.c.b16 %v5438, %v5434
    %v5851 = vpack.c.b16 %v5439, %v5435
    %v5852 = vpack.c.b16 %v5440, %v5436
    %v5853 = vpack.c.b16 %v5441, %v5437
    %v5854 = vpack.c.b16 %v5446, %v5442
    %v5855 = vpack.c.b16 %v5447, %v5443
    %v5856 = vpack.c.b16 %v5448, %v5444
    %v5857 = vpack.c.b16 %v5449, %v5445
    %v5858 = vpack.c.b16 %v5454, %v5450
    %v5859 = vpack.c.b16 %v5455, %v5451
    %v5860 = vpack.c.b16 %v5456, %v5452
    %v5861 = vpack.c.b16 %v5457, %v5453
    %v5862 = vpack.c.b16 %v5462, %v5458
    %v5863 = vpack.c.b16 %v5463, %v5459
    %v5864 = vpack.c.b16 %v5464, %v5460
    %v5865 = vpack.c.b16 %v5465, %v5461
    %v5866 = vpack.c.b16 %v5470, %v5466
    %v5867 = vpack.c.b16 %v5471, %v5467
    %v5868 = vpack.c.b16 %v5472, %v5468
    %v5869 = vpack.c.b16 %v5473, %v5469
    %v5870 = vpack.c.b16 %v5478, %v5474
    %v5871 = vpack.c.b16 %v5479, %v5475
    %v5872 = vpack.c.b16 %v5480, %v5476
    %v5873 = vpack.c.b16 %v5481, %v5477
    %v5874 = vpack.c.b16 %v5486, %v5482
    %v5875 = vpack.c.b16 %v5487, %v5483
    %v5876 = vpack.c.b16 %v5488, %v5484
    %v5877 = vpack.c.b16 %v5489, %v5485
    %v5878 = vpack.c.b16 %v5494, %v5490
    %v5879 = vpack.c.b16 %v5495, %v5491
    %v5880 = vpack.c.b16 %v5496, %v5492
    %v5881 = vpack.c.b16 %v5497, %v5493
    %v5882 = vpack.c.b16 %v5502, %v5498
    %v5883 = vpack.c.b16 %v5503, %v5499
    %v5884 = vpack.c.b16 %v5504, %v5500
    %v5885 = vpack.c.b16 %v5505, %v5501
    %v5886 = vpack.c.b16 %v5510, %v5506
    %v5887 = vpack.c.b16 %v5511, %v5507
    %v5888 = vpack.c.b16 %v5512, %v5508
    %v5889 = vpack.c.b16 %v5513, %v5509
    %v5890 = vpack.c.b16 %v5518, %v5514
    %v5891 = vpack.c.b16 %v5519, %v5515
    %v5892 = vpack.c.b16 %v5520, %v5516
    %v5893 = vpack.c.b16 %v5521, %v5517
    %v5894 = vpack.c.b16 %v5526, %v5522
    %v5895 = vpack.c.b16 %v5527, %v5523
    %v5896 = vpack.c.b16 %v5528, %v5524
    %v5897 = vpack.c.b16 %v5529, %v5525
    %v5898 = vpack.c.b16 %v5534, %v5530
    %v5899 = vpack.c.b16 %v5535, %v5531
    %v5900 = vpack.c.b16 %v5536, %v5532
    %v5901 = vpack.c.b16 %v5537, %v5533
    %v5902 = vpack.c.b16 %v5542, %v5538
    %v5903 = vpack.c.b16 %v5543, %v5539
    %v5904 = vpack.c.b16 %v5544, %v5540
    %v5905 = vpack.c.b16 %v5545, %v5541
    %v5906 = vpack.c.b16 %v5550, %v5546
    %v5907 = vpack.c.b16 %v5551, %v5547
    %v5908 = vpack.c.b16 %v5552, %v5548
    %v5909 = vpack.c.b16 %v5553, %v5549
    %v5910 = vpack.c.b16 %v5558, %v5554
    %v5911 = vpack.c.b16 %v5559, %v5555
    %v5912 = vpack.c.b16 %v5560, %v5556
    %v5913 = vpack.c.b16 %v5561, %v5557
    %v5914 = vpack.c.b16 %v5566, %v5562
    %v5915 = vpack.c.b16 %v5567, %v5563
    %v5916 = vpack.c.b16 %v5568, %v5564
    %v5917 = vpack.c.b16 %v5569, %v5565
    %v5918 = vpack.c.b16 %v5574, %v5570
    %v5919 = vpack.c.b16 %v5575, %v5571
    %v5920 = vpack.c.b16 %v5576, %v5572
    %v5921 = vpack.c.b16 %v5577, %v5573
    %v5922 = vpack.c.b16 %v5582, %v5578
    %v5923 = vpack.c.b16 %v5583, %v5579
    %v5924 = vpack.c.b16 %v5584, %v5580
    %v5925 = vpack.c.b16 %v5585, %v5581
    %v5926 = vpack.c.b16 %v5590, %v5586
    %v5927 = vpack.c.b16 %v5591, %v5587
    %v5928 = vpack.c.b16 %v5592, %v5588
    %v5929 = vpack.c.b16 %v5593, %v5589
    %v5930 = vpack.c.b16 %v5598, %v5594
    %v5931 = vpack.c.b16 %v5599, %v5595
    %v5932 = vpack.c.b16 %v5600, %v5596
    %v5933 = vpack.c.b16 %v5601, %v5597
    %v5934 = vpack.c.b16 %v5606, %v5602
    %v5935 = vpack.c.b16 %v5607, %v5603
    %v5936 = vpack.c.b16 %v5608, %v5604
    %v5937 = vpack.c.b16 %v5609, %v5605
    %v5938 = vpack.c.b16 %v5614, %v5610
    %v5939 = vpack.c.b16 %v5615, %v5611
    %v5940 = vpack.c.b16 %v5616, %v5612
    %v5941 = vpack.c.b16 %v5617, %v5613
    %v5942 = vpack.c.b16 %v5622, %v5618
    %v5943 = vpack.c.b16 %v5623, %v5619
    %v5944 = vpack.c.b16 %v5624, %v5620
    %v5945 = vpack.c.b16 %v5625, %v5621
    %v5946 = vpack.c.b16 %v5630, %v5626
    %v5947 = vpack.c.b16 %v5631, %v5627
    %v5948 = vpack.c.b16 %v5632, %v5628
    %v5949 = vpack.c.b16 %v5633, %v5629
    %v5950 = vpack.c.b16 %v5638, %v5634
    %v5951 = vpack.c.b16 %v5639, %v5635
    %v5952 = vpack.c.b16 %v5640, %v5636
    %v5953 = vpack.c.b16 %v5641, %v5637
    %v5954 = vpack.c.b16 %v5646, %v5642
    %v5955 = vpack.c.b16 %v5647, %v5643
    %v5956 = vpack.c.b16 %v5648, %v5644
    %v5957 = vpack.c.b16 %v5649, %v5645
    %v5958 = vpack.c.b16 %v5654, %v5650
    %v5959 = vpack.c.b16 %v5655, %v5651
    %v5960 = vpack.c.b16 %v5656, %v5652
    %v5961 = vpack.c.b16 %v5657, %v5653
    %v5962 = vpack.c.b16 %v5662, %v5658
    %v5963 = vpack.c.b16 %v5663, %v5659
    %v5964 = vpack.c.b16 %v5664, %v5660
    %v5965 = vpack.c.b16 %v5665, %v5661
    %v5966 = vpack.c.b16 %v5670, %v5666
    %v5967 = vpack.c.b16 %v5671, %v5667
    %v5968 = vpack.c.b16 %v5672, %v5668
    %v5969 = vpack.c.b16 %v5673, %v5669
    %v5970 = vpack.c.b16 %v5678, %v5674
    %v5971 = vpack.c.b16 %v5679, %v5675
    %v5972 = vpack.c.b16 %v5680, %v5676
    %v5973 = vpack.c.b16 %v5681, %v5677
    %v5974 = vpack.c.b16 %v5686, %v5682
    %v5975 = vpack.c.b16 %v5687, %v5683
    %v5976 = vpack.c.b16 %v5688, %v5684
    %v5977 = vpack.c.b16 %v5689, %v5685
    %v5978 = vpack.c.b16 %v5694, %v5690
    %v5979 = vpack.c.b16 %v5695, %v5691
    %v5980 = vpack.c.b16 %v5696, %v5692
    %v5981 = vpack.c.b16 %v5697, %v5693
    %v5982 = vpack.c.b16 %v5702, %v5698
    %v5983 = vpack.c.b16 %v5703, %v5699
    %v5984 = vpack.c.b16 %v5704, %v5700
    %v5985 = vpack.c.b16 %v5705, %v5701
    %v5986 = vpack.c.b16 %v5710, %v5706
    %v5987 = vpack.c.b16 %v5711, %v5707
    %v5988 = vpack.c.b16 %v5712, %v5708
    %v5989 = vpack.c.b16 %v5713, %v5709
    %v5990 = vpack.c.b16 %v5718, %v5714
    %v5991 = vpack.c.b16 %v5719, %v5715
    %v5992 = vpack.c.b16 %v5720, %v5716
    %v5993 = vpack.c.b16 %v5721, %v5717
    %v5994 = vpack.c.b16 %v5726, %v5722
    %v5995 = vpack.c.b16 %v5727, %v5723
    %v5996 = vpack.c.b16 %v5728, %v5724
    %v5997 = vpack.c.b16 %v5729, %v5725
    %v5998 = vpack.c.b16 %v5734, %v5730
    %v5999 = vpack.c.b16 %v5735, %v5731
    %v6000 = vpack.c.b16 %v5736, %v5732
    %v6001 = vpack.c.b16 %v5737, %v5733
    %v6002 = vpack.c.b16 %v5742, %v5738
    %v6003 = vpack.c.b16 %v5743, %v5739
    %v6004 = vpack.c.b16 %v5744, %v5740
    %v6005 = vpack.c.b16 %v5745, %v5741
    %v6006 = vpack.c.b16 %v5750, %v5746
    %v6007 = vpack.c.b16 %v5751, %v5747
    %v6008 = vpack.c.b16 %v5752, %v5748
    %v6009 = vpack.c.b16 %v5753, %v5749
    %6266 = vmatprep.subr.bf16.mxu0 %v5783
    %6267 = vmatpush1.bf16.msra.mxu0 %v5782
    %6268 = vmatprep.subr.bf16.mxu0 %v5779
    %6269 = vmatpush1.bf16.msra.mxu0 %v5778
    %6270 = vmatprep.subr.bf16.mxu0 %v5775
    %6271 = vmatpush1.bf16.msra.mxu0 %v5774
    %6272 = vmatprep.subr.bf16.mxu0 %v5771
    %6273 = vmatpush1.bf16.msra.mxu0 %v5770
    %6274 = vmatprep.subr.bf16.mxu0 %v5767
    %6275 = vmatpush1.bf16.msra.mxu0 %v5766
    %6276 = vmatprep.subr.bf16.mxu0 %v5763
    %6277 = vmatpush1.bf16.msra.mxu0 %v5762
    %6278 = vmatprep.subr.bf16.mxu0 %v5759
    %6279 = vmatpush1.bf16.msra.mxu0 %v5758
    %6280 = vmatprep.subr.bf16.mxu0 %v5755
    %6281 = vmatpush1.bf16.msra.mxu0 %v5754
    %6282 = vmatprep.subr.bf16.mxu0 %v5815
    %6283 = vmatpush2.bf16.msra.mxu0 %v5814
    %6284 = vmatprep.subr.bf16.mxu0 %v5811
    %6285 = vmatpush2.bf16.msra.mxu0 %v5810
    %6286 = vmatprep.subr.bf16.mxu0 %v5807
    %6287 = vmatpush2.bf16.msra.mxu0 %v5806
    %6288 = vmatprep.subr.bf16.mxu0 %v5803
    %6289 = vmatpush2.bf16.msra.mxu0 %v5802
    %6290 = vmatprep.subr.bf16.mxu0 %v5799
    %6291 = vmatpush2.bf16.msra.mxu0 %v5798
    %6292 = vmatprep.subr.bf16.mxu0 %v5795
    %6293 = vmatpush2.bf16.msra.mxu0 %v5794
    %6294 = vmatprep.subr.bf16.mxu0 %v5791
    %6295 = vmatpush2.bf16.msra.mxu0 %v5790
    %6296 = vmatprep.subr.bf16.mxu0 %v5787
    %6297 = vmatpush2.bf16.msra.mxu0 %v5786
    %6298 = vmatprep.mubr.bf16.mxu0 %v4701
    %6299 = vmatmul.mubr.bf16.gmra.mxu0 %v4700
    %v6300 = vpop.f32.mrf.mxu0
    %v6301 = vadd.f32 %v4969, %v6300
    %v6302 = vpop.f32.mrf.mxu0
    %v6303 = vadd.f32 %v4973, %v6302
    %v6304 = vpop.f32.mrf.mxu0
    %v6305 = vpop.f32.mrf.mxu0
    %6306 = vdwg.mxu0
    %6307 = vmatprep.subr.bf16.mxu0 %v5847
    %6308 = vmatpush1.bf16.msra.mxu0 %v5846
    %6309 = vmatprep.subr.bf16.mxu0 %v5843
    %6310 = vmatpush1.bf16.msra.mxu0 %v5842
    %6311 = vmatprep.subr.bf16.mxu0 %v5839
    %6312 = vmatpush1.bf16.msra.mxu0 %v5838
    %6313 = vmatprep.subr.bf16.mxu0 %v5835
    %6314 = vmatpush1.bf16.msra.mxu0 %v5834
    %6315 = vmatprep.subr.bf16.mxu0 %v5831
    %6316 = vmatpush1.bf16.msra.mxu0 %v5830
    %6317 = vmatprep.subr.bf16.mxu0 %v5827
    %6318 = vmatpush1.bf16.msra.mxu0 %v5826
    %6319 = vmatprep.subr.bf16.mxu0 %v5823
    %6320 = vmatpush1.bf16.msra.mxu0 %v5822
    %6321 = vmatprep.subr.bf16.mxu0 %v5819
    %6322 = vmatpush1.bf16.msra.mxu0 %v5818
    %6323 = vmatprep.subr.bf16.mxu0 %v5879
    %6324 = vmatpush2.bf16.msra.mxu0 %v5878
    %6325 = vmatprep.subr.bf16.mxu0 %v5875
    %6326 = vmatpush2.bf16.msra.mxu0 %v5874
    %6327 = vmatprep.subr.bf16.mxu0 %v5871
    %6328 = vmatpush2.bf16.msra.mxu0 %v5870
    %6329 = vmatprep.subr.bf16.mxu0 %v5867
    %6330 = vmatpush2.bf16.msra.mxu0 %v5866
    %6331 = vmatprep.subr.bf16.mxu0 %v5863
    %6332 = vmatpush2.bf16.msra.mxu0 %v5862
    %6333 = vmatprep.subr.bf16.mxu0 %v5859
    %6334 = vmatpush2.bf16.msra.mxu0 %v5858
    %6335 = vmatprep.subr.bf16.mxu0 %v5855
    %6336 = vmatpush2.bf16.msra.mxu0 %v5854
    %6337 = vmatprep.subr.bf16.mxu0 %v5851
    %6338 = vmatpush2.bf16.msra.mxu0 %v5850
    %6339 = vmatprep.mubr.bf16.mxu0 %v4703
    %6340 = vmatmul.mubr.bf16.gmra.mxu0 %v4702
    %v6341 = vpop.f32.mrf.mxu0
    %v6342 = vadd.f32 %v6301, %v6341
    %v6343 = vpop.f32.mrf.mxu0
    %v6344 = vadd.f32 %v6303, %v6343
    %v6345 = vpop.f32.mrf.mxu0
    %v6346 = vpop.f32.mrf.mxu0
    %6347 = vdwg.mxu0
    %6348 = vmatprep.subr.bf16.mxu0 %v5911
    %6349 = vmatpush1.bf16.msra.mxu0 %v5910
    %6350 = vmatprep.subr.bf16.mxu0 %v5907
    %6351 = vmatpush1.bf16.msra.mxu0 %v5906
    %6352 = vmatprep.subr.bf16.mxu0 %v5903
    %6353 = vmatpush1.bf16.msra.mxu0 %v5902
    %6354 = vmatprep.subr.bf16.mxu0 %v5899
    %6355 = vmatpush1.bf16.msra.mxu0 %v5898
    %6356 = vmatprep.subr.bf16.mxu0 %v5895
    %6357 = vmatpush1.bf16.msra.mxu0 %v5894
    %6358 = vmatprep.subr.bf16.mxu0 %v5891
    %6359 = vmatpush1.bf16.msra.mxu0 %v5890
    %6360 = vmatprep.subr.bf16.mxu0 %v5887
    %6361 = vmatpush1.bf16.msra.mxu0 %v5886
    %6362 = vmatprep.subr.bf16.mxu0 %v5883
    %6363 = vmatpush1.bf16.msra.mxu0 %v5882
    %6364 = vmatprep.subr.bf16.mxu0 %v5943
    %6365 = vmatpush2.bf16.msra.mxu0 %v5942
    %6366 = vmatprep.subr.bf16.mxu0 %v5939
    %6367 = vmatpush2.bf16.msra.mxu0 %v5938
    %6368 = vmatprep.subr.bf16.mxu0 %v5935
    %6369 = vmatpush2.bf16.msra.mxu0 %v5934
    %6370 = vmatprep.subr.bf16.mxu0 %v5931
    %6371 = vmatpush2.bf16.msra.mxu0 %v5930
    %6372 = vmatprep.subr.bf16.mxu0 %v5927
    %6373 = vmatpush2.bf16.msra.mxu0 %v5926
    %6374 = vmatprep.subr.bf16.mxu0 %v5923
    %6375 = vmatpush2.bf16.msra.mxu0 %v5922
    %6376 = vmatprep.subr.bf16.mxu0 %v5919
    %6377 = vmatpush2.bf16.msra.mxu0 %v5918
    %6378 = vmatprep.subr.bf16.mxu0 %v5915
    %6379 = vmatpush2.bf16.msra.mxu0 %v5914
    %6380 = vmatprep.mubr.bf16.mxu0 %v4705
    %6381 = vmatmul.mubr.bf16.gmra.mxu0 %v4704
    %v6382 = vpop.f32.mrf.mxu0
    %v6383 = vadd.f32 %v6342, %v6382
    %v6384 = vpop.f32.mrf.mxu0
    %v6385 = vadd.f32 %v6344, %v6384
    %v6386 = vpop.f32.mrf.mxu0
    %v6387 = vpop.f32.mrf.mxu0
    %6388 = vdwg.mxu0
    %6389 = vmatprep.subr.bf16.mxu0 %v5975
    %6390 = vmatpush1.bf16.msra.mxu0 %v5974
    %6391 = vmatprep.subr.bf16.mxu0 %v5971
    %6392 = vmatpush1.bf16.msra.mxu0 %v5970
    %6393 = vmatprep.subr.bf16.mxu0 %v5967
    %6394 = vmatpush1.bf16.msra.mxu0 %v5966
    %6395 = vmatprep.subr.bf16.mxu0 %v5963
    %6396 = vmatpush1.bf16.msra.mxu0 %v5962
    %6397 = vmatprep.subr.bf16.mxu0 %v5959
    %6398 = vmatpush1.bf16.msra.mxu0 %v5958
    %6399 = vmatprep.subr.bf16.mxu0 %v5955
    %6400 = vmatpush1.bf16.msra.mxu0 %v5954
    %6401 = vmatprep.subr.bf16.mxu0 %v5951
    %6402 = vmatpush1.bf16.msra.mxu0 %v5950
    %6403 = vmatprep.subr.bf16.mxu0 %v5947
    %6404 = vmatpush1.bf16.msra.mxu0 %v5946
    %6405 = vmatprep.subr.bf16.mxu0 %v6007
    %6406 = vmatpush2.bf16.msra.mxu0 %v6006
    %6407 = vmatprep.subr.bf16.mxu0 %v6003
    %6408 = vmatpush2.bf16.msra.mxu0 %v6002
    %6409 = vmatprep.subr.bf16.mxu0 %v5999
    %6410 = vmatpush2.bf16.msra.mxu0 %v5998
    %6411 = vmatprep.subr.bf16.mxu0 %v5995
    %6412 = vmatpush2.bf16.msra.mxu0 %v5994
    %6413 = vmatprep.subr.bf16.mxu0 %v5991
    %6414 = vmatpush2.bf16.msra.mxu0 %v5990
    %6415 = vmatprep.subr.bf16.mxu0 %v5987
    %6416 = vmatpush2.bf16.msra.mxu0 %v5986
    %6417 = vmatprep.subr.bf16.mxu0 %v5983
    %6418 = vmatpush2.bf16.msra.mxu0 %v5982
    %6419 = vmatprep.subr.bf16.mxu0 %v5979
    %6420 = vmatpush2.bf16.msra.mxu0 %v5978
    %6421 = vmatprep.mubr.bf16.mxu0 %v4707
    %6422 = vmatmul.mubr.bf16.gmra.mxu0 %v4706
    %v6423 = vpop.f32.mrf.mxu0
    %v6424 = vadd.f32 %v6383, %v6423
    %v6425 = vpop.f32.mrf.mxu0
    %v6426 = vadd.f32 %v6385, %v6425
    %v6427 = vpop.f32.mrf.mxu0
    %v6428 = vpop.f32.mrf.mxu0
    %6429 = vdwg.mxu0
    %6430 = vmatprep.subr.bf16.mxu0 %v5785
    %6431 = vmatpush1.bf16.msra.mxu0 %v5784
    %6432 = vmatprep.subr.bf16.mxu0 %v5781
    %6433 = vmatpush1.bf16.msra.mxu0 %v5780
    %6434 = vmatprep.subr.bf16.mxu0 %v5777
    %6435 = vmatpush1.bf16.msra.mxu0 %v5776
    %6436 = vmatprep.subr.bf16.mxu0 %v5773
    %6437 = vmatpush1.bf16.msra.mxu0 %v5772
    %6438 = vmatprep.subr.bf16.mxu0 %v5769
    %6439 = vmatpush1.bf16.msra.mxu0 %v5768
    %6440 = vmatprep.subr.bf16.mxu0 %v5765
    %6441 = vmatpush1.bf16.msra.mxu0 %v5764
    %6442 = vmatprep.subr.bf16.mxu0 %v5761
    %6443 = vmatpush1.bf16.msra.mxu0 %v5760
    %6444 = vmatprep.subr.bf16.mxu0 %v5757
    %6445 = vmatpush1.bf16.msra.mxu0 %v5756
    %6446 = vmatprep.subr.bf16.mxu0 %v5817
    %6447 = vmatpush2.bf16.msra.mxu0 %v5816
    %6448 = vmatprep.subr.bf16.mxu0 %v5813
    %6449 = vmatpush2.bf16.msra.mxu0 %v5812
    %6450 = vmatprep.subr.bf16.mxu0 %v5809
    %6451 = vmatpush2.bf16.msra.mxu0 %v5808
    %6452 = vmatprep.subr.bf16.mxu0 %v5805
    %6453 = vmatpush2.bf16.msra.mxu0 %v5804
    %6454 = vmatprep.subr.bf16.mxu0 %v5801
    %6455 = vmatpush2.bf16.msra.mxu0 %v5800
    %6456 = vmatprep.subr.bf16.mxu0 %v5797
    %6457 = vmatpush2.bf16.msra.mxu0 %v5796
    %6458 = vmatprep.subr.bf16.mxu0 %v5793
    %6459 = vmatpush2.bf16.msra.mxu0 %v5792
    %6460 = vmatprep.subr.bf16.mxu0 %v5789
    %6461 = vmatpush2.bf16.msra.mxu0 %v5788
    %6462 = vmatprep.mubr.bf16.mxu0 %v4701
    %6463 = vmatmul.mubr.bf16.gmra.mxu0 %v4700
    %v6464 = vpop.f32.mrf.mxu0
    %v6465 = vadd.f32 %v4977, %v6464
    %v6466 = vpop.f32.mrf.mxu0
    %v6467 = vadd.f32 %v4981, %v6466
    %v6468 = vpop.f32.mrf.mxu0
    %v6469 = vpop.f32.mrf.mxu0
    %6470 = vdwg.mxu0
    %6471 = vmatprep.subr.bf16.mxu0 %v5849
    %6472 = vmatpush1.bf16.msra.mxu0 %v5848
    %6473 = vmatprep.subr.bf16.mxu0 %v5845
    %6474 = vmatpush1.bf16.msra.mxu0 %v5844
    %6475 = vmatprep.subr.bf16.mxu0 %v5841
    %6476 = vmatpush1.bf16.msra.mxu0 %v5840
    %6477 = vmatprep.subr.bf16.mxu0 %v5837
    %6478 = vmatpush1.bf16.msra.mxu0 %v5836
    %6479 = vmatprep.subr.bf16.mxu0 %v5833
    %6480 = vmatpush1.bf16.msra.mxu0 %v5832
    %6481 = vmatprep.subr.bf16.mxu0 %v5829
    %6482 = vmatpush1.bf16.msra.mxu0 %v5828
    %6483 = vmatprep.subr.bf16.mxu0 %v5825
    %6484 = vmatpush1.bf16.msra.mxu0 %v5824
    %6485 = vmatprep.subr.bf16.mxu0 %v5821
    %6486 = vmatpush1.bf16.msra.mxu0 %v5820
    %6487 = vmatprep.subr.bf16.mxu0 %v5881
    %6488 = vmatpush2.bf16.msra.mxu0 %v5880
    %6489 = vmatprep.subr.bf16.mxu0 %v5877
    %6490 = vmatpush2.bf16.msra.mxu0 %v5876
    %6491 = vmatprep.subr.bf16.mxu0 %v5873
    %6492 = vmatpush2.bf16.msra.mxu0 %v5872
    %6493 = vmatprep.subr.bf16.mxu0 %v5869
    %6494 = vmatpush2.bf16.msra.mxu0 %v5868
    %6495 = vmatprep.subr.bf16.mxu0 %v5865
    %6496 = vmatpush2.bf16.msra.mxu0 %v5864
    %6497 = vmatprep.subr.bf16.mxu0 %v5861
    %6498 = vmatpush2.bf16.msra.mxu0 %v5860
    %6499 = vmatprep.subr.bf16.mxu0 %v5857
    %6500 = vmatpush2.bf16.msra.mxu0 %v5856
    %6501 = vmatprep.subr.bf16.mxu0 %v5853
    %6502 = vmatpush2.bf16.msra.mxu0 %v5852
    %6503 = vmatprep.mubr.bf16.mxu0 %v4703
    %6504 = vmatmul.mubr.bf16.gmra.mxu0 %v4702
    %v6505 = vpop.f32.mrf.mxu0
    %v6506 = vadd.f32 %v6465, %v6505
    %v6507 = vpop.f32.mrf.mxu0
    %v6508 = vadd.f32 %v6467, %v6507
    %v6509 = vpop.f32.mrf.mxu0
    %v6510 = vpop.f32.mrf.mxu0
    %6511 = vdwg.mxu0
    %6512 = vmatprep.subr.bf16.mxu0 %v5913
    %6513 = vmatpush1.bf16.msra.mxu0 %v5912
    %6514 = vmatprep.subr.bf16.mxu0 %v5909
    %6515 = vmatpush1.bf16.msra.mxu0 %v5908
    %6516 = vmatprep.subr.bf16.mxu0 %v5905
    %6517 = vmatpush1.bf16.msra.mxu0 %v5904
    %6518 = vmatprep.subr.bf16.mxu0 %v5901
    %6519 = vmatpush1.bf16.msra.mxu0 %v5900
    %6520 = vmatprep.subr.bf16.mxu0 %v5897
    %6521 = vmatpush1.bf16.msra.mxu0 %v5896
    %6522 = vmatprep.subr.bf16.mxu0 %v5893
    %6523 = vmatpush1.bf16.msra.mxu0 %v5892
    %6524 = vmatprep.subr.bf16.mxu0 %v5889
    %6525 = vmatpush1.bf16.msra.mxu0 %v5888
    %6526 = vmatprep.subr.bf16.mxu0 %v5885
    %6527 = vmatpush1.bf16.msra.mxu0 %v5884
    %6528 = vmatprep.subr.bf16.mxu0 %v5945
    %6529 = vmatpush2.bf16.msra.mxu0 %v5944
    %6530 = vmatprep.subr.bf16.mxu0 %v5941
    %6531 = vmatpush2.bf16.msra.mxu0 %v5940
    %6532 = vmatprep.subr.bf16.mxu0 %v5937
    %6533 = vmatpush2.bf16.msra.mxu0 %v5936
    %6534 = vmatprep.subr.bf16.mxu0 %v5933
    %6535 = vmatpush2.bf16.msra.mxu0 %v5932
    %6536 = vmatprep.subr.bf16.mxu0 %v5929
    %6537 = vmatpush2.bf16.msra.mxu0 %v5928
    %6538 = vmatprep.subr.bf16.mxu0 %v5925
    %6539 = vmatpush2.bf16.msra.mxu0 %v5924
    %6540 = vmatprep.subr.bf16.mxu0 %v5921
    %6541 = vmatpush2.bf16.msra.mxu0 %v5920
    %6542 = vmatprep.subr.bf16.mxu0 %v5917
    %6543 = vmatpush2.bf16.msra.mxu0 %v5916
    %6544 = vmatprep.mubr.bf16.mxu0 %v4705
    %6545 = vmatmul.mubr.bf16.gmra.mxu0 %v4704
    %v6546 = vpop.f32.mrf.mxu0
    %v6547 = vadd.f32 %v6506, %v6546
    %v6548 = vpop.f32.mrf.mxu0
    %v6549 = vadd.f32 %v6508, %v6548
    %v6550 = vpop.f32.mrf.mxu0
    %v6551 = vpop.f32.mrf.mxu0
    %6552 = vdwg.mxu0
    %6553 = vmatprep.subr.bf16.mxu0 %v5977
    %6554 = vmatpush1.bf16.msra.mxu0 %v5976
    %6555 = vmatprep.subr.bf16.mxu0 %v5973
    %6556 = vmatpush1.bf16.msra.mxu0 %v5972
    %6557 = vmatprep.subr.bf16.mxu0 %v5969
    %6558 = vmatpush1.bf16.msra.mxu0 %v5968
    %6559 = vmatprep.subr.bf16.mxu0 %v5965
    %6560 = vmatpush1.bf16.msra.mxu0 %v5964
    %6561 = vmatprep.subr.bf16.mxu0 %v5961
    %6562 = vmatpush1.bf16.msra.mxu0 %v5960
    %6563 = vmatprep.subr.bf16.mxu0 %v5957
    %6564 = vmatpush1.bf16.msra.mxu0 %v5956
    %6565 = vmatprep.subr.bf16.mxu0 %v5953
    %6566 = vmatpush1.bf16.msra.mxu0 %v5952
    %6567 = vmatprep.subr.bf16.mxu0 %v5949
    %6568 = vmatpush1.bf16.msra.mxu0 %v5948
    %6569 = vmatprep.subr.bf16.mxu0 %v6009
    %6570 = vmatpush2.bf16.msra.mxu0 %v6008
    %6571 = vmatprep.subr.bf16.mxu0 %v6005
    %6572 = vmatpush2.bf16.msra.mxu0 %v6004
    %6573 = vmatprep.subr.bf16.mxu0 %v6001
    %6574 = vmatpush2.bf16.msra.mxu0 %v6000
    %6575 = vmatprep.subr.bf16.mxu0 %v5997
    %6576 = vmatpush2.bf16.msra.mxu0 %v5996
    %6577 = vmatprep.subr.bf16.mxu0 %v5993
    %6578 = vmatpush2.bf16.msra.mxu0 %v5992
    %6579 = vmatprep.subr.bf16.mxu0 %v5989
    %6580 = vmatpush2.bf16.msra.mxu0 %v5988
    %6581 = vmatprep.subr.bf16.mxu0 %v5985
    %6582 = vmatpush2.bf16.msra.mxu0 %v5984
    %6583 = vmatprep.subr.bf16.mxu0 %v5981
    %6584 = vmatpush2.bf16.msra.mxu0 %v5980
    %6585 = vmatprep.mubr.bf16.mxu0 %v4707
    %6586 = vmatmul.mubr.bf16.gmra.mxu0 %v4706
    %v6587 = vpop.f32.mrf.mxu0
    %v6588 = vadd.f32 %v6547, %v6587
    %v6589 = vpop.f32.mrf.mxu0
    %v6590 = vadd.f32 %v6549, %v6589
    %v6591 = vpop.f32.mrf.mxu0
    %v6592 = vpop.f32.mrf.mxu0
    %6593 = vdwg.mxu0
    %v6594 = vmax.f32 %v6424, 0.0
    %v6595 = vmax.f32 %v6426, 0.0
    %v6596 = vmax.f32 %v6588, 0.0
    %v6597 = vmax.f32 %v6590, 0.0
    %v6598 = vpack.c.bf16 %v6594, %v6594
    %v6599 = vpack.c.bf16 %v6595, %v6595
    %v6600 = vpack.c.bf16 %v6596, %v6596
    %v6601 = vpack.c.bf16 %v6597, %v6597
    %v6602 = vld [vmem:[#allocation19] sm:$0xff]
    %v6603 = vld [vmem:[#allocation19 + $0x8] sm:$0xff]
    %v6604 = vld [vmem:[#allocation19 + $0x10] sm:$0xff]
    %v6605 = vld [vmem:[#allocation19 + $0x18] sm:$0xff]
    %v6606 = vld [vmem:[#allocation19 + $0x20] sm:$0xff]
    %v6607 = vld [vmem:[#allocation19 + $0x28] sm:$0xff]
    %v6608 = vld [vmem:[#allocation19 + $0x30] sm:$0xff]
    %v6609 = vld [vmem:[#allocation19 + $0x38] sm:$0xff]
    %v6610 = vld [vmem:[#allocation19 + $0x40] sm:$0xff]
    %v6611 = vld [vmem:[#allocation19 + $0x48] sm:$0xff]
    %v6612 = vld [vmem:[#allocation19 + $0x50] sm:$0xff]
    %v6613 = vld [vmem:[#allocation19 + $0x58] sm:$0xff]
    %v6614 = vld [vmem:[#allocation19 + $0x60] sm:$0xff]
    %v6615 = vld [vmem:[#allocation19 + $0x68] sm:$0xff]
    %v6616 = vld [vmem:[#allocation19 + $0x70] sm:$0xff]
    %v6617 = vld [vmem:[#allocation19 + $0x78] sm:$0xff]
    %v6618 = vld [vmem:[#allocation19 + $0x80] sm:$0xff]
    %v6619 = vld [vmem:[#allocation19 + $0x88] sm:$0xff]
    %v6620 = vld [vmem:[#allocation19 + $0x90] sm:$0xff]
    %v6621 = vld [vmem:[#allocation19 + $0x98] sm:$0xff]
    %v6622 = vld [vmem:[#allocation19 + $0xa0] sm:$0xff]
    %v6623 = vld [vmem:[#allocation19 + $0xa8] sm:$0xff]
    %v6624 = vld [vmem:[#allocation19 + $0xb0] sm:$0xff]
    %v6625 = vld [vmem:[#allocation19 + $0xb8] sm:$0xff]
    %v6626 = vld [vmem:[#allocation19 + $0xc0] sm:$0xff]
    %v6627 = vld [vmem:[#allocation19 + $0xc8] sm:$0xff]
    %v6628 = vld [vmem:[#allocation19 + $0xd0] sm:$0xff]
    %v6629 = vld [vmem:[#allocation19 + $0xd8] sm:$0xff]
    %v6630 = vld [vmem:[#allocation19 + $0xe0] sm:$0xff]
    %v6631 = vld [vmem:[#allocation19 + $0xe8] sm:$0xff]
    %v6632 = vld [vmem:[#allocation19 + $0xf0] sm:$0xff]
    %v6633 = vld [vmem:[#allocation19 + $0xf8] sm:$0xff]
    %v6634 = vld [vmem:[#allocation19 + $0x100] sm:$0xff]
    %v6635 = vld [vmem:[#allocation19 + $0x108] sm:$0xff]
    %v6636 = vld [vmem:[#allocation19 + $0x110] sm:$0xff]
    %v6637 = vld [vmem:[#allocation19 + $0x118] sm:$0xff]
    %v6638 = vld [vmem:[#allocation19 + $0x120] sm:$0xff]
    %v6639 = vld [vmem:[#allocation19 + $0x128] sm:$0xff]
    %v6640 = vld [vmem:[#allocation19 + $0x130] sm:$0xff]
    %v6641 = vld [vmem:[#allocation19 + $0x138] sm:$0xff]
    %v6642 = vld [vmem:[#allocation19 + $0x140] sm:$0xff]
    %v6643 = vld [vmem:[#allocation19 + $0x148] sm:$0xff]
    %v6644 = vld [vmem:[#allocation19 + $0x150] sm:$0xff]
    %v6645 = vld [vmem:[#allocation19 + $0x158] sm:$0xff]
    %v6646 = vld [vmem:[#allocation19 + $0x160] sm:$0xff]
    %v6647 = vld [vmem:[#allocation19 + $0x168] sm:$0xff]
    %v6648 = vld [vmem:[#allocation19 + $0x170] sm:$0xff]
    %v6649 = vld [vmem:[#allocation19 + $0x178] sm:$0xff]
    %v6650 = vld [vmem:[#allocation19 + $0x180] sm:$0xff]
    %v6651 = vld [vmem:[#allocation19 + $0x188] sm:$0xff]
    %v6652 = vld [vmem:[#allocation19 + $0x190] sm:$0xff]
    %v6653 = vld [vmem:[#allocation19 + $0x198] sm:$0xff]
    %v6654 = vld [vmem:[#allocation19 + $0x1a0] sm:$0xff]
    %v6655 = vld [vmem:[#allocation19 + $0x1a8] sm:$0xff]
    %v6656 = vld [vmem:[#allocation19 + $0x1b0] sm:$0xff]
    %v6657 = vld [vmem:[#allocation19 + $0x1b8] sm:$0xff]
    %v6658 = vld [vmem:[#allocation19 + $0x1c0] sm:$0xff]
    %v6659 = vld [vmem:[#allocation19 + $0x1c8] sm:$0xff]
    %v6660 = vld [vmem:[#allocation19 + $0x1d0] sm:$0xff]
    %v6661 = vld [vmem:[#allocation19 + $0x1d8] sm:$0xff]
    %v6662 = vld [vmem:[#allocation19 + $0x1e0] sm:$0xff]
    %v6663 = vld [vmem:[#allocation19 + $0x1e8] sm:$0xff]
    %v6664 = vld [vmem:[#allocation19 + $0x1f0] sm:$0xff]
    %v6665 = vld [vmem:[#allocation19 + $0x1f8] sm:$0xff]
    %v6666 = vld [vmem:[#allocation20] sm:$0x3]
    %v6668 = vlaneseq
    %v6669 = vshrl.u32 %v6668, 7
    %v6670 = vsub.s32 0, %v6669
    %v6671 = vrot.slane %v6666, %v6670
    %v6672 = vlaneseq
    %v6673 = vshrl.u32 %v6672, 7
    %v6674 = vsub.s32 1, %v6673
    %v6675 = vrot.slane %v6666, %v6674
    %v6742 = vunpack.c.l.b16 %v6602
    %v6743 = vunpack.c.h.b16 %v6602
    %v6744 = vunpack.c.l.b16 %v6603
    %v6745 = vunpack.c.h.b16 %v6603
    %v6746 = vunpack.c.l.b16 %v6604
    %v6747 = vunpack.c.h.b16 %v6604
    %v6748 = vunpack.c.l.b16 %v6605
    %v6749 = vunpack.c.h.b16 %v6605
    %v6750 = vunpack.c.l.b16 %v6606
    %v6751 = vunpack.c.h.b16 %v6606
    %v6752 = vunpack.c.l.b16 %v6607
    %v6753 = vunpack.c.h.b16 %v6607
    %v6754 = vunpack.c.l.b16 %v6608
    %v6755 = vunpack.c.h.b16 %v6608
    %v6756 = vunpack.c.l.b16 %v6609
    %v6757 = vunpack.c.h.b16 %v6609
    %v6758 = vunpack.c.l.b16 %v6610
    %v6759 = vunpack.c.h.b16 %v6610
    %v6760 = vunpack.c.l.b16 %v6611
    %v6761 = vunpack.c.h.b16 %v6611
    %v6762 = vunpack.c.l.b16 %v6612
    %v6763 = vunpack.c.h.b16 %v6612
    %v6764 = vunpack.c.l.b16 %v6613
    %v6765 = vunpack.c.h.b16 %v6613
    %v6766 = vunpack.c.l.b16 %v6614
    %v6767 = vunpack.c.h.b16 %v6614
    %v6768 = vunpack.c.l.b16 %v6615
    %v6769 = vunpack.c.h.b16 %v6615
    %v6770 = vunpack.c.l.b16 %v6616
    %v6771 = vunpack.c.h.b16 %v6616
    %v6772 = vunpack.c.l.b16 %v6617
    %v6773 = vunpack.c.h.b16 %v6617
    %v6774 = vunpack.c.l.b16 %v6618
    %v6775 = vunpack.c.h.b16 %v6618
    %v6776 = vunpack.c.l.b16 %v6619
    %v6777 = vunpack.c.h.b16 %v6619
    %v6778 = vunpack.c.l.b16 %v6620
    %v6779 = vunpack.c.h.b16 %v6620
    %v6780 = vunpack.c.l.b16 %v6621
    %v6781 = vunpack.c.h.b16 %v6621
    %v6782 = vunpack.c.l.b16 %v6622
    %v6783 = vunpack.c.h.b16 %v6622
    %v6784 = vunpack.c.l.b16 %v6623
    %v6785 = vunpack.c.h.b16 %v6623
    %v6786 = vunpack.c.l.b16 %v6624
    %v6787 = vunpack.c.h.b16 %v6624
    %v6788 = vunpack.c.l.b16 %v6625
    %v6789 = vunpack.c.h.b16 %v6625
    %v6790 = vunpack.c.l.b16 %v6626
    %v6791 = vunpack.c.h.b16 %v6626
    %v6792 = vunpack.c.l.b16 %v6627
    %v6793 = vunpack.c.h.b16 %v6627
    %v6794 = vunpack.c.l.b16 %v6628
    %v6795 = vunpack.c.h.b16 %v6628
    %v6796 = vunpack.c.l.b16 %v6629
    %v6797 = vunpack.c.h.b16 %v6629
    %v6798 = vunpack.c.l.b16 %v6630
    %v6799 = vunpack.c.h.b16 %v6630
    %v6800 = vunpack.c.l.b16 %v6631
    %v6801 = vunpack.c.h.b16 %v6631
    %v6802 = vunpack.c.l.b16 %v6632
    %v6803 = vunpack.c.h.b16 %v6632
    %v6804 = vunpack.c.l.b16 %v6633
    %v6805 = vunpack.c.h.b16 %v6633
    %v6806 = vunpack.c.l.b16 %v6634
    %v6807 = vunpack.c.h.b16 %v6634
    %v6808 = vunpack.c.l.b16 %v6635
    %v6809 = vunpack.c.h.b16 %v6635
    %v6810 = vunpack.c.l.b16 %v6636
    %v6811 = vunpack.c.h.b16 %v6636
    %v6812 = vunpack.c.l.b16 %v6637
    %v6813 = vunpack.c.h.b16 %v6637
    %v6814 = vunpack.c.l.b16 %v6638
    %v6815 = vunpack.c.h.b16 %v6638
    %v6816 = vunpack.c.l.b16 %v6639
    %v6817 = vunpack.c.h.b16 %v6639
    %v6818 = vunpack.c.l.b16 %v6640
    %v6819 = vunpack.c.h.b16 %v6640
    %v6820 = vunpack.c.l.b16 %v6641
    %v6821 = vunpack.c.h.b16 %v6641
    %v6822 = vunpack.c.l.b16 %v6642
    %v6823 = vunpack.c.h.b16 %v6642
    %v6824 = vunpack.c.l.b16 %v6643
    %v6825 = vunpack.c.h.b16 %v6643
    %v6826 = vunpack.c.l.b16 %v6644
    %v6827 = vunpack.c.h.b16 %v6644
    %v6828 = vunpack.c.l.b16 %v6645
    %v6829 = vunpack.c.h.b16 %v6645
    %v6830 = vunpack.c.l.b16 %v6646
    %v6831 = vunpack.c.h.b16 %v6646
    %v6832 = vunpack.c.l.b16 %v6647
    %v6833 = vunpack.c.h.b16 %v6647
    %v6834 = vunpack.c.l.b16 %v6648
    %v6835 = vunpack.c.h.b16 %v6648
    %v6836 = vunpack.c.l.b16 %v6649
    %v6837 = vunpack.c.h.b16 %v6649
    %v6838 = vunpack.c.l.b16 %v6650
    %v6839 = vunpack.c.h.b16 %v6650
    %v6840 = vunpack.c.l.b16 %v6651
    %v6841 = vunpack.c.h.b16 %v6651
    %v6842 = vunpack.c.l.b16 %v6652
    %v6843 = vunpack.c.h.b16 %v6652
    %v6844 = vunpack.c.l.b16 %v6653
    %v6845 = vunpack.c.h.b16 %v6653
    %v6846 = vunpack.c.l.b16 %v6654
    %v6847 = vunpack.c.h.b16 %v6654
    %v6848 = vunpack.c.l.b16 %v6655
    %v6849 = vunpack.c.h.b16 %v6655
    %v6850 = vunpack.c.l.b16 %v6656
    %v6851 = vunpack.c.h.b16 %v6656
    %v6852 = vunpack.c.l.b16 %v6657
    %v6853 = vunpack.c.h.b16 %v6657
    %v6854 = vunpack.c.l.b16 %v6658
    %v6855 = vunpack.c.h.b16 %v6658
    %v6856 = vunpack.c.l.b16 %v6659
    %v6857 = vunpack.c.h.b16 %v6659
    %v6858 = vunpack.c.l.b16 %v6660
    %v6859 = vunpack.c.h.b16 %v6660
    %v6860 = vunpack.c.l.b16 %v6661
    %v6861 = vunpack.c.h.b16 %v6661
    %v6862 = vunpack.c.l.b16 %v6662
    %v6863 = vunpack.c.h.b16 %v6662
    %v6864 = vunpack.c.l.b16 %v6663
    %v6865 = vunpack.c.h.b16 %v6663
    %v6866 = vunpack.c.l.b16 %v6664
    %v6867 = vunpack.c.h.b16 %v6664
    %v6868 = vunpack.c.l.b16 %v6665
    %v6869 = vunpack.c.h.b16 %v6665
    %v6870 = vpack.c.b16 %v6744, %v6742
    %v6871 = vpack.c.b16 %v6745, %v6743
    %v6872 = vpack.c.b16 %v6748, %v6746
    %v6873 = vpack.c.b16 %v6749, %v6747
    %v6874 = vpack.c.b16 %v6752, %v6750
    %v6875 = vpack.c.b16 %v6753, %v6751
    %v6876 = vpack.c.b16 %v6756, %v6754
    %v6877 = vpack.c.b16 %v6757, %v6755
    %v6878 = vpack.c.b16 %v6760, %v6758
    %v6879 = vpack.c.b16 %v6761, %v6759
    %v6880 = vpack.c.b16 %v6764, %v6762
    %v6881 = vpack.c.b16 %v6765, %v6763
    %v6882 = vpack.c.b16 %v6768, %v6766
    %v6883 = vpack.c.b16 %v6769, %v6767
    %v6884 = vpack.c.b16 %v6772, %v6770
    %v6885 = vpack.c.b16 %v6773, %v6771
    %v6886 = vpack.c.b16 %v6776, %v6774
    %v6887 = vpack.c.b16 %v6777, %v6775
    %v6888 = vpack.c.b16 %v6780, %v6778
    %v6889 = vpack.c.b16 %v6781, %v6779
    %v6890 = vpack.c.b16 %v6784, %v6782
    %v6891 = vpack.c.b16 %v6785, %v6783
    %v6892 = vpack.c.b16 %v6788, %v6786
    %v6893 = vpack.c.b16 %v6789, %v6787
    %v6894 = vpack.c.b16 %v6792, %v6790
    %v6895 = vpack.c.b16 %v6793, %v6791
    %v6896 = vpack.c.b16 %v6796, %v6794
    %v6897 = vpack.c.b16 %v6797, %v6795
    %v6898 = vpack.c.b16 %v6800, %v6798
    %v6899 = vpack.c.b16 %v6801, %v6799
    %v6900 = vpack.c.b16 %v6804, %v6802
    %v6901 = vpack.c.b16 %v6805, %v6803
    %v6902 = vpack.c.b16 %v6808, %v6806
    %v6903 = vpack.c.b16 %v6809, %v6807
    %v6904 = vpack.c.b16 %v6812, %v6810
    %v6905 = vpack.c.b16 %v6813, %v6811
    %v6906 = vpack.c.b16 %v6816, %v6814
    %v6907 = vpack.c.b16 %v6817, %v6815
    %v6908 = vpack.c.b16 %v6820, %v6818
    %v6909 = vpack.c.b16 %v6821, %v6819
    %v6910 = vpack.c.b16 %v6824, %v6822
    %v6911 = vpack.c.b16 %v6825, %v6823
    %v6912 = vpack.c.b16 %v6828, %v6826
    %v6913 = vpack.c.b16 %v6829, %v6827
    %v6914 = vpack.c.b16 %v6832, %v6830
    %v6915 = vpack.c.b16 %v6833, %v6831
    %v6916 = vpack.c.b16 %v6836, %v6834
    %v6917 = vpack.c.b16 %v6837, %v6835
    %v6918 = vpack.c.b16 %v6840, %v6838
    %v6919 = vpack.c.b16 %v6841, %v6839
    %v6920 = vpack.c.b16 %v6844, %v6842
    %v6921 = vpack.c.b16 %v6845, %v6843
    %v6922 = vpack.c.b16 %v6848, %v6846
    %v6923 = vpack.c.b16 %v6849, %v6847
    %v6924 = vpack.c.b16 %v6852, %v6850
    %v6925 = vpack.c.b16 %v6853, %v6851
    %v6926 = vpack.c.b16 %v6856, %v6854
    %v6927 = vpack.c.b16 %v6857, %v6855
    %v6928 = vpack.c.b16 %v6860, %v6858
    %v6929 = vpack.c.b16 %v6861, %v6859
    %v6930 = vpack.c.b16 %v6864, %v6862
    %v6931 = vpack.c.b16 %v6865, %v6863
    %v6932 = vpack.c.b16 %v6868, %v6866
    %v6933 = vpack.c.b16 %v6869, %v6867
    %6998 = vmatprep.subr.bf16.mxu0 %v6885
    %6999 = vmatpush1.bf16.msra.mxu0 %v6884
    %7000 = vmatprep.subr.bf16.mxu0 %v6883
    %7001 = vmatpush1.bf16.msra.mxu0 %v6882
    %7002 = vmatprep.subr.bf16.mxu0 %v6881
    %7003 = vmatpush1.bf16.msra.mxu0 %v6880
    %7004 = vmatprep.subr.bf16.mxu0 %v6879
    %7005 = vmatpush1.bf16.msra.mxu0 %v6878
    %7006 = vmatprep.subr.bf16.mxu0 %v6877
    %7007 = vmatpush1.bf16.msra.mxu0 %v6876
    %7008 = vmatprep.subr.bf16.mxu0 %v6875
    %7009 = vmatpush1.bf16.msra.mxu0 %v6874
    %7010 = vmatprep.subr.bf16.mxu0 %v6873
    %7011 = vmatpush1.bf16.msra.mxu0 %v6872
    %7012 = vmatprep.subr.bf16.mxu0 %v6871
    %7013 = vmatpush1.bf16.msra.mxu0 %v6870
    %7014 = vmatprep.subr.bf16.mxu0 %v6901
    %7015 = vmatpush2.bf16.msra.mxu0 %v6900
    %7016 = vmatprep.subr.bf16.mxu0 %v6899
    %7017 = vmatpush2.bf16.msra.mxu0 %v6898
    %7018 = vmatprep.subr.bf16.mxu0 %v6897
    %7019 = vmatpush2.bf16.msra.mxu0 %v6896
    %7020 = vmatprep.subr.bf16.mxu0 %v6895
    %7021 = vmatpush2.bf16.msra.mxu0 %v6894
    %7022 = vmatprep.subr.bf16.mxu0 %v6893
    %7023 = vmatpush2.bf16.msra.mxu0 %v6892
    %7024 = vmatprep.subr.bf16.mxu0 %v6891
    %7025 = vmatpush2.bf16.msra.mxu0 %v6890
    %7026 = vmatprep.subr.bf16.mxu0 %v6889
    %7027 = vmatpush2.bf16.msra.mxu0 %v6888
    %7028 = vmatprep.subr.bf16.mxu0 %v6887
    %7029 = vmatpush2.bf16.msra.mxu0 %v6886
    %7030 = vmatprep.mubr.bf16.mxu0 %v6599
    %7031 = vmatmul.mubr.bf16.gmra.mxu0 %v6598
    %v7032 = vpop.f32.mrf.mxu0
    %v7033 = vadd.f32 %v6671, %v7032
    %v7034 = vpop.f32.mrf.mxu0
    %v7035 = vadd.f32 %v6675, %v7034
    %v7036 = vpop.f32.mrf.mxu0
    %v7037 = vpop.f32.mrf.mxu0
    %7038 = vdwg.mxu0
    %7039 = vmatprep.subr.bf16.mxu0 %v6917
    %7040 = vmatpush1.bf16.msra.mxu0 %v6916
    %7041 = vmatprep.subr.bf16.mxu0 %v6915
    %7042 = vmatpush1.bf16.msra.mxu0 %v6914
    %7043 = vmatprep.subr.bf16.mxu0 %v6913
    %7044 = vmatpush1.bf16.msra.mxu0 %v6912
    %7045 = vmatprep.subr.bf16.mxu0 %v6911
    %7046 = vmatpush1.bf16.msra.mxu0 %v6910
    %7047 = vmatprep.subr.bf16.mxu0 %v6909
    %7048 = vmatpush1.bf16.msra.mxu0 %v6908
    %7049 = vmatprep.subr.bf16.mxu0 %v6907
    %7050 = vmatpush1.bf16.msra.mxu0 %v6906
    %7051 = vmatprep.subr.bf16.mxu0 %v6905
    %7052 = vmatpush1.bf16.msra.mxu0 %v6904
    %7053 = vmatprep.subr.bf16.mxu0 %v6903
    %7054 = vmatpush1.bf16.msra.mxu0 %v6902
    %7055 = vmatprep.subr.bf16.mxu0 %v6933
    %7056 = vmatpush2.bf16.msra.mxu0 %v6932
    %7057 = vmatprep.subr.bf16.mxu0 %v6931
    %7058 = vmatpush2.bf16.msra.mxu0 %v6930
    %7059 = vmatprep.subr.bf16.mxu0 %v6929
    %7060 = vmatpush2.bf16.msra.mxu0 %v6928
    %7061 = vmatprep.subr.bf16.mxu0 %v6927
    %7062 = vmatpush2.bf16.msra.mxu0 %v6926
    %7063 = vmatprep.subr.bf16.mxu0 %v6925
    %7064 = vmatpush2.bf16.msra.mxu0 %v6924
    %7065 = vmatprep.subr.bf16.mxu0 %v6923
    %7066 = vmatpush2.bf16.msra.mxu0 %v6922
    %7067 = vmatprep.subr.bf16.mxu0 %v6921
    %7068 = vmatpush2.bf16.msra.mxu0 %v6920
    %7069 = vmatprep.subr.bf16.mxu0 %v6919
    %7070 = vmatpush2.bf16.msra.mxu0 %v6918
    %7071 = vmatprep.mubr.bf16.mxu0 %v6601
    %7072 = vmatmul.mubr.bf16.gmra.mxu0 %v6600
    %v7073 = vpop.f32.mrf.mxu0
    %v7074 = vadd.f32 %v7033, %v7073
    %v7075 = vpop.f32.mrf.mxu0
    %v7076 = vadd.f32 %v7035, %v7075
    %v7077 = vpop.f32.mrf.mxu0
    %v7078 = vpop.f32.mrf.mxu0
    %7079 = vdwg.mxu0
    %v7080 = vxor.u32 %v7074, 2147483648
    %v7081 = vxor.u32 %v7076, 2147483648
    %v7082 = vmul.f32 %v7080, 1.442695
    %v7083 = vpow.pop %v7082
    %v7084 = vmul.f32 %v7081, 1.442695
    %v7085 = vpow.pop %v7084
    %v7086 = vadd.f32 %v7083, 1.0
    %v7087 = vadd.f32 %v7085, 1.0
    %v7088 = vrcp.pop %v7086
    %v7089 = vmul.f32 1.0, %v7088
    %v7090 = vrcp.pop %v7087
    %v7091 = vmul.f32 1.0, %v7090
    %7092 = vst [vmem:[#allocation22] sm:$0xff] %v7089
    %7093 = vst [vmem:[#allocation22 + $0x8] sm:$0xff] %v7091
    // Predicated region
    $region102: #{tpu_custom_call.1} parent=1 // pred_check
      _
    $region103: #{tpu_custom_call.1} parent=1 // pred_check_branch
      %7095 = sbr.rel (0) target = $region105
    $region104: #{tpu_custom_call.1} parent=1 // pred_region
      %s7097 = ssub.s32 256, 256
      %7098 = vsyncadd [#allocation4], %s7097
      %s7100 = sshll.u32 [#allocation22], 4
      %s7101 = int_to_ptr.vmem [resolvable:$true] %s7100
      %7103 = dma.vmem_to_hbm [thread:$0]  %s7101, 256, %s13, [#allocation4]
    $region105: #{tpu_custom_call.1} parent=1 // pred_fallthru
      _
    // Predicated region
    $region106: #{tpu_custom_call.1} parent=1 // pred_check
      _
    $region107: #{tpu_custom_call.1} parent=1 // pred_check_branch
      %7105 = sbr.rel (0) target = $region109
    $region108: #{tpu_custom_call.1} parent=1 // pred_region
      %7106 = dma.done [#allocation4], 256
    $region109: #{tpu_custom_call.1} parent=1 // pred_fallthru
      _
    %7107 = vsyncpa [#allocation3], 1
    %7108 = vsyncpa [#allocation6], 1
    %7109 = vsyncpa [#allocation9], 1
    %7110 = vsyncpa [#allocation12], 1
    %7111 = vsyncpa [#allocation15], 1
    %7112 = vsyncpa [#allocation18], 1
    %7113 = vsyncpa [#allocation21], 1
    %7114 = vsyncpa [#allocation4], 1

</llo_original>
